<compile_context>
chip_gen: v5e
topology: v5e:2x2
jax: 0.10.0
libtpu: 0.0.40
codegen_flags: <defaults>
</compile_context>

<pallas_src>
import math
from functools import partial

import jax
import jax.numpy as jnp
from jax.experimental import pallas as pl
from jax.experimental.pallas import tpu as pltpu

EPS = 1e-5  # nn.LayerNorm default eps


# ------------------------------ kernel helpers ------------------------------

def _layernorm(x, g, b):
    mean = jnp.mean(x, axis=-1, keepdims=True)
    xc = x - mean
    var = jnp.mean(xc * xc, axis=-1, keepdims=True)
    return xc * jax.lax.rsqrt(var + EPS) * g + b


# ------------------------------ Pallas kernel --------------------------------

def _encoder_kernel(x_ref, pos_ref,
                    wq_ref, bq_ref, wk_ref, bk_ref, wv_ref, bv_ref,
                    wo_ref, bo_ref, g1_ref, be1_ref,
                    w1_ref, b1_ref, w2_ref, b2_ref, g2_ref, be2_ref,
                    *rest, nhead, num_layers, has_final_norm):
    # Whole stacked encoder for ONE batch element, entirely in VMEM/vregs.
    # x_ref / o_ref view: (S, E).  Weight refs carry a leading num_layers dim.
    # TODO(synk): src_mask / src_key_padding_mask are not implemented (VTNet
    # calls the encoder with both None); they would be an additive -inf bias
    # on the attention scores before the softmax.
    if has_final_norm:
        fg_ref, fb_ref, o_ref = rest
    else:
        (o_ref,) = rest

    x = x_ref[...].astype(jnp.float32)               # (S, E)
    pos = pos_ref[...].astype(jnp.float32)
    S, E = x.shape
    hd = E // nhead
    scale = 1.0 / math.sqrt(hd)

    for l in range(num_layers):                      # static unroll over layers
        # q = k = with_pos_embed(src, pos); v = src
        qk_in = x + pos
        q = jnp.dot(qk_in, wq_ref[l], preferred_element_type=jnp.float32) + bq_ref[l]
        k = jnp.dot(qk_in, wk_ref[l], preferred_element_type=jnp.float32) + bk_ref[l]
        v = jnp.dot(x,     wv_ref[l], preferred_element_type=jnp.float32) + bv_ref[l]

        # Multi-head attention with the out-projection folded into the head loop.
        attn = jnp.zeros((S, E), jnp.float32)
        for h in range(nhead):
            lo = h * hd
            qh = q[:, lo:lo + hd] * scale            # (S, hd)
            kh = k[:, lo:lo + hd]
            vh = v[:, lo:lo + hd]
            s = jax.lax.dot_general(qh, kh, (((1,), (1,)), ((), ())),
                                    preferred_element_type=jnp.float32)  # (S, S)
            m = jnp.max(s, axis=-1, keepdims=True)
            e = jnp.exp(s - m)
            probs = e / jnp.sum(e, axis=-1, keepdims=True)
            ctx = jnp.dot(probs, vh, preferred_element_type=jnp.float32)  # (S, hd)
            attn = attn + jnp.dot(ctx, wo_ref[l, lo:lo + hd, :],
                                  preferred_element_type=jnp.float32)
        attn = attn + bo_ref[l]

        # residual + norm1  (dropout -> identity in eval mode)
        y = _layernorm(x + attn, g1_ref[l], be1_ref[l])

        # FFN: linear1 -> ReLU -> linear2, then residual + norm2
        hmid = jnp.dot(y, w1_ref[l], preferred_element_type=jnp.float32) + b1_ref[l]
        hmid = jnp.maximum(hmid, 0.0)
        ff = jnp.dot(hmid, w2_ref[l], preferred_element_type=jnp.float32) + b2_ref[l]
        x = _layernorm(y + ff, g2_ref[l], be2_ref[l])

    if has_final_norm:                               # TransformerEncoder(norm=...)
        x = _layernorm(x, fg_ref[...], fb_ref[...])
    o_ref[...] = x.astype(o_ref.dtype)


# ------------------------------- thin wrapper ---------------------------------

_LAYER_PARAM_ORDER = ("wq", "bq", "wk", "bk", "wv", "bv", "wo", "bo",
                      "g1", "be1", "w1", "b1", "w2", "b2", "g2", "be2")


def _token_spec(S, E):
    # (batch, S, E) tiled per batch element; batch dim squeezed in the kernel.
    return pl.BlockSpec((None, S, E), lambda n: (n, 0, 0))


def _const_spec(arr):
    # Whole array each step, constant block index => stays resident in VMEM.
    nd = arr.ndim
    return pl.BlockSpec(arr.shape, lambda n: (0,) * nd)


def transformer_encoder_forward(src, layers_params, nhead, pos=None,
                                final_norm=None):
    """src / pos: (S, N, E) like the PyTorch module; returns (S, N, E)."""
    S, N, E = src.shape
    L = len(layers_params)
    if pos is None:
        pos = jnp.zeros_like(src)
    x = jnp.transpose(src, (1, 0, 2))         # (N, S, E)  -- boundary glue only
    p = jnp.transpose(pos, (1, 0, 2))

    # Stack per-layer weights along a leading num_layers axis (L, ...).
    stacked = [jnp.stack([lp[name] for lp in layers_params])
               for name in _LAYER_PARAM_ORDER]
    extra = [] if final_norm is None else [final_norm["g"], final_norm["b"]]

    out = pl.pallas_call(
        partial(_encoder_kernel, nhead=nhead, num_layers=L,
                has_final_norm=final_norm is not None),
        out_shape=jax.ShapeDtypeStruct((N, S, E), src.dtype),
        grid=(N,),
        in_specs=[_token_spec(S, E), _token_spec(S, E)]
                 + [_const_spec(w) for w in stacked]
                 + [_const_spec(a) for a in extra],
        out_specs=_token_spec(S, E),
        compiler_params=pltpu.CompilerParams(
            dimension_semantics=("parallel",)),
    )(x, p, *stacked, *extra)
    return jnp.transpose(out, (1, 0, 2))


# --------------------------- deterministic params ----------------------------

def init_layer_params(key, d_model, dim_ff):
    ks = jax.random.split(key, 12)

    def lin(k, fan_in, fan_out):
        std = 1.0 / math.sqrt(fan_in)
        return std * jax.random.normal(k, (fan_in, fan_out), jnp.float32)

    def bias(k, n):
        return 0.1 * jax.random.normal(k, (1, n), jnp.float32)

    return {
        "wq": lin(ks[0], d_model, d_model), "bq": bias(ks[1], d_model),
        "wk": lin(ks[2], d_model, d_model), "bk": bias(ks[3], d_model),
        "wv": lin(ks[4], d_model, d_model), "bv": bias(ks[5], d_model),
        "wo": lin(ks[6], d_model, d_model), "bo": bias(ks[7], d_model),
        "g1": jnp.ones((1, d_model), jnp.float32),
        "be1": jnp.zeros((1, d_model), jnp.float32),
        "w1": lin(ks[8], d_model, dim_ff), "b1": bias(ks[9], dim_ff),
        "w2": lin(ks[10], dim_ff, d_model), "b2": bias(ks[11], d_model),
        "g2": jnp.ones((1, d_model), jnp.float32),
        "be2": jnp.zeros((1, d_model), jnp.float32),
    }


def init_params(key, d_model, dim_ff, num_layers):
    return [init_layer_params(k, d_model, dim_ff)
            for k in jax.random.split(key, num_layers)]


# ----------------------------- pure-JAX reference ----------------------------

def _ln_ref(x, g, b):
    m = jnp.mean(x, axis=-1, keepdims=True)
    v = jnp.mean((x - m) ** 2, axis=-1, keepdims=True)
    return (x - m) * jax.lax.rsqrt(v + EPS) * g + b


def ref_encoder_layer(x, pos, p, nhead):
    # x, pos: (S, N, E) — mirrors DETR's post-norm TransformerEncoderLayer.
    S, N, E = x.shape
    hd = E // nhead
    qk = x + pos
    q = jnp.einsum("sne,ef->snf", qk, p["wq"]) + p["bq"][0]
    k = jnp.einsum("sne,ef->snf", qk, p["wk"]) + p["bk"][0]
    v = jnp.einsum("sne,ef->snf", x, p["wv"]) + p["bv"][0]
    q = q.reshape(S, N, nhead, hd) * (1.0 / math.sqrt(hd))
    k = k.reshape(S, N, nhead, hd)
    v = v.reshape(S, N, nhead, hd)
    logits = jnp.einsum("snhd,tnhd->nhst", q, k)
    w = jax.nn.softmax(logits, axis=-1)
    ctx = jnp.einsum("nhst,tnhd->snhd", w, v).reshape(S, N, E)
    a = jnp.einsum("sne,ef->snf", ctx, p["wo"]) + p["bo"][0]
    y = _ln_ref(x + a, p["g1"][0], p["be1"][0])
    h = jax.nn.relu(jnp.einsum("sne,ef->snf", y, p["w1"]) + p["b1"][0])
    ff = jnp.einsum("snf,fe->sne", h, p["w2"]) + p["b2"][0]
    return _ln_ref(y + ff, p["g2"][0], p["be2"][0])


def ref_encoder(src, layers_params, nhead, pos=None, final_norm=None):
    x = src
    if pos is None:
        pos = jnp.zeros_like(src)
    for p in layers_params:
        x = ref_encoder_layer(x, pos, p, nhead)
    if final_norm is not None:
        x = _ln_ref(x, final_norm["g"][0], final_norm["b"][0])
    return x


# ------------------------------------ main -----------------------------------

if __name__ == "__main__":
    # Small shapes consistent with VTNet's encoder: seq=16 tokens, batch=2,
    # d_model=128 (lane-dense), nhead=4, dim_feedforward=256, 2 layers.
    S, N, E, H, DFF, L = 16, 2, 128, 4, 256, 2
    key = jax.random.PRNGKey(0)
    kx, kpos, kp, kn = jax.random.split(key, 4)
    src = jax.random.normal(kx, (S, N, E), jnp.float32)
    pos = 0.1 * jax.random.normal(kpos, (S, N, E), jnp.float32)
    layers = init_params(kp, E, DFF, L)

    # Default configuration: TransformerEncoder(norm=None)
    out = jax.block_until_ready(
        transformer_encoder_forward(src, layers, H, pos=pos))
    assert out.shape == (S, N, E) and out.dtype == jnp.float32
    ref = jax.block_until_ready(ref_encoder(src, layers, H, pos=pos))
    err = float(jnp.max(jnp.abs(out - ref)))
    assert err < 1e-3, f"mismatch vs reference (norm=None): {err}"

    # Optional final-norm path: TransformerEncoder(norm=LayerNorm(d_model))
    kn1, kn2 = jax.random.split(kn)
    fnorm = {"g": 1.0 + 0.1 * jax.random.normal(kn1, (1, E), jnp.float32),
             "b": 0.1 * jax.random.normal(kn2, (1, E), jnp.float32)}
    out_n = jax.block_until_ready(
        transformer_encoder_forward(src, layers, H, pos=pos, final_norm=fnorm))
    ref_n = jax.block_until_ready(
        ref_encoder(src, layers, H, pos=pos, final_norm=fnorm))
    err_n = float(jnp.max(jnp.abs(out_n - ref_n)))
    assert err_n < 1e-3, f"mismatch vs reference (with norm): {err_n}"

    print("KERNEL_OK")
</pallas_src>

<mosaic_0001>
module attributes {stable_mosaic.version = 11 : i64} {
  func.func @_encoder_kernel(%arg0: i32, %arg1: memref<1x16x128xf32, #tpu.memory_space<vmem>>, %arg2: memref<1x16x128xf32, #tpu.memory_space<vmem>>, %arg3: memref<2x128x128xf32, #tpu.memory_space<vmem>>, %arg4: memref<2x1x128xf32, #tpu.memory_space<vmem>>, %arg5: memref<2x128x128xf32, #tpu.memory_space<vmem>>, %arg6: memref<2x1x128xf32, #tpu.memory_space<vmem>>, %arg7: memref<2x128x128xf32, #tpu.memory_space<vmem>>, %arg8: memref<2x1x128xf32, #tpu.memory_space<vmem>>, %arg9: memref<2x128x128xf32, #tpu.memory_space<vmem>>, %arg10: memref<2x1x128xf32, #tpu.memory_space<vmem>>, %arg11: memref<2x1x128xf32, #tpu.memory_space<vmem>>, %arg12: memref<2x1x128xf32, #tpu.memory_space<vmem>>, %arg13: memref<2x128x256xf32, #tpu.memory_space<vmem>>, %arg14: memref<2x1x256xf32, #tpu.memory_space<vmem>>, %arg15: memref<2x256x128xf32, #tpu.memory_space<vmem>>, %arg16: memref<2x1x128xf32, #tpu.memory_space<vmem>>, %arg17: memref<2x1x128xf32, #tpu.memory_space<vmem>>, %arg18: memref<2x1x128xf32, #tpu.memory_space<vmem>>, %arg19: memref<1x16x128xf32, #tpu.memory_space<vmem>>) attributes {dimension_semantics = [#tpu.dimension_semantics<parallel>], iteration_bounds = array<i64: 2>, scalar_prefetch = 0 : i64, scratch_operands = 0 : i64, tpu.core_type = #tpu.core_type<tc>, window_params = [{transform_indices = @transform_0, window_bounds = array<i64: 1, 16, 128>}, {transform_indices = @transform_1, window_bounds = array<i64: 1, 16, 128>}, {pipeline_mode = #tpu.pipeline_mode<synchronous>, transform_indices = @transform_2, window_bounds = array<i64: 2, 128, 128>}, {pipeline_mode = #tpu.pipeline_mode<synchronous>, transform_indices = @transform_3, window_bounds = array<i64: 2, 1, 128>}, {pipeline_mode = #tpu.pipeline_mode<synchronous>, transform_indices = @transform_4, window_bounds = array<i64: 2, 128, 128>}, {pipeline_mode = #tpu.pipeline_mode<synchronous>, transform_indices = @transform_5, window_bounds = array<i64: 2, 1, 128>}, {pipeline_mode = #tpu.pipeline_mode<synchronous>, transform_indices = @transform_6, window_bounds = array<i64: 2, 128, 128>}, {pipeline_mode = #tpu.pipeline_mode<synchronous>, transform_indices = @transform_7, window_bounds = array<i64: 2, 1, 128>}, {pipeline_mode = #tpu.pipeline_mode<synchronous>, transform_indices = @transform_8, window_bounds = array<i64: 2, 128, 128>}, {pipeline_mode = #tpu.pipeline_mode<synchronous>, transform_indices = @transform_9, window_bounds = array<i64: 2, 1, 128>}, {pipeline_mode = #tpu.pipeline_mode<synchronous>, transform_indices = @transform_10, window_bounds = array<i64: 2, 1, 128>}, {pipeline_mode = #tpu.pipeline_mode<synchronous>, transform_indices = @transform_11, window_bounds = array<i64: 2, 1, 128>}, {pipeline_mode = #tpu.pipeline_mode<synchronous>, transform_indices = @transform_12, window_bounds = array<i64: 2, 128, 256>}, {pipeline_mode = #tpu.pipeline_mode<synchronous>, transform_indices = @transform_13, window_bounds = array<i64: 2, 1, 256>}, {pipeline_mode = #tpu.pipeline_mode<synchronous>, transform_indices = @transform_14, window_bounds = array<i64: 2, 256, 128>}, {pipeline_mode = #tpu.pipeline_mode<synchronous>, transform_indices = @transform_15, window_bounds = array<i64: 2, 1, 128>}, {pipeline_mode = #tpu.pipeline_mode<synchronous>, transform_indices = @transform_16, window_bounds = array<i64: 2, 1, 128>}, {pipeline_mode = #tpu.pipeline_mode<synchronous>, transform_indices = @transform_17, window_bounds = array<i64: 2, 1, 128>}, {transform_indices = @transform_18, window_bounds = array<i64: 1, 16, 128>}]} {
    %c0 = arith.constant 0 : index
    %c0_0 = arith.constant 0 : index
    %c0_1 = arith.constant 0 : index
    %0 = vector.load %arg1[%c0, %c0_0, %c0_1] : memref<1x16x128xf32, #tpu.memory_space<vmem>>, vector<1x16x128xf32>
    %1 = vector.shape_cast %0 : vector<1x16x128xf32> to vector<16x128xf32>
    %c0_2 = arith.constant 0 : index
    %c0_3 = arith.constant 0 : index
    %c0_4 = arith.constant 0 : index
    %2 = vector.load %arg2[%c0_2, %c0_3, %c0_4] : memref<1x16x128xf32, #tpu.memory_space<vmem>>, vector<1x16x128xf32>
    %3 = vector.shape_cast %2 : vector<1x16x128xf32> to vector<16x128xf32>
    %4 = arith.addf %1, %3 : vector<16x128xf32>
    %c0_5 = arith.constant 0 : index
    %c0_6 = arith.constant 0 : index
    %c0_7 = arith.constant 0 : index
    %5 = vector.load %arg3[%c0_5, %c0_6, %c0_7] : memref<2x128x128xf32, #tpu.memory_space<vmem>>, vector<1x128x128xf32>
    %6 = vector.shape_cast %5 : vector<1x128x128xf32> to vector<128x128xf32>
    %cst = arith.constant dense<0.000000e+00> : vector<16x128xf32>
    %7 = tpu.matmul %4, %6, %cst {dimension_numbers = #tpu.dot_dimension_numbers<[1], [0], [0], [1], [0, 0, 1, 1], [], []>} : vector<16x128xf32>, vector<128x128xf32>, vector<16x128xf32> -> vector<16x128xf32>
    %c0_8 = arith.constant 0 : index
    %c0_9 = arith.constant 0 : index
    %c0_10 = arith.constant 0 : index
    %8 = vector.load %arg4[%c0_8, %c0_9, %c0_10] : memref<2x1x128xf32, #tpu.memory_space<vmem>>, vector<1x1x128xf32>
    %9 = vector.shape_cast %8 : vector<1x1x128xf32> to vector<1x128xf32>
    %10 = vector.broadcast %9 : vector<1x128xf32> to vector<16x128xf32>
    %11 = arith.addf %7, %10 : vector<16x128xf32>
    %c0_11 = arith.constant 0 : index
    %c0_12 = arith.constant 0 : index
    %c0_13 = arith.constant 0 : index
    %12 = vector.load %arg5[%c0_11, %c0_12, %c0_13] : memref<2x128x128xf32, #tpu.memory_space<vmem>>, vector<1x128x128xf32>
    %13 = vector.shape_cast %12 : vector<1x128x128xf32> to vector<128x128xf32>
    %cst_14 = arith.constant dense<0.000000e+00> : vector<16x128xf32>
    %14 = tpu.matmul %4, %13, %cst_14 {dimension_numbers = #tpu.dot_dimension_numbers<[1], [0], [0], [1], [0, 0, 1, 1], [], []>} : vector<16x128xf32>, vector<128x128xf32>, vector<16x128xf32> -> vector<16x128xf32>
    %c0_15 = arith.constant 0 : index
    %c0_16 = arith.constant 0 : index
    %c0_17 = arith.constant 0 : index
    %15 = vector.load %arg6[%c0_15, %c0_16, %c0_17] : memref<2x1x128xf32, #tpu.memory_space<vmem>>, vector<1x1x128xf32>
    %16 = vector.shape_cast %15 : vector<1x1x128xf32> to vector<1x128xf32>
    %17 = vector.broadcast %16 : vector<1x128xf32> to vector<16x128xf32>
    %18 = arith.addf %14, %17 : vector<16x128xf32>
    %c0_18 = arith.constant 0 : index
    %c0_19 = arith.constant 0 : index
    %c0_20 = arith.constant 0 : index
    %19 = vector.load %arg7[%c0_18, %c0_19, %c0_20] : memref<2x128x128xf32, #tpu.memory_space<vmem>>, vector<1x128x128xf32>
    %20 = vector.shape_cast %19 : vector<1x128x128xf32> to vector<128x128xf32>
    %cst_21 = arith.constant dense<0.000000e+00> : vector<16x128xf32>
    %21 = tpu.matmul %1, %20, %cst_21 {dimension_numbers = #tpu.dot_dimension_numbers<[1], [0], [0], [1], [0, 0, 1, 1], [], []>} : vector<16x128xf32>, vector<128x128xf32>, vector<16x128xf32> -> vector<16x128xf32>
    %c0_22 = arith.constant 0 : index
    %c0_23 = arith.constant 0 : index
    %c0_24 = arith.constant 0 : index
    %22 = vector.load %arg8[%c0_22, %c0_23, %c0_24] : memref<2x1x128xf32, #tpu.memory_space<vmem>>, vector<1x1x128xf32>
    %23 = vector.shape_cast %22 : vector<1x1x128xf32> to vector<1x128xf32>
    %24 = vector.broadcast %23 : vector<1x128xf32> to vector<16x128xf32>
    %25 = arith.addf %21, %24 : vector<16x128xf32>
    %cst_25 = arith.constant 0.000000e+00 : f32
    %26 = vector.broadcast %cst_25 : f32 to vector<16x128xf32>
    %27 = vector.extract_strided_slice %11 {offsets = [0, 0], sizes = [16, 32], strides = [1, 1]} : vector<16x128xf32> to vector<16x32xf32>
    %cst_26 = arith.constant 0.176776692 : f32
    %28 = vector.broadcast %cst_26 : f32 to vector<16x32xf32>
    %29 = arith.mulf %27, %28 : vector<16x32xf32>
    %30 = vector.extract_strided_slice %18 {offsets = [0, 0], sizes = [16, 32], strides = [1, 1]} : vector<16x128xf32> to vector<16x32xf32>
    %31 = vector.extract_strided_slice %25 {offsets = [0, 0], sizes = [16, 32], strides = [1, 1]} : vector<16x128xf32> to vector<16x32xf32>
    %cst_27 = arith.constant dense<0.000000e+00> : vector<16x16xf32>
    %32 = tpu.matmul %29, %30, %cst_27 {dimension_numbers = #tpu.dot_dimension_numbers<[1], [1], [0], [0], [0, 0, 1, 0], [], []>} : vector<16x32xf32>, vector<16x32xf32>, vector<16x16xf32> -> vector<16x16xf32>
    %cst_28 = arith.constant dense<0xFF800000> : vector<16xf32>
    %33 = vector.multi_reduction <maximumf>, %32, %cst_28 [1] : vector<16x16xf32> to vector<16xf32>
    %34 = vector.shape_cast %33 : vector<16xf32> to vector<16x1xf32>
    %35 = vector.broadcast %34 : vector<16x1xf32> to vector<16x16xf32>
    %36 = arith.subf %32, %35 : vector<16x16xf32>
    %37 = math.exp %36 : vector<16x16xf32>
    %cst_29 = arith.constant dense<0.000000e+00> : vector<16xf32>
    %38 = vector.multi_reduction <add>, %37, %cst_29 [1] : vector<16x16xf32> to vector<16xf32>
    %39 = vector.shape_cast %38 : vector<16xf32> to vector<16x1xf32>
    %40 = vector.broadcast %39 : vector<16x1xf32> to vector<16x16xf32>
    %41 = arith.divf %37, %40 : vector<16x16xf32>
    %cst_30 = arith.constant dense<0.000000e+00> : vector<16x32xf32>
    %42 = tpu.matmul %41, %31, %cst_30 {dimension_numbers = #tpu.dot_dimension_numbers<[1], [0], [0], [1], [0, 0, 1, 1], [], []>} : vector<16x16xf32>, vector<16x32xf32>, vector<16x32xf32> -> vector<16x32xf32>
    %c0_31 = arith.constant 0 : index
    %c0_32 = arith.constant 0 : index
    %c0_33 = arith.constant 0 : index
    %43 = vector.load %arg9[%c0_31, %c0_32, %c0_33] : memref<2x128x128xf32, #tpu.memory_space<vmem>>, vector<1x32x128xf32>
    %44 = vector.shape_cast %43 : vector<1x32x128xf32> to vector<32x128xf32>
    %cst_34 = arith.constant dense<0.000000e+00> : vector<16x128xf32>
    %45 = tpu.matmul %42, %44, %cst_34 {dimension_numbers = #tpu.dot_dimension_numbers<[1], [0], [0], [1], [0, 0, 1, 1], [], []>} : vector<16x32xf32>, vector<32x128xf32>, vector<16x128xf32> -> vector<16x128xf32>
    %46 = arith.addf %26, %45 : vector<16x128xf32>
    %47 = vector.extract_strided_slice %11 {offsets = [0, 32], sizes = [16, 32], strides = [1, 1]} : vector<16x128xf32> to vector<16x32xf32>
    %cst_35 = arith.constant 0.176776692 : f32
    %48 = vector.broadcast %cst_35 : f32 to vector<16x32xf32>
    %49 = arith.mulf %47, %48 : vector<16x32xf32>
    %50 = vector.extract_strided_slice %18 {offsets = [0, 32], sizes = [16, 32], strides = [1, 1]} : vector<16x128xf32> to vector<16x32xf32>
    %51 = vector.extract_strided_slice %25 {offsets = [0, 32], sizes = [16, 32], strides = [1, 1]} : vector<16x128xf32> to vector<16x32xf32>
    %cst_36 = arith.constant dense<0.000000e+00> : vector<16x16xf32>
    %52 = tpu.matmul %49, %50, %cst_36 {dimension_numbers = #tpu.dot_dimension_numbers<[1], [1], [0], [0], [0, 0, 1, 0], [], []>} : vector<16x32xf32>, vector<16x32xf32>, vector<16x16xf32> -> vector<16x16xf32>
    %cst_37 = arith.constant dense<0xFF800000> : vector<16xf32>
    %53 = vector.multi_reduction <maximumf>, %52, %cst_37 [1] : vector<16x16xf32> to vector<16xf32>
    %54 = vector.shape_cast %53 : vector<16xf32> to vector<16x1xf32>
    %55 = vector.broadcast %54 : vector<16x1xf32> to vector<16x16xf32>
    %56 = arith.subf %52, %55 : vector<16x16xf32>
    %57 = math.exp %56 : vector<16x16xf32>
    %cst_38 = arith.constant dense<0.000000e+00> : vector<16xf32>
    %58 = vector.multi_reduction <add>, %57, %cst_38 [1] : vector<16x16xf32> to vector<16xf32>
    %59 = vector.shape_cast %58 : vector<16xf32> to vector<16x1xf32>
    %60 = vector.broadcast %59 : vector<16x1xf32> to vector<16x16xf32>
    %61 = arith.divf %57, %60 : vector<16x16xf32>
    %cst_39 = arith.constant dense<0.000000e+00> : vector<16x32xf32>
    %62 = tpu.matmul %61, %51, %cst_39 {dimension_numbers = #tpu.dot_dimension_numbers<[1], [0], [0], [1], [0, 0, 1, 1], [], []>} : vector<16x16xf32>, vector<16x32xf32>, vector<16x32xf32> -> vector<16x32xf32>
    %c0_40 = arith.constant 0 : index
    %c32 = arith.constant 32 : index
    %c0_41 = arith.constant 0 : index
    %63 = vector.load %arg9[%c0_40, %c32, %c0_41] : memref<2x128x128xf32, #tpu.memory_space<vmem>>, vector<1x32x128xf32>
    %64 = vector.shape_cast %63 : vector<1x32x128xf32> to vector<32x128xf32>
    %cst_42 = arith.constant dense<0.000000e+00> : vector<16x128xf32>
    %65 = tpu.matmul %62, %64, %cst_42 {dimension_numbers = #tpu.dot_dimension_numbers<[1], [0], [0], [1], [0, 0, 1, 1], [], []>} : vector<16x32xf32>, vector<32x128xf32>, vector<16x128xf32> -> vector<16x128xf32>
    %66 = arith.addf %46, %65 : vector<16x128xf32>
    %67 = vector.extract_strided_slice %11 {offsets = [0, 64], sizes = [16, 32], strides = [1, 1]} : vector<16x128xf32> to vector<16x32xf32>
    %cst_43 = arith.constant 0.176776692 : f32
    %68 = vector.broadcast %cst_43 : f32 to vector<16x32xf32>
    %69 = arith.mulf %67, %68 : vector<16x32xf32>
    %70 = vector.extract_strided_slice %18 {offsets = [0, 64], sizes = [16, 32], strides = [1, 1]} : vector<16x128xf32> to vector<16x32xf32>
    %71 = vector.extract_strided_slice %25 {offsets = [0, 64], sizes = [16, 32], strides = [1, 1]} : vector<16x128xf32> to vector<16x32xf32>
    %cst_44 = arith.constant dense<0.000000e+00> : vector<16x16xf32>
    %72 = tpu.matmul %69, %70, %cst_44 {dimension_numbers = #tpu.dot_dimension_numbers<[1], [1], [0], [0], [0, 0, 1, 0], [], []>} : vector<16x32xf32>, vector<16x32xf32>, vector<16x16xf32> -> vector<16x16xf32>
    %cst_45 = arith.constant dense<0xFF800000> : vector<16xf32>
    %73 = vector.multi_reduction <maximumf>, %72, %cst_45 [1] : vector<16x16xf32> to vector<16xf32>
    %74 = vector.shape_cast %73 : vector<16xf32> to vector<16x1xf32>
    %75 = vector.broadcast %74 : vector<16x1xf32> to vector<16x16xf32>
    %76 = arith.subf %72, %75 : vector<16x16xf32>
    %77 = math.exp %76 : vector<16x16xf32>
    %cst_46 = arith.constant dense<0.000000e+00> : vector<16xf32>
    %78 = vector.multi_reduction <add>, %77, %cst_46 [1] : vector<16x16xf32> to vector<16xf32>
    %79 = vector.shape_cast %78 : vector<16xf32> to vector<16x1xf32>
    %80 = vector.broadcast %79 : vector<16x1xf32> to vector<16x16xf32>
    %81 = arith.divf %77, %80 : vector<16x16xf32>
    %cst_47 = arith.constant dense<0.000000e+00> : vector<16x32xf32>
    %82 = tpu.matmul %81, %71, %cst_47 {dimension_numbers = #tpu.dot_dimension_numbers<[1], [0], [0], [1], [0, 0, 1, 1], [], []>} : vector<16x16xf32>, vector<16x32xf32>, vector<16x32xf32> -> vector<16x32xf32>
    %c0_48 = arith.constant 0 : index
    %c64 = arith.constant 64 : index
    %c0_49 = arith.constant 0 : index
    %83 = vector.load %arg9[%c0_48, %c64, %c0_49] : memref<2x128x128xf32, #tpu.memory_space<vmem>>, vector<1x32x128xf32>
    %84 = vector.shape_cast %83 : vector<1x32x128xf32> to vector<32x128xf32>
    %cst_50 = arith.constant dense<0.000000e+00> : vector<16x128xf32>
    %85 = tpu.matmul %82, %84, %cst_50 {dimension_numbers = #tpu.dot_dimension_numbers<[1], [0], [0], [1], [0, 0, 1, 1], [], []>} : vector<16x32xf32>, vector<32x128xf32>, vector<16x128xf32> -> vector<16x128xf32>
    %86 = arith.addf %66, %85 : vector<16x128xf32>
    %87 = vector.extract_strided_slice %11 {offsets = [0, 96], sizes = [16, 32], strides = [1, 1]} : vector<16x128xf32> to vector<16x32xf32>
    %cst_51 = arith.constant 0.176776692 : f32
    %88 = vector.broadcast %cst_51 : f32 to vector<16x32xf32>
    %89 = arith.mulf %87, %88 : vector<16x32xf32>
    %90 = vector.extract_strided_slice %18 {offsets = [0, 96], sizes = [16, 32], strides = [1, 1]} : vector<16x128xf32> to vector<16x32xf32>
    %91 = vector.extract_strided_slice %25 {offsets = [0, 96], sizes = [16, 32], strides = [1, 1]} : vector<16x128xf32> to vector<16x32xf32>
    %cst_52 = arith.constant dense<0.000000e+00> : vector<16x16xf32>
    %92 = tpu.matmul %89, %90, %cst_52 {dimension_numbers = #tpu.dot_dimension_numbers<[1], [1], [0], [0], [0, 0, 1, 0], [], []>} : vector<16x32xf32>, vector<16x32xf32>, vector<16x16xf32> -> vector<16x16xf32>
    %cst_53 = arith.constant dense<0xFF800000> : vector<16xf32>
    %93 = vector.multi_reduction <maximumf>, %92, %cst_53 [1] : vector<16x16xf32> to vector<16xf32>
    %94 = vector.shape_cast %93 : vector<16xf32> to vector<16x1xf32>
    %95 = vector.broadcast %94 : vector<16x1xf32> to vector<16x16xf32>
    %96 = arith.subf %92, %95 : vector<16x16xf32>
    %97 = math.exp %96 : vector<16x16xf32>
    %cst_54 = arith.constant dense<0.000000e+00> : vector<16xf32>
    %98 = vector.multi_reduction <add>, %97, %cst_54 [1] : vector<16x16xf32> to vector<16xf32>
    %99 = vector.shape_cast %98 : vector<16xf32> to vector<16x1xf32>
    %100 = vector.broadcast %99 : vector<16x1xf32> to vector<16x16xf32>
    %101 = arith.divf %97, %100 : vector<16x16xf32>
    %cst_55 = arith.constant dense<0.000000e+00> : vector<16x32xf32>
    %102 = tpu.matmul %101, %91, %cst_55 {dimension_numbers = #tpu.dot_dimension_numbers<[1], [0], [0], [1], [0, 0, 1, 1], [], []>} : vector<16x16xf32>, vector<16x32xf32>, vector<16x32xf32> -> vector<16x32xf32>
    %c0_56 = arith.constant 0 : index
    %c96 = arith.constant 96 : index
    %c0_57 = arith.constant 0 : index
    %103 = vector.load %arg9[%c0_56, %c96, %c0_57] : memref<2x128x128xf32, #tpu.memory_space<vmem>>, vector<1x32x128xf32>
    %104 = vector.shape_cast %103 : vector<1x32x128xf32> to vector<32x128xf32>
    %cst_58 = arith.constant dense<0.000000e+00> : vector<16x128xf32>
    %105 = tpu.matmul %102, %104, %cst_58 {dimension_numbers = #tpu.dot_dimension_numbers<[1], [0], [0], [1], [0, 0, 1, 1], [], []>} : vector<16x32xf32>, vector<32x128xf32>, vector<16x128xf32> -> vector<16x128xf32>
    %106 = arith.addf %86, %105 : vector<16x128xf32>
    %c0_59 = arith.constant 0 : index
    %c0_60 = arith.constant 0 : index
    %c0_61 = arith.constant 0 : index
    %107 = vector.load %arg10[%c0_59, %c0_60, %c0_61] : memref<2x1x128xf32, #tpu.memory_space<vmem>>, vector<1x1x128xf32>
    %108 = vector.shape_cast %107 : vector<1x1x128xf32> to vector<1x128xf32>
    %109 = vector.broadcast %108 : vector<1x128xf32> to vector<16x128xf32>
    %110 = arith.addf %106, %109 : vector<16x128xf32>
    %111 = arith.addf %1, %110 : vector<16x128xf32>
    %c0_62 = arith.constant 0 : index
    %c0_63 = arith.constant 0 : index
    %c0_64 = arith.constant 0 : index
    %112 = vector.load %arg11[%c0_62, %c0_63, %c0_64] : memref<2x1x128xf32, #tpu.memory_space<vmem>>, vector<1x1x128xf32>
    %113 = vector.shape_cast %112 : vector<1x1x128xf32> to vector<1x128xf32>
    %c0_65 = arith.constant 0 : index
    %c0_66 = arith.constant 0 : index
    %c0_67 = arith.constant 0 : index
    %114 = vector.load %arg12[%c0_65, %c0_66, %c0_67] : memref<2x1x128xf32, #tpu.memory_space<vmem>>, vector<1x1x128xf32>
    %115 = vector.shape_cast %114 : vector<1x1x128xf32> to vector<1x128xf32>
    %cst_68 = arith.constant dense<0.000000e+00> : vector<16xf32>
    %116 = vector.multi_reduction <add>, %111, %cst_68 [1] : vector<16x128xf32> to vector<16xf32>
    %117 = vector.shape_cast %116 : vector<16xf32> to vector<16x1xf32>
    %cst_69 = arith.constant 1.280000e+02 : f32
    %118 = vector.broadcast %cst_69 : f32 to vector<16x1xf32>
    %119 = arith.divf %117, %118 : vector<16x1xf32>
    %120 = vector.broadcast %119 : vector<16x1xf32> to vector<16x128xf32>
    %121 = arith.subf %111, %120 : vector<16x128xf32>
    %122 = arith.mulf %121, %121 : vector<16x128xf32>
    %cst_70 = arith.constant dense<0.000000e+00> : vector<16xf32>
    %123 = vector.multi_reduction <add>, %122, %cst_70 [1] : vector<16x128xf32> to vector<16xf32>
    %124 = vector.shape_cast %123 : vector<16xf32> to vector<16x1xf32>
    %cst_71 = arith.constant 1.280000e+02 : f32
    %125 = vector.broadcast %cst_71 : f32 to vector<16x1xf32>
    %126 = arith.divf %124, %125 : vector<16x1xf32>
    %cst_72 = arith.constant 9.99999974E-6 : f32
    %127 = vector.broadcast %cst_72 : f32 to vector<16x1xf32>
    %128 = arith.addf %126, %127 : vector<16x1xf32>
    %129 = math.rsqrt %128 : vector<16x1xf32>
    %130 = vector.broadcast %129 : vector<16x1xf32> to vector<16x128xf32>
    %131 = arith.mulf %121, %130 : vector<16x128xf32>
    %132 = vector.broadcast %113 : vector<1x128xf32> to vector<16x128xf32>
    %133 = arith.mulf %131, %132 : vector<16x128xf32>
    %134 = vector.broadcast %115 : vector<1x128xf32> to vector<16x128xf32>
    %135 = arith.addf %133, %134 : vector<16x128xf32>
    %c0_73 = arith.constant 0 : index
    %c0_74 = arith.constant 0 : index
    %c0_75 = arith.constant 0 : index
    %136 = vector.load %arg13[%c0_73, %c0_74, %c0_75] : memref<2x128x256xf32, #tpu.memory_space<vmem>>, vector<1x128x256xf32>
    %137 = vector.shape_cast %136 : vector<1x128x256xf32> to vector<128x256xf32>
    %cst_76 = arith.constant dense<0.000000e+00> : vector<16x256xf32>
    %138 = tpu.matmul %135, %137, %cst_76 {dimension_numbers = #tpu.dot_dimension_numbers<[1], [0], [0], [1], [0, 0, 1, 1], [], []>} : vector<16x128xf32>, vector<128x256xf32>, vector<16x256xf32> -> vector<16x256xf32>
    %c0_77 = arith.constant 0 : index
    %c0_78 = arith.constant 0 : index
    %c0_79 = arith.constant 0 : index
    %139 = vector.load %arg14[%c0_77, %c0_78, %c0_79] : memref<2x1x256xf32, #tpu.memory_space<vmem>>, vector<1x1x256xf32>
    %140 = vector.shape_cast %139 : vector<1x1x256xf32> to vector<1x256xf32>
    %141 = vector.broadcast %140 : vector<1x256xf32> to vector<16x256xf32>
    %142 = arith.addf %138, %141 : vector<16x256xf32>
    %cst_80 = arith.constant 0.000000e+00 : f32
    %143 = vector.broadcast %cst_80 : f32 to vector<16x256xf32>
    %144 = arith.maximumf %142, %143 : vector<16x256xf32>
    %c0_81 = arith.constant 0 : index
    %c0_82 = arith.constant 0 : index
    %c0_83 = arith.constant 0 : index
    %145 = vector.load %arg15[%c0_81, %c0_82, %c0_83] : memref<2x256x128xf32, #tpu.memory_space<vmem>>, vector<1x256x128xf32>
    %146 = vector.shape_cast %145 : vector<1x256x128xf32> to vector<256x128xf32>
    %cst_84 = arith.constant dense<0.000000e+00> : vector<16x128xf32>
    %147 = tpu.matmul %144, %146, %cst_84 {dimension_numbers = #tpu.dot_dimension_numbers<[1], [0], [0], [1], [0, 0, 1, 1], [], []>} : vector<16x256xf32>, vector<256x128xf32>, vector<16x128xf32> -> vector<16x128xf32>
    %c0_85 = arith.constant 0 : index
    %c0_86 = arith.constant 0 : index
    %c0_87 = arith.constant 0 : index
    %148 = vector.load %arg16[%c0_85, %c0_86, %c0_87] : memref<2x1x128xf32, #tpu.memory_space<vmem>>, vector<1x1x128xf32>
    %149 = vector.shape_cast %148 : vector<1x1x128xf32> to vector<1x128xf32>
    %150 = vector.broadcast %149 : vector<1x128xf32> to vector<16x128xf32>
    %151 = arith.addf %147, %150 : vector<16x128xf32>
    %152 = arith.addf %135, %151 : vector<16x128xf32>
    %c0_88 = arith.constant 0 : index
    %c0_89 = arith.constant 0 : index
    %c0_90 = arith.constant 0 : index
    %153 = vector.load %arg17[%c0_88, %c0_89, %c0_90] : memref<2x1x128xf32, #tpu.memory_space<vmem>>, vector<1x1x128xf32>
    %154 = vector.shape_cast %153 : vector<1x1x128xf32> to vector<1x128xf32>
    %c0_91 = arith.constant 0 : index
    %c0_92 = arith.constant 0 : index
    %c0_93 = arith.constant 0 : index
    %155 = vector.load %arg18[%c0_91, %c0_92, %c0_93] : memref<2x1x128xf32, #tpu.memory_space<vmem>>, vector<1x1x128xf32>
    %156 = vector.shape_cast %155 : vector<1x1x128xf32> to vector<1x128xf32>
    %cst_94 = arith.constant dense<0.000000e+00> : vector<16xf32>
    %157 = vector.multi_reduction <add>, %152, %cst_94 [1] : vector<16x128xf32> to vector<16xf32>
    %158 = vector.shape_cast %157 : vector<16xf32> to vector<16x1xf32>
    %cst_95 = arith.constant 1.280000e+02 : f32
    %159 = vector.broadcast %cst_95 : f32 to vector<16x1xf32>
    %160 = arith.divf %158, %159 : vector<16x1xf32>
    %161 = vector.broadcast %160 : vector<16x1xf32> to vector<16x128xf32>
    %162 = arith.subf %152, %161 : vector<16x128xf32>
    %163 = arith.mulf %162, %162 : vector<16x128xf32>
    %cst_96 = arith.constant dense<0.000000e+00> : vector<16xf32>
    %164 = vector.multi_reduction <add>, %163, %cst_96 [1] : vector<16x128xf32> to vector<16xf32>
    %165 = vector.shape_cast %164 : vector<16xf32> to vector<16x1xf32>
    %cst_97 = arith.constant 1.280000e+02 : f32
    %166 = vector.broadcast %cst_97 : f32 to vector<16x1xf32>
    %167 = arith.divf %165, %166 : vector<16x1xf32>
    %cst_98 = arith.constant 9.99999974E-6 : f32
    %168 = vector.broadcast %cst_98 : f32 to vector<16x1xf32>
    %169 = arith.addf %167, %168 : vector<16x1xf32>
    %170 = math.rsqrt %169 : vector<16x1xf32>
    %171 = vector.broadcast %170 : vector<16x1xf32> to vector<16x128xf32>
    %172 = arith.mulf %162, %171 : vector<16x128xf32>
    %173 = vector.broadcast %154 : vector<1x128xf32> to vector<16x128xf32>
    %174 = arith.mulf %172, %173 : vector<16x128xf32>
    %175 = vector.broadcast %156 : vector<1x128xf32> to vector<16x128xf32>
    %176 = arith.addf %174, %175 : vector<16x128xf32>
    %177 = arith.addf %176, %3 : vector<16x128xf32>
    %c1 = arith.constant 1 : index
    %c0_99 = arith.constant 0 : index
    %c0_100 = arith.constant 0 : index
    %178 = vector.load %arg3[%c1, %c0_99, %c0_100] : memref<2x128x128xf32, #tpu.memory_space<vmem>>, vector<1x128x128xf32>
    %179 = vector.shape_cast %178 : vector<1x128x128xf32> to vector<128x128xf32>
    %cst_101 = arith.constant dense<0.000000e+00> : vector<16x128xf32>
    %180 = tpu.matmul %177, %179, %cst_101 {dimension_numbers = #tpu.dot_dimension_numbers<[1], [0], [0], [1], [0, 0, 1, 1], [], []>} : vector<16x128xf32>, vector<128x128xf32>, vector<16x128xf32> -> vector<16x128xf32>
    %c1_102 = arith.constant 1 : index
    %c0_103 = arith.constant 0 : index
    %c0_104 = arith.constant 0 : index
    %181 = vector.load %arg4[%c1_102, %c0_103, %c0_104] : memref<2x1x128xf32, #tpu.memory_space<vmem>>, vector<1x1x128xf32>
    %182 = vector.shape_cast %181 : vector<1x1x128xf32> to vector<1x128xf32>
    %183 = vector.broadcast %182 : vector<1x128xf32> to vector<16x128xf32>
    %184 = arith.addf %180, %183 : vector<16x128xf32>
    %c1_105 = arith.constant 1 : index
    %c0_106 = arith.constant 0 : index
    %c0_107 = arith.constant 0 : index
    %185 = vector.load %arg5[%c1_105, %c0_106, %c0_107] : memref<2x128x128xf32, #tpu.memory_space<vmem>>, vector<1x128x128xf32>
    %186 = vector.shape_cast %185 : vector<1x128x128xf32> to vector<128x128xf32>
    %cst_108 = arith.constant dense<0.000000e+00> : vector<16x128xf32>
    %187 = tpu.matmul %177, %186, %cst_108 {dimension_numbers = #tpu.dot_dimension_numbers<[1], [0], [0], [1], [0, 0, 1, 1], [], []>} : vector<16x128xf32>, vector<128x128xf32>, vector<16x128xf32> -> vector<16x128xf32>
    %c1_109 = arith.constant 1 : index
    %c0_110 = arith.constant 0 : index
    %c0_111 = arith.constant 0 : index
    %188 = vector.load %arg6[%c1_109, %c0_110, %c0_111] : memref<2x1x128xf32, #tpu.memory_space<vmem>>, vector<1x1x128xf32>
    %189 = vector.shape_cast %188 : vector<1x1x128xf32> to vector<1x128xf32>
    %190 = vector.broadcast %189 : vector<1x128xf32> to vector<16x128xf32>
    %191 = arith.addf %187, %190 : vector<16x128xf32>
    %c1_112 = arith.constant 1 : index
    %c0_113 = arith.constant 0 : index
    %c0_114 = arith.constant 0 : index
    %192 = vector.load %arg7[%c1_112, %c0_113, %c0_114] : memref<2x128x128xf32, #tpu.memory_space<vmem>>, vector<1x128x128xf32>
    %193 = vector.shape_cast %192 : vector<1x128x128xf32> to vector<128x128xf32>
    %cst_115 = arith.constant dense<0.000000e+00> : vector<16x128xf32>
    %194 = tpu.matmul %176, %193, %cst_115 {dimension_numbers = #tpu.dot_dimension_numbers<[1], [0], [0], [1], [0, 0, 1, 1], [], []>} : vector<16x128xf32>, vector<128x128xf32>, vector<16x128xf32> -> vector<16x128xf32>
    %c1_116 = arith.constant 1 : index
    %c0_117 = arith.constant 0 : index
    %c0_118 = arith.constant 0 : index
    %195 = vector.load %arg8[%c1_116, %c0_117, %c0_118] : memref<2x1x128xf32, #tpu.memory_space<vmem>>, vector<1x1x128xf32>
    %196 = vector.shape_cast %195 : vector<1x1x128xf32> to vector<1x128xf32>
    %197 = vector.broadcast %196 : vector<1x128xf32> to vector<16x128xf32>
    %198 = arith.addf %194, %197 : vector<16x128xf32>
    %cst_119 = arith.constant 0.000000e+00 : f32
    %199 = vector.broadcast %cst_119 : f32 to vector<16x128xf32>
    %200 = vector.extract_strided_slice %184 {offsets = [0, 0], sizes = [16, 32], strides = [1, 1]} : vector<16x128xf32> to vector<16x32xf32>
    %cst_120 = arith.constant 0.176776692 : f32
    %201 = vector.broadcast %cst_120 : f32 to vector<16x32xf32>
    %202 = arith.mulf %200, %201 : vector<16x32xf32>
    %203 = vector.extract_strided_slice %191 {offsets = [0, 0], sizes = [16, 32], strides = [1, 1]} : vector<16x128xf32> to vector<16x32xf32>
    %204 = vector.extract_strided_slice %198 {offsets = [0, 0], sizes = [16, 32], strides = [1, 1]} : vector<16x128xf32> to vector<16x32xf32>
    %cst_121 = arith.constant dense<0.000000e+00> : vector<16x16xf32>
    %205 = tpu.matmul %202, %203, %cst_121 {dimension_numbers = #tpu.dot_dimension_numbers<[1], [1], [0], [0], [0, 0, 1, 0], [], []>} : vector<16x32xf32>, vector<16x32xf32>, vector<16x16xf32> -> vector<16x16xf32>
    %cst_122 = arith.constant dense<0xFF800000> : vector<16xf32>
    %206 = vector.multi_reduction <maximumf>, %205, %cst_122 [1] : vector<16x16xf32> to vector<16xf32>
    %207 = vector.shape_cast %206 : vector<16xf32> to vector<16x1xf32>
    %208 = vector.broadcast %207 : vector<16x1xf32> to vector<16x16xf32>
    %209 = arith.subf %205, %208 : vector<16x16xf32>
    %210 = math.exp %209 : vector<16x16xf32>
    %cst_123 = arith.constant dense<0.000000e+00> : vector<16xf32>
    %211 = vector.multi_reduction <add>, %210, %cst_123 [1] : vector<16x16xf32> to vector<16xf32>
    %212 = vector.shape_cast %211 : vector<16xf32> to vector<16x1xf32>
    %213 = vector.broadcast %212 : vector<16x1xf32> to vector<16x16xf32>
    %214 = arith.divf %210, %213 : vector<16x16xf32>
    %cst_124 = arith.constant dense<0.000000e+00> : vector<16x32xf32>
    %215 = tpu.matmul %214, %204, %cst_124 {dimension_numbers = #tpu.dot_dimension_numbers<[1], [0], [0], [1], [0, 0, 1, 1], [], []>} : vector<16x16xf32>, vector<16x32xf32>, vector<16x32xf32> -> vector<16x32xf32>
    %c1_125 = arith.constant 1 : index
    %c0_126 = arith.constant 0 : index
    %c0_127 = arith.constant 0 : index
    %216 = vector.load %arg9[%c1_125, %c0_126, %c0_127] : memref<2x128x128xf32, #tpu.memory_space<vmem>>, vector<1x32x128xf32>
    %217 = vector.shape_cast %216 : vector<1x32x128xf32> to vector<32x128xf32>
    %cst_128 = arith.constant dense<0.000000e+00> : vector<16x128xf32>
    %218 = tpu.matmul %215, %217, %cst_128 {dimension_numbers = #tpu.dot_dimension_numbers<[1], [0], [0], [1], [0, 0, 1, 1], [], []>} : vector<16x32xf32>, vector<32x128xf32>, vector<16x128xf32> -> vector<16x128xf32>
    %219 = arith.addf %199, %218 : vector<16x128xf32>
    %220 = vector.extract_strided_slice %184 {offsets = [0, 32], sizes = [16, 32], strides = [1, 1]} : vector<16x128xf32> to vector<16x32xf32>
    %cst_129 = arith.constant 0.176776692 : f32
    %221 = vector.broadcast %cst_129 : f32 to vector<16x32xf32>
    %222 = arith.mulf %220, %221 : vector<16x32xf32>
    %223 = vector.extract_strided_slice %191 {offsets = [0, 32], sizes = [16, 32], strides = [1, 1]} : vector<16x128xf32> to vector<16x32xf32>
    %224 = vector.extract_strided_slice %198 {offsets = [0, 32], sizes = [16, 32], strides = [1, 1]} : vector<16x128xf32> to vector<16x32xf32>
    %cst_130 = arith.constant dense<0.000000e+00> : vector<16x16xf32>
    %225 = tpu.matmul %222, %223, %cst_130 {dimension_numbers = #tpu.dot_dimension_numbers<[1], [1], [0], [0], [0, 0, 1, 0], [], []>} : vector<16x32xf32>, vector<16x32xf32>, vector<16x16xf32> -> vector<16x16xf32>
    %cst_131 = arith.constant dense<0xFF800000> : vector<16xf32>
    %226 = vector.multi_reduction <maximumf>, %225, %cst_131 [1] : vector<16x16xf32> to vector<16xf32>
    %227 = vector.shape_cast %226 : vector<16xf32> to vector<16x1xf32>
    %228 = vector.broadcast %227 : vector<16x1xf32> to vector<16x16xf32>
    %229 = arith.subf %225, %228 : vector<16x16xf32>
    %230 = math.exp %229 : vector<16x16xf32>
    %cst_132 = arith.constant dense<0.000000e+00> : vector<16xf32>
    %231 = vector.multi_reduction <add>, %230, %cst_132 [1] : vector<16x16xf32> to vector<16xf32>
    %232 = vector.shape_cast %231 : vector<16xf32> to vector<16x1xf32>
    %233 = vector.broadcast %232 : vector<16x1xf32> to vector<16x16xf32>
    %234 = arith.divf %230, %233 : vector<16x16xf32>
    %cst_133 = arith.constant dense<0.000000e+00> : vector<16x32xf32>
    %235 = tpu.matmul %234, %224, %cst_133 {dimension_numbers = #tpu.dot_dimension_numbers<[1], [0], [0], [1], [0, 0, 1, 1], [], []>} : vector<16x16xf32>, vector<16x32xf32>, vector<16x32xf32> -> vector<16x32xf32>
    %c1_134 = arith.constant 1 : index
    %c32_135 = arith.constant 32 : index
    %c0_136 = arith.constant 0 : index
    %236 = vector.load %arg9[%c1_134, %c32_135, %c0_136] : memref<2x128x128xf32, #tpu.memory_space<vmem>>, vector<1x32x128xf32>
    %237 = vector.shape_cast %236 : vector<1x32x128xf32> to vector<32x128xf32>
    %cst_137 = arith.constant dense<0.000000e+00> : vector<16x128xf32>
    %238 = tpu.matmul %235, %237, %cst_137 {dimension_numbers = #tpu.dot_dimension_numbers<[1], [0], [0], [1], [0, 0, 1, 1], [], []>} : vector<16x32xf32>, vector<32x128xf32>, vector<16x128xf32> -> vector<16x128xf32>
    %239 = arith.addf %219, %238 : vector<16x128xf32>
    %240 = vector.extract_strided_slice %184 {offsets = [0, 64], sizes = [16, 32], strides = [1, 1]} : vector<16x128xf32> to vector<16x32xf32>
    %cst_138 = arith.constant 0.176776692 : f32
    %241 = vector.broadcast %cst_138 : f32 to vector<16x32xf32>
    %242 = arith.mulf %240, %241 : vector<16x32xf32>
    %243 = vector.extract_strided_slice %191 {offsets = [0, 64], sizes = [16, 32], strides = [1, 1]} : vector<16x128xf32> to vector<16x32xf32>
    %244 = vector.extract_strided_slice %198 {offsets = [0, 64], sizes = [16, 32], strides = [1, 1]} : vector<16x128xf32> to vector<16x32xf32>
    %cst_139 = arith.constant dense<0.000000e+00> : vector<16x16xf32>
    %245 = tpu.matmul %242, %243, %cst_139 {dimension_numbers = #tpu.dot_dimension_numbers<[1], [1], [0], [0], [0, 0, 1, 0], [], []>} : vector<16x32xf32>, vector<16x32xf32>, vector<16x16xf32> -> vector<16x16xf32>
    %cst_140 = arith.constant dense<0xFF800000> : vector<16xf32>
    %246 = vector.multi_reduction <maximumf>, %245, %cst_140 [1] : vector<16x16xf32> to vector<16xf32>
    %247 = vector.shape_cast %246 : vector<16xf32> to vector<16x1xf32>
    %248 = vector.broadcast %247 : vector<16x1xf32> to vector<16x16xf32>
    %249 = arith.subf %245, %248 : vector<16x16xf32>
    %250 = math.exp %249 : vector<16x16xf32>
    %cst_141 = arith.constant dense<0.000000e+00> : vector<16xf32>
    %251 = vector.multi_reduction <add>, %250, %cst_141 [1] : vector<16x16xf32> to vector<16xf32>
    %252 = vector.shape_cast %251 : vector<16xf32> to vector<16x1xf32>
    %253 = vector.broadcast %252 : vector<16x1xf32> to vector<16x16xf32>
    %254 = arith.divf %250, %253 : vector<16x16xf32>
    %cst_142 = arith.constant dense<0.000000e+00> : vector<16x32xf32>
    %255 = tpu.matmul %254, %244, %cst_142 {dimension_numbers = #tpu.dot_dimension_numbers<[1], [0], [0], [1], [0, 0, 1, 1], [], []>} : vector<16x16xf32>, vector<16x32xf32>, vector<16x32xf32> -> vector<16x32xf32>
    %c1_143 = arith.constant 1 : index
    %c64_144 = arith.constant 64 : index
    %c0_145 = arith.constant 0 : index
    %256 = vector.load %arg9[%c1_143, %c64_144, %c0_145] : memref<2x128x128xf32, #tpu.memory_space<vmem>>, vector<1x32x128xf32>
    %257 = vector.shape_cast %256 : vector<1x32x128xf32> to vector<32x128xf32>
    %cst_146 = arith.constant dense<0.000000e+00> : vector<16x128xf32>
    %258 = tpu.matmul %255, %257, %cst_146 {dimension_numbers = #tpu.dot_dimension_numbers<[1], [0], [0], [1], [0, 0, 1, 1], [], []>} : vector<16x32xf32>, vector<32x128xf32>, vector<16x128xf32> -> vector<16x128xf32>
    %259 = arith.addf %239, %258 : vector<16x128xf32>
    %260 = vector.extract_strided_slice %184 {offsets = [0, 96], sizes = [16, 32], strides = [1, 1]} : vector<16x128xf32> to vector<16x32xf32>
    %cst_147 = arith.constant 0.176776692 : f32
    %261 = vector.broadcast %cst_147 : f32 to vector<16x32xf32>
    %262 = arith.mulf %260, %261 : vector<16x32xf32>
    %263 = vector.extract_strided_slice %191 {offsets = [0, 96], sizes = [16, 32], strides = [1, 1]} : vector<16x128xf32> to vector<16x32xf32>
    %264 = vector.extract_strided_slice %198 {offsets = [0, 96], sizes = [16, 32], strides = [1, 1]} : vector<16x128xf32> to vector<16x32xf32>
    %cst_148 = arith.constant dense<0.000000e+00> : vector<16x16xf32>
    %265 = tpu.matmul %262, %263, %cst_148 {dimension_numbers = #tpu.dot_dimension_numbers<[1], [1], [0], [0], [0, 0, 1, 0], [], []>} : vector<16x32xf32>, vector<16x32xf32>, vector<16x16xf32> -> vector<16x16xf32>
    %cst_149 = arith.constant dense<0xFF800000> : vector<16xf32>
    %266 = vector.multi_reduction <maximumf>, %265, %cst_149 [1] : vector<16x16xf32> to vector<16xf32>
    %267 = vector.shape_cast %266 : vector<16xf32> to vector<16x1xf32>
    %268 = vector.broadcast %267 : vector<16x1xf32> to vector<16x16xf32>
    %269 = arith.subf %265, %268 : vector<16x16xf32>
    %270 = math.exp %269 : vector<16x16xf32>
    %cst_150 = arith.constant dense<0.000000e+00> : vector<16xf32>
    %271 = vector.multi_reduction <add>, %270, %cst_150 [1] : vector<16x16xf32> to vector<16xf32>
    %272 = vector.shape_cast %271 : vector<16xf32> to vector<16x1xf32>
    %273 = vector.broadcast %272 : vector<16x1xf32> to vector<16x16xf32>
    %274 = arith.divf %270, %273 : vector<16x16xf32>
    %cst_151 = arith.constant dense<0.000000e+00> : vector<16x32xf32>
    %275 = tpu.matmul %274, %264, %cst_151 {dimension_numbers = #tpu.dot_dimension_numbers<[1], [0], [0], [1], [0, 0, 1, 1], [], []>} : vector<16x16xf32>, vector<16x32xf32>, vector<16x32xf32> -> vector<16x32xf32>
    %c1_152 = arith.constant 1 : index
    %c96_153 = arith.constant 96 : index
    %c0_154 = arith.constant 0 : index
    %276 = vector.load %arg9[%c1_152, %c96_153, %c0_154] : memref<2x128x128xf32, #tpu.memory_space<vmem>>, vector<1x32x128xf32>
    %277 = vector.shape_cast %276 : vector<1x32x128xf32> to vector<32x128xf32>
    %cst_155 = arith.constant dense<0.000000e+00> : vector<16x128xf32>
    %278 = tpu.matmul %275, %277, %cst_155 {dimension_numbers = #tpu.dot_dimension_numbers<[1], [0], [0], [1], [0, 0, 1, 1], [], []>} : vector<16x32xf32>, vector<32x128xf32>, vector<16x128xf32> -> vector<16x128xf32>
    %279 = arith.addf %259, %278 : vector<16x128xf32>
    %c1_156 = arith.constant 1 : index
    %c0_157 = arith.constant 0 : index
    %c0_158 = arith.constant 0 : index
    %280 = vector.load %arg10[%c1_156, %c0_157, %c0_158] : memref<2x1x128xf32, #tpu.memory_space<vmem>>, vector<1x1x128xf32>
    %281 = vector.shape_cast %280 : vector<1x1x128xf32> to vector<1x128xf32>
    %282 = vector.broadcast %281 : vector<1x128xf32> to vector<16x128xf32>
    %283 = arith.addf %279, %282 : vector<16x128xf32>
    %284 = arith.addf %176, %283 : vector<16x128xf32>
    %c1_159 = arith.constant 1 : index
    %c0_160 = arith.constant 0 : index
    %c0_161 = arith.constant 0 : index
    %285 = vector.load %arg11[%c1_159, %c0_160, %c0_161] : memref<2x1x128xf32, #tpu.memory_space<vmem>>, vector<1x1x128xf32>
    %286 = vector.shape_cast %285 : vector<1x1x128xf32> to vector<1x128xf32>
    %c1_162 = arith.constant 1 : index
    %c0_163 = arith.constant 0 : index
    %c0_164 = arith.constant 0 : index
    %287 = vector.load %arg12[%c1_162, %c0_163, %c0_164] : memref<2x1x128xf32, #tpu.memory_space<vmem>>, vector<1x1x128xf32>
    %288 = vector.shape_cast %287 : vector<1x1x128xf32> to vector<1x128xf32>
    %cst_165 = arith.constant dense<0.000000e+00> : vector<16xf32>
    %289 = vector.multi_reduction <add>, %284, %cst_165 [1] : vector<16x128xf32> to vector<16xf32>
    %290 = vector.shape_cast %289 : vector<16xf32> to vector<16x1xf32>
    %cst_166 = arith.constant 1.280000e+02 : f32
    %291 = vector.broadcast %cst_166 : f32 to vector<16x1xf32>
    %292 = arith.divf %290, %291 : vector<16x1xf32>
    %293 = vector.broadcast %292 : vector<16x1xf32> to vector<16x128xf32>
    %294 = arith.subf %284, %293 : vector<16x128xf32>
    %295 = arith.mulf %294, %294 : vector<16x128xf32>
    %cst_167 = arith.constant dense<0.000000e+00> : vector<16xf32>
    %296 = vector.multi_reduction <add>, %295, %cst_167 [1] : vector<16x128xf32> to vector<16xf32>
    %297 = vector.shape_cast %296 : vector<16xf32> to vector<16x1xf32>
    %cst_168 = arith.constant 1.280000e+02 : f32
    %298 = vector.broadcast %cst_168 : f32 to vector<16x1xf32>
    %299 = arith.divf %297, %298 : vector<16x1xf32>
    %cst_169 = arith.constant 9.99999974E-6 : f32
    %300 = vector.broadcast %cst_169 : f32 to vector<16x1xf32>
    %301 = arith.addf %299, %300 : vector<16x1xf32>
    %302 = math.rsqrt %301 : vector<16x1xf32>
    %303 = vector.broadcast %302 : vector<16x1xf32> to vector<16x128xf32>
    %304 = arith.mulf %294, %303 : vector<16x128xf32>
    %305 = vector.broadcast %286 : vector<1x128xf32> to vector<16x128xf32>
    %306 = arith.mulf %304, %305 : vector<16x128xf32>
    %307 = vector.broadcast %288 : vector<1x128xf32> to vector<16x128xf32>
    %308 = arith.addf %306, %307 : vector<16x128xf32>
    %c1_170 = arith.constant 1 : index
    %c0_171 = arith.constant 0 : index
    %c0_172 = arith.constant 0 : index
    %309 = vector.load %arg13[%c1_170, %c0_171, %c0_172] : memref<2x128x256xf32, #tpu.memory_space<vmem>>, vector<1x128x256xf32>
    %310 = vector.shape_cast %309 : vector<1x128x256xf32> to vector<128x256xf32>
    %cst_173 = arith.constant dense<0.000000e+00> : vector<16x256xf32>
    %311 = tpu.matmul %308, %310, %cst_173 {dimension_numbers = #tpu.dot_dimension_numbers<[1], [0], [0], [1], [0, 0, 1, 1], [], []>} : vector<16x128xf32>, vector<128x256xf32>, vector<16x256xf32> -> vector<16x256xf32>
    %c1_174 = arith.constant 1 : index
    %c0_175 = arith.constant 0 : index
    %c0_176 = arith.constant 0 : index
    %312 = vector.load %arg14[%c1_174, %c0_175, %c0_176] : memref<2x1x256xf32, #tpu.memory_space<vmem>>, vector<1x1x256xf32>
    %313 = vector.shape_cast %312 : vector<1x1x256xf32> to vector<1x256xf32>
    %314 = vector.broadcast %313 : vector<1x256xf32> to vector<16x256xf32>
    %315 = arith.addf %311, %314 : vector<16x256xf32>
    %cst_177 = arith.constant 0.000000e+00 : f32
    %316 = vector.broadcast %cst_177 : f32 to vector<16x256xf32>
    %317 = arith.maximumf %315, %316 : vector<16x256xf32>
    %c1_178 = arith.constant 1 : index
    %c0_179 = arith.constant 0 : index
    %c0_180 = arith.constant 0 : index
    %318 = vector.load %arg15[%c1_178, %c0_179, %c0_180] : memref<2x256x128xf32, #tpu.memory_space<vmem>>, vector<1x256x128xf32>
    %319 = vector.shape_cast %318 : vector<1x256x128xf32> to vector<256x128xf32>
    %cst_181 = arith.constant dense<0.000000e+00> : vector<16x128xf32>
    %320 = tpu.matmul %317, %319, %cst_181 {dimension_numbers = #tpu.dot_dimension_numbers<[1], [0], [0], [1], [0, 0, 1, 1], [], []>} : vector<16x256xf32>, vector<256x128xf32>, vector<16x128xf32> -> vector<16x128xf32>
    %c1_182 = arith.constant 1 : index
    %c0_183 = arith.constant 0 : index
    %c0_184 = arith.constant 0 : index
    %321 = vector.load %arg16[%c1_182, %c0_183, %c0_184] : memref<2x1x128xf32, #tpu.memory_space<vmem>>, vector<1x1x128xf32>
    %322 = vector.shape_cast %321 : vector<1x1x128xf32> to vector<1x128xf32>
    %323 = vector.broadcast %322 : vector<1x128xf32> to vector<16x128xf32>
    %324 = arith.addf %320, %323 : vector<16x128xf32>
    %325 = arith.addf %308, %324 : vector<16x128xf32>
    %c1_185 = arith.constant 1 : index
    %c0_186 = arith.constant 0 : index
    %c0_187 = arith.constant 0 : index
    %326 = vector.load %arg17[%c1_185, %c0_186, %c0_187] : memref<2x1x128xf32, #tpu.memory_space<vmem>>, vector<1x1x128xf32>
    %327 = vector.shape_cast %326 : vector<1x1x128xf32> to vector<1x128xf32>
    %c1_188 = arith.constant 1 : index
    %c0_189 = arith.constant 0 : index
    %c0_190 = arith.constant 0 : index
    %328 = vector.load %arg18[%c1_188, %c0_189, %c0_190] : memref<2x1x128xf32, #tpu.memory_space<vmem>>, vector<1x1x128xf32>
    %329 = vector.shape_cast %328 : vector<1x1x128xf32> to vector<1x128xf32>
    %cst_191 = arith.constant dense<0.000000e+00> : vector<16xf32>
    %330 = vector.multi_reduction <add>, %325, %cst_191 [1] : vector<16x128xf32> to vector<16xf32>
    %331 = vector.shape_cast %330 : vector<16xf32> to vector<16x1xf32>
    %cst_192 = arith.constant 1.280000e+02 : f32
    %332 = vector.broadcast %cst_192 : f32 to vector<16x1xf32>
    %333 = arith.divf %331, %332 : vector<16x1xf32>
    %334 = vector.broadcast %333 : vector<16x1xf32> to vector<16x128xf32>
    %335 = arith.subf %325, %334 : vector<16x128xf32>
    %336 = arith.mulf %335, %335 : vector<16x128xf32>
    %cst_193 = arith.constant dense<0.000000e+00> : vector<16xf32>
    %337 = vector.multi_reduction <add>, %336, %cst_193 [1] : vector<16x128xf32> to vector<16xf32>
    %338 = vector.shape_cast %337 : vector<16xf32> to vector<16x1xf32>
    %cst_194 = arith.constant 1.280000e+02 : f32
    %339 = vector.broadcast %cst_194 : f32 to vector<16x1xf32>
    %340 = arith.divf %338, %339 : vector<16x1xf32>
    %cst_195 = arith.constant 9.99999974E-6 : f32
    %341 = vector.broadcast %cst_195 : f32 to vector<16x1xf32>
    %342 = arith.addf %340, %341 : vector<16x1xf32>
    %343 = math.rsqrt %342 : vector<16x1xf32>
    %344 = vector.broadcast %343 : vector<16x1xf32> to vector<16x128xf32>
    %345 = arith.mulf %335, %344 : vector<16x128xf32>
    %346 = vector.broadcast %327 : vector<1x128xf32> to vector<16x128xf32>
    %347 = arith.mulf %345, %346 : vector<16x128xf32>
    %348 = vector.broadcast %329 : vector<1x128xf32> to vector<16x128xf32>
    %349 = arith.addf %347, %348 : vector<16x128xf32>
    %c0_196 = arith.constant 0 : index
    %c0_197 = arith.constant 0 : index
    %c0_198 = arith.constant 0 : index
    %350 = vector.load %arg19[%c0_196, %c0_197, %c0_198] : memref<1x16x128xf32, #tpu.memory_space<vmem>>, vector<1x16x128xf32>
    %351 = vector.shape_cast %350 : vector<1x16x128xf32> to vector<16x128xf32>
    %352 = vector.shape_cast %349 : vector<16x128xf32> to vector<1x16x128xf32>
    tpu.vector_store %arg19[%c0_196, %c0_197, %c0_198], %352 {strides = array<i32>} : memref<1x16x128xf32, #tpu.memory_space<vmem>>, vector<1x16x128xf32>,
    return
  }
  func.func @transform_0(%arg0: i32) -> (i32, i32, i32) {
    %c0_i32 = arith.constant 0 : i32
    %c0_i32_0 = arith.constant 0 : i32
    %c0_i32_1 = arith.constant 0 : i32
    return %arg0, %c0_i32, %c0_i32_0 : i32, i32, i32
  }
  func.func @transform_1(%arg0: i32) -> (i32, i32, i32) {
    %c0_i32 = arith.constant 0 : i32
    %c0_i32_0 = arith.constant 0 : i32
    %c0_i32_1 = arith.constant 0 : i32
    return %arg0, %c0_i32, %c0_i32_0 : i32, i32, i32
  }
  func.func @transform_2(%arg0: i32) -> (i32, i32, i32) {
    %c0_i32 = arith.constant 0 : i32
    %c0_i32_0 = arith.constant 0 : i32
    %c0_i32_1 = arith.constant 0 : i32
    %c0_i32_2 = arith.constant 0 : i32
    return %c0_i32, %c0_i32_0, %c0_i32_1 : i32, i32, i32
  }
  func.func @transform_3(%arg0: i32) -> (i32, i32, i32) {
    %c0_i32 = arith.constant 0 : i32
    %c0_i32_0 = arith.constant 0 : i32
    %c0_i32_1 = arith.constant 0 : i32
    %c0_i32_2 = arith.constant 0 : i32
    return %c0_i32, %c0_i32_0, %c0_i32_1 : i32, i32, i32
  }
  func.func @transform_4(%arg0: i32) -> (i32, i32, i32) {
    %c0_i32 = arith.constant 0 : i32
    %c0_i32_0 = arith.constant 0 : i32
    %c0_i32_1 = arith.constant 0 : i32
    %c0_i32_2 = arith.constant 0 : i32
    return %c0_i32, %c0_i32_0, %c0_i32_1 : i32, i32, i32
  }
  func.func @transform_5(%arg0: i32) -> (i32, i32, i32) {
    %c0_i32 = arith.constant 0 : i32
    %c0_i32_0 = arith.constant 0 : i32
    %c0_i32_1 = arith.constant 0 : i32
    %c0_i32_2 = arith.constant 0 : i32
    return %c0_i32, %c0_i32_0, %c0_i32_1 : i32, i32, i32
  }
  func.func @transform_6(%arg0: i32) -> (i32, i32, i32) {
    %c0_i32 = arith.constant 0 : i32
    %c0_i32_0 = arith.constant 0 : i32
    %c0_i32_1 = arith.constant 0 : i32
    %c0_i32_2 = arith.constant 0 : i32
    return %c0_i32, %c0_i32_0, %c0_i32_1 : i32, i32, i32
  }
  func.func @transform_7(%arg0: i32) -> (i32, i32, i32) {
    %c0_i32 = arith.constant 0 : i32
    %c0_i32_0 = arith.constant 0 : i32
    %c0_i32_1 = arith.constant 0 : i32
    %c0_i32_2 = arith.constant 0 : i32
    return %c0_i32, %c0_i32_0, %c0_i32_1 : i32, i32, i32
  }
  func.func @transform_8(%arg0: i32) -> (i32, i32, i32) {
    %c0_i32 = arith.constant 0 : i32
    %c0_i32_0 = arith.constant 0 : i32
    %c0_i32_1 = arith.constant 0 : i32
    %c0_i32_2 = arith.constant 0 : i32
    return %c0_i32, %c0_i32_0, %c0_i32_1 : i32, i32, i32
  }
  func.func @transform_9(%arg0: i32) -> (i32, i32, i32) {
    %c0_i32 = arith.constant 0 : i32
    %c0_i32_0 = arith.constant 0 : i32
    %c0_i32_1 = arith.constant 0 : i32
    %c0_i32_2 = arith.constant 0 : i32
    return %c0_i32, %c0_i32_0, %c0_i32_1 : i32, i32, i32
  }
  func.func @transform_10(%arg0: i32) -> (i32, i32, i32) {
    %c0_i32 = arith.constant 0 : i32
    %c0_i32_0 = arith.constant 0 : i32
    %c0_i32_1 = arith.constant 0 : i32
    %c0_i32_2 = arith.constant 0 : i32
    return %c0_i32, %c0_i32_0, %c0_i32_1 : i32, i32, i32
  }
  func.func @transform_11(%arg0: i32) -> (i32, i32, i32) {
    %c0_i32 = arith.constant 0 : i32
    %c0_i32_0 = arith.constant 0 : i32
    %c0_i32_1 = arith.constant 0 : i32
    %c0_i32_2 = arith.constant 0 : i32
    return %c0_i32, %c0_i32_0, %c0_i32_1 : i32, i32, i32
  }
  func.func @transform_12(%arg0: i32) -> (i32, i32, i32) {
    %c0_i32 = arith.constant 0 : i32
    %c0_i32_0 = arith.constant 0 : i32
    %c0_i32_1 = arith.constant 0 : i32
    %c0_i32_2 = arith.constant 0 : i32
    return %c0_i32, %c0_i32_0, %c0_i32_1 : i32, i32, i32
  }
  func.func @transform_13(%arg0: i32) -> (i32, i32, i32) {
    %c0_i32 = arith.constant 0 : i32
    %c0_i32_0 = arith.constant 0 : i32
    %c0_i32_1 = arith.constant 0 : i32
    %c0_i32_2 = arith.constant 0 : i32
    return %c0_i32, %c0_i32_0, %c0_i32_1 : i32, i32, i32
  }
  func.func @transform_14(%arg0: i32) -> (i32, i32, i32) {
    %c0_i32 = arith.constant 0 : i32
    %c0_i32_0 = arith.constant 0 : i32
    %c0_i32_1 = arith.constant 0 : i32
    %c0_i32_2 = arith.constant 0 : i32
    return %c0_i32, %c0_i32_0, %c0_i32_1 : i32, i32, i32
  }
  func.func @transform_15(%arg0: i32) -> (i32, i32, i32) {
    %c0_i32 = arith.constant 0 : i32
    %c0_i32_0 = arith.constant 0 : i32
    %c0_i32_1 = arith.constant 0 : i32
    %c0_i32_2 = arith.constant 0 : i32
    return %c0_i32, %c0_i32_0, %c0_i32_1 : i32, i32, i32
  }
  func.func @transform_16(%arg0: i32) -> (i32, i32, i32) {
    %c0_i32 = arith.constant 0 : i32
    %c0_i32_0 = arith.constant 0 : i32
    %c0_i32_1 = arith.constant 0 : i32
    %c0_i32_2 = arith.constant 0 : i32
    return %c0_i32, %c0_i32_0, %c0_i32_1 : i32, i32, i32
  }
  func.func @transform_17(%arg0: i32) -> (i32, i32, i32) {
    %c0_i32 = arith.constant 0 : i32
    %c0_i32_0 = arith.constant 0 : i32
    %c0_i32_1 = arith.constant 0 : i32
    %c0_i32_2 = arith.constant 0 : i32
    return %c0_i32, %c0_i32_0, %c0_i32_1 : i32, i32, i32
  }
  func.func @transform_18(%arg0: i32) -> (i32, i32, i32) {
    %c0_i32 = arith.constant 0 : i32
    %c0_i32_0 = arith.constant 0 : i32
    %c0_i32_1 = arith.constant 0 : i32
    return %arg0, %c0_i32, %c0_i32_0 : i32, i32, i32
  }
}

</mosaic_0001>

<llo_original>
// kernel: tpu_custom_call.1
$region0: #{tpu_custom_call.1}
  #allocation0 [shape = 'u32[]', space=smem, size = 0x4, offset = 0x4, fixed_abs, tag = 'smem constant byte address 0x4 - core index']
  #allocation1 [shape = 'u32[72,128]{1,0:T(1,128)}', space=vmem, size = 0x9000, scoped, tag = 'internal scratch']
  %s0 = inlined_call_operand.hbm [shape: f32[2,16,128], index: 0, kind: input, shape index: {}]
  %s1 = inlined_call_operand.hbm [shape: f32[2,16,128], index: 1, kind: input, shape index: {}]
  %s2 = inlined_call_operand.hbm [shape: f32[2,128,128], index: 2, kind: input, shape index: {}]
  %s3 = inlined_call_operand.vmem [shape: f32[2,1,128], index: 3, kind: input, shape index: {}]
  %s4 = inlined_call_operand.hbm [shape: f32[2,128,128], index: 4, kind: input, shape index: {}]
  %s5 = inlined_call_operand.hbm [shape: f32[2,1,128], index: 5, kind: input, shape index: {}]
  %s6 = inlined_call_operand.hbm [shape: f32[2,128,128], index: 6, kind: input, shape index: {}]
  %s7 = inlined_call_operand.hbm [shape: f32[2,1,128], index: 7, kind: input, shape index: {}]
  %s8 = inlined_call_operand.hbm [shape: f32[2,128,128], index: 8, kind: input, shape index: {}]
  %s9 = inlined_call_operand.vmem [shape: f32[2,1,128], index: 9, kind: input, shape index: {}]
  %s10 = inlined_call_operand.hbm [shape: f32[2,1,128], index: 10, kind: input, shape index: {}]
  %s11 = inlined_call_operand.vmem [shape: f32[2,1,128], index: 11, kind: input, shape index: {}]
  %s12 = inlined_call_operand.hbm [shape: f32[2,128,256], index: 12, kind: input, shape index: {}]
  %s13 = inlined_call_operand.vmem [shape: f32[2,1,256], index: 13, kind: input, shape index: {}]
  %s14 = inlined_call_operand.hbm [shape: f32[2,256,128], index: 14, kind: input, shape index: {}]
  %s15 = inlined_call_operand.vmem [shape: f32[2,1,128], index: 15, kind: input, shape index: {}]
  %s16 = inlined_call_operand.vmem [shape: f32[2,1,128], index: 16, kind: input, shape index: {}]
  %s17 = inlined_call_operand.vmem [shape: f32[2,1,128], index: 17, kind: input, shape index: {}]
  %s18 = inlined_call_operand.hbm [shape: f32[2,16,128], index: 18, kind: output, shape index: {}]
  %s19 = sld [smem:[#allocation0]]
  $region149: #{tpu_custom_call.1} parent=0
    _
  %s21 = ssub.s32 1, %s19
  %s22 = scalar_select 0, %s21, %s19
  $region1: #{tpu_custom_call.1} parent=0
    #allocation2 [shape = 'u8[16384]{0}', space=vmem, size = 0x4000, scoped, tag = 'input window, operand 0']
    #allocation3 [shape = 's32[2]{0}', space=sflag, size = 0x8, scoped, tag = 'scoped memory for tpu_custom_call.1']
    #allocation4 [shape = 's32[2]{0}', space=sflag, size = 0x8, scoped, tag = 'scoped memory for tpu_custom_call.1']
    #allocation5 [shape = 'u8[16384]{0}', space=vmem, size = 0x4000, scoped, tag = 'input window, operand 1']
    #allocation6 [shape = 's32[2]{0}', space=sflag, size = 0x8, scoped, tag = 'scoped memory for tpu_custom_call.1']
    #allocation7 [shape = 'u8[131072]{0}', space=vmem, size = 0x20000, scoped, tag = 'input window, operand 2, single buffered']
    #allocation8 [shape = 'u8[131072]{0}', space=vmem, size = 0x20000, scoped, tag = 'input window, operand 4, single buffered']
    #allocation9 [shape = 's32[1]{0}', space=sflag, size = 0x4, scoped, tag = 'scoped memory for tpu_custom_call.1']
    #allocation10 [shape = 'u8[1024]{0}', space=vmem, size = 0x400, scoped, tag = 'input window, operand 5, single buffered']
    #allocation11 [shape = 'u8[131072]{0}', space=vmem, size = 0x20000, scoped, tag = 'input window, operand 6, single buffered']
    #allocation12 [shape = 's32[1]{0}', space=sflag, size = 0x4, scoped, tag = 'scoped memory for tpu_custom_call.1']
    #allocation13 [shape = 'u8[1024]{0}', space=vmem, size = 0x400, scoped, tag = 'input window, operand 7, single buffered']
    #allocation14 [shape = 'u8[131072]{0}', space=vmem, size = 0x20000, scoped, tag = 'input window, operand 8, single buffered']
    #allocation15 [shape = 's32[1]{0}', space=sflag, size = 0x4, scoped, tag = 'scoped memory for tpu_custom_call.1']
    #allocation16 [shape = 'u8[1024]{0}', space=vmem, size = 0x400, scoped, tag = 'input window, operand 10, single buffered']
    #allocation17 [shape = 'u8[262144]{0}', space=vmem, size = 0x40000, scoped, tag = 'input window, operand 12, single buffered']
    #allocation18 [shape = 's32[1]{0}', space=sflag, size = 0x4, scoped, tag = 'scoped memory for tpu_custom_call.1']
    #allocation19 [shape = 'u8[262144]{0}', space=vmem, size = 0x40000, scoped, tag = 'input window, operand 14, single buffered']
    #allocation20 [shape = 'u8[16384]{0}', space=vmem, size = 0x4000, scoped, tag = 'output window, operand 0']
    %23 = vsyncpa [#allocation3], 0
    %s24 = scalar_lea.sflag [#allocation3], 1
    %25 = vsyncpa %s24, 0
    %26 = vsyncpa [#allocation6], 0
    %s27 = scalar_lea.sflag [#allocation6], 1
    %28 = vsyncpa %s27, 0
    %29 = vsyncpa [#allocation9], 0
    %30 = vsyncpa [#allocation12], 0
    %31 = vsyncpa [#allocation15], 0
    %32 = vsyncpa [#allocation18], 0
    %33 = vsyncpa [#allocation4], 0
    %s34 = scalar_lea.sflag [#allocation4], 1
    %35 = vsyncpa %s34, 0
    loop: start=0, step=1, limit=4
    $region2: #{tpu_custom_call.1} parent=1 // loop_pre_header
      _
    $region3: #{tpu_custom_call.1} parent=1 // loop_header
      %s37 = sphi 0, %s41
      %p38 = scmp.ge.s32.totalorder %s37, 4
      %s47 = sphi 0, %s49
      %s50 = sphi 0, %s47
      %s51 = sphi 0, %s50
      %s67 = sphi 0, %s51
      %s73 = sphi 0, %s75
      %s76 = sphi 0, %s73
      %s77 = sphi 0, %s76
      %s93 = sphi 0, %s77
      %s97 = sphi 0, %s97
      %s99 = sphi 0, %s97
      %s100 = sphi 0, %s99
      %s114 = sphi 0, %s100
      %s118 = sphi 0, %s118
      %s120 = sphi 0, %s118
      %s121 = sphi 0, %s120
      %s135 = sphi 0, %s121
      %s139 = sphi 0, %s139
      %s141 = sphi 0, %s139
      %s142 = sphi 0, %s141
      %s156 = sphi 0, %s142
      %s160 = sphi 0, %s160
      %s162 = sphi 0, %s160
      %s163 = sphi 0, %s162
      %s177 = sphi 0, %s163
      %s181 = sphi 0, %s181
      %s183 = sphi 0, %s181
      %s184 = sphi 0, %s183
      %s198 = sphi 0, %s184
      %s202 = sphi 0, %s202
      %s204 = sphi 0, %s202
      %s205 = sphi 0, %s204
      %s219 = sphi 0, %s205
      %s223 = sphi 0, %s223
      %s225 = sphi 0, %s223
      %s226 = sphi 0, %s225
      %s240 = sphi 0, %s226
      %s244 = sphi 0, %s244
      %s246 = sphi 0, %s244
      %s247 = sphi 0, %s246
      %s261 = sphi 0, %s247
      %s265 = sphi 0, %s265
      %s267 = sphi 0, %s265
      %s268 = sphi 0, %s267
      %s282 = sphi 0, %s268
      %s286 = sphi 0, %s286
      %s288 = sphi 0, %s286
      %s289 = sphi 0, %s288
      %s303 = sphi 0, %s289
      %s307 = sphi 0, %s307
      %s309 = sphi 0, %s307
      %s310 = sphi 0, %s309
      %s324 = sphi 0, %s310
      %s328 = sphi 0, %s328
      %s330 = sphi 0, %s328
      %s331 = sphi 0, %s330
      %s345 = sphi 0, %s331
      %s349 = sphi 0, %s349
      %s351 = sphi 0, %s349
      %s352 = sphi 0, %s351
      %s366 = sphi 0, %s352
      %s370 = sphi 0, %s370
      %s372 = sphi 0, %s370
      %s373 = sphi 0, %s372
      %s387 = sphi 0, %s373
      %s391 = sphi 0, %s391
      %s393 = sphi 0, %s391
      %s394 = sphi 0, %s393
      %s408 = sphi 0, %s394
      %s412 = sphi 0, %s412
      %s414 = sphi 0, %s412
      %s415 = sphi 0, %s414
      %s429 = sphi 0, %s415
      %s435 = sphi 0, %s437
      %s438 = sphi 0, %s435
      %s439 = sphi 0, %s438
      %s455 = sphi 0, %s439
    $region4: #{tpu_custom_call.1} parent=1 // loop_header_branch
      %40 = sbr.rel (%p38) target = $region8
    $region5: #{tpu_custom_call.1} parent=1 // loop_body
      %s42 = ssub.s32 %s37, 1
      %s43 = ssub.s32 %s37, 2
      %s44 = sadd.s32 %s37, 1
      %s45 = ssub.s32 %s37, %s44
      %p46 = scmp.eq.s32.totalorder %s45, 0
      %s48 = sadd.s32 %s47, 1
      %s49 = scalar_select %p46, %s47, %s48
      %p52 = pneg %p46
      %p53 = scmp.eq.s32.totalorder %s37, 1
      %p54 = por %p52, %p53
      %p55 = scmp.ne.s32.totalorder %s47, %s50
      %p56 = scmp.eq.s32.totalorder %s37, 0
      %p57 = por %p55, %p56
      %p58 = scmp.ne.s32.totalorder %s47, %s50
      %p59 = scmp.eq.s32.totalorder %s42, 1
      %p60 = por %p58, %p59
      %p61 = scmp.ne.s32.totalorder %s50, %s51
      %p62 = scmp.eq.s32.totalorder %s42, 0
      %p63 = por %p61, %p62
      %p64 = scmp.ne.s32.totalorder %s50, %s51
      %p65 = scmp.eq.s32.totalorder %s43, 1
      %p66 = por %p64, %p65
      %p68 = scmp.ne.s32.totalorder %s51, %s67
      %p69 = scmp.eq.s32.totalorder %s43, 0
      %p70 = por %p68, %p69
      %s71 = ssub.s32 %s37, %s44
      %p72 = scmp.eq.s32.totalorder %s71, 0
      %s74 = sadd.s32 %s73, 1
      %s75 = scalar_select %p72, %s73, %s74
      %p78 = pneg %p72
      %p79 = scmp.eq.s32.totalorder %s37, 1
      %p80 = por %p78, %p79
      %p81 = scmp.ne.s32.totalorder %s73, %s76
      %p82 = scmp.eq.s32.totalorder %s37, 0
      %p83 = por %p81, %p82
      %p84 = scmp.ne.s32.totalorder %s73, %s76
      %p85 = scmp.eq.s32.totalorder %s42, 1
      %p86 = por %p84, %p85
      %p87 = scmp.ne.s32.totalorder %s76, %s77
      %p88 = scmp.eq.s32.totalorder %s42, 0
      %p89 = por %p87, %p88
      %p90 = scmp.ne.s32.totalorder %s76, %s77
      %p91 = scmp.eq.s32.totalorder %s43, 1
      %p92 = por %p90, %p91
      %p94 = scmp.ne.s32.totalorder %s77, %s93
      %p95 = scmp.eq.s32.totalorder %s43, 0
      %p96 = por %p94, %p95
      %s98 = sadd.s32 %s97, 1
      %p101 = scmp.eq.s32.totalorder %s37, 1
      %p102 = scmp.ne.s32.totalorder %s97, %s99
      %p103 = scmp.eq.s32.totalorder %s37, 0
      %p104 = por %p102, %p103
      %p105 = scmp.ne.s32.totalorder %s97, %s99
      %p106 = scmp.eq.s32.totalorder %s42, 1
      %p107 = por %p105, %p106
      %p108 = scmp.ne.s32.totalorder %s99, %s100
      %p109 = scmp.eq.s32.totalorder %s42, 0
      %p110 = por %p108, %p109
      %p111 = scmp.ne.s32.totalorder %s99, %s100
      %p112 = scmp.eq.s32.totalorder %s43, 1
      %p113 = por %p111, %p112
      %p115 = scmp.ne.s32.totalorder %s100, %s114
      %p116 = scmp.eq.s32.totalorder %s43, 0
      %p117 = por %p115, %p116
      %s119 = sadd.s32 %s118, 1
      %p122 = scmp.eq.s32.totalorder %s37, 1
      %p123 = scmp.ne.s32.totalorder %s118, %s120
      %p124 = scmp.eq.s32.totalorder %s37, 0
      %p125 = por %p123, %p124
      %p126 = scmp.ne.s32.totalorder %s118, %s120
      %p127 = scmp.eq.s32.totalorder %s42, 1
      %p128 = por %p126, %p127
      %p129 = scmp.ne.s32.totalorder %s120, %s121
      %p130 = scmp.eq.s32.totalorder %s42, 0
      %p131 = por %p129, %p130
      %p132 = scmp.ne.s32.totalorder %s120, %s121
      %p133 = scmp.eq.s32.totalorder %s43, 1
      %p134 = por %p132, %p133
      %p136 = scmp.ne.s32.totalorder %s121, %s135
      %p137 = scmp.eq.s32.totalorder %s43, 0
      %p138 = por %p136, %p137
      %s140 = sadd.s32 %s139, 1
      %p143 = scmp.eq.s32.totalorder %s37, 1
      %p144 = scmp.ne.s32.totalorder %s139, %s141
      %p145 = scmp.eq.s32.totalorder %s37, 0
      %p146 = por %p144, %p145
      %p147 = scmp.ne.s32.totalorder %s139, %s141
      %p148 = scmp.eq.s32.totalorder %s42, 1
      %p149 = por %p147, %p148
      %p150 = scmp.ne.s32.totalorder %s141, %s142
      %p151 = scmp.eq.s32.totalorder %s42, 0
      %p152 = por %p150, %p151
      %p153 = scmp.ne.s32.totalorder %s141, %s142
      %p154 = scmp.eq.s32.totalorder %s43, 1
      %p155 = por %p153, %p154
      %p157 = scmp.ne.s32.totalorder %s142, %s156
      %p158 = scmp.eq.s32.totalorder %s43, 0
      %p159 = por %p157, %p158
      %s161 = sadd.s32 %s160, 1
      %p164 = scmp.eq.s32.totalorder %s37, 1
      %p165 = scmp.ne.s32.totalorder %s160, %s162
      %p166 = scmp.eq.s32.totalorder %s37, 0
      %p167 = por %p165, %p166
      %p168 = scmp.ne.s32.totalorder %s160, %s162
      %p169 = scmp.eq.s32.totalorder %s42, 1
      %p170 = por %p168, %p169
      %p171 = scmp.ne.s32.totalorder %s162, %s163
      %p172 = scmp.eq.s32.totalorder %s42, 0
      %p173 = por %p171, %p172
      %p174 = scmp.ne.s32.totalorder %s162, %s163
      %p175 = scmp.eq.s32.totalorder %s43, 1
      %p176 = por %p174, %p175
      %p178 = scmp.ne.s32.totalorder %s163, %s177
      %p179 = scmp.eq.s32.totalorder %s43, 0
      %p180 = por %p178, %p179
      %s182 = sadd.s32 %s181, 1
      %p185 = scmp.eq.s32.totalorder %s37, 1
      %p186 = scmp.ne.s32.totalorder %s181, %s183
      %p187 = scmp.eq.s32.totalorder %s37, 0
      %p188 = por %p186, %p187
      %p189 = scmp.ne.s32.totalorder %s181, %s183
      %p190 = scmp.eq.s32.totalorder %s42, 1
      %p191 = por %p189, %p190
      %p192 = scmp.ne.s32.totalorder %s183, %s184
      %p193 = scmp.eq.s32.totalorder %s42, 0
      %p194 = por %p192, %p193
      %p195 = scmp.ne.s32.totalorder %s183, %s184
      %p196 = scmp.eq.s32.totalorder %s43, 1
      %p197 = por %p195, %p196
      %p199 = scmp.ne.s32.totalorder %s184, %s198
      %p200 = scmp.eq.s32.totalorder %s43, 0
      %p201 = por %p199, %p200
      %s203 = sadd.s32 %s202, 1
      %p206 = scmp.eq.s32.totalorder %s37, 1
      %p207 = scmp.ne.s32.totalorder %s202, %s204
      %p208 = scmp.eq.s32.totalorder %s37, 0
      %p209 = por %p207, %p208
      %p210 = scmp.ne.s32.totalorder %s202, %s204
      %p211 = scmp.eq.s32.totalorder %s42, 1
      %p212 = por %p210, %p211
      %p213 = scmp.ne.s32.totalorder %s204, %s205
      %p214 = scmp.eq.s32.totalorder %s42, 0
      %p215 = por %p213, %p214
      %p216 = scmp.ne.s32.totalorder %s204, %s205
      %p217 = scmp.eq.s32.totalorder %s43, 1
      %p218 = por %p216, %p217
      %p220 = scmp.ne.s32.totalorder %s205, %s219
      %p221 = scmp.eq.s32.totalorder %s43, 0
      %p222 = por %p220, %p221
      %s224 = sadd.s32 %s223, 1
      %p227 = scmp.eq.s32.totalorder %s37, 1
      %p228 = scmp.ne.s32.totalorder %s223, %s225
      %p229 = scmp.eq.s32.totalorder %s37, 0
      %p230 = por %p228, %p229
      %p231 = scmp.ne.s32.totalorder %s223, %s225
      %p232 = scmp.eq.s32.totalorder %s42, 1
      %p233 = por %p231, %p232
      %p234 = scmp.ne.s32.totalorder %s225, %s226
      %p235 = scmp.eq.s32.totalorder %s42, 0
      %p236 = por %p234, %p235
      %p237 = scmp.ne.s32.totalorder %s225, %s226
      %p238 = scmp.eq.s32.totalorder %s43, 1
      %p239 = por %p237, %p238
      %p241 = scmp.ne.s32.totalorder %s226, %s240
      %p242 = scmp.eq.s32.totalorder %s43, 0
      %p243 = por %p241, %p242
      %s245 = sadd.s32 %s244, 1
      %p248 = scmp.eq.s32.totalorder %s37, 1
      %p249 = scmp.ne.s32.totalorder %s244, %s246
      %p250 = scmp.eq.s32.totalorder %s37, 0
      %p251 = por %p249, %p250
      %p252 = scmp.ne.s32.totalorder %s244, %s246
      %p253 = scmp.eq.s32.totalorder %s42, 1
      %p254 = por %p252, %p253
      %p255 = scmp.ne.s32.totalorder %s246, %s247
      %p256 = scmp.eq.s32.totalorder %s42, 0
      %p257 = por %p255, %p256
      %p258 = scmp.ne.s32.totalorder %s246, %s247
      %p259 = scmp.eq.s32.totalorder %s43, 1
      %p260 = por %p258, %p259
      %p262 = scmp.ne.s32.totalorder %s247, %s261
      %p263 = scmp.eq.s32.totalorder %s43, 0
      %p264 = por %p262, %p263
      %s266 = sadd.s32 %s265, 1
      %p269 = scmp.eq.s32.totalorder %s37, 1
      %p270 = scmp.ne.s32.totalorder %s265, %s267
      %p271 = scmp.eq.s32.totalorder %s37, 0
      %p272 = por %p270, %p271
      %p273 = scmp.ne.s32.totalorder %s265, %s267
      %p274 = scmp.eq.s32.totalorder %s42, 1
      %p275 = por %p273, %p274
      %p276 = scmp.ne.s32.totalorder %s267, %s268
      %p277 = scmp.eq.s32.totalorder %s42, 0
      %p278 = por %p276, %p277
      %p279 = scmp.ne.s32.totalorder %s267, %s268
      %p280 = scmp.eq.s32.totalorder %s43, 1
      %p281 = por %p279, %p280
      %p283 = scmp.ne.s32.totalorder %s268, %s282
      %p284 = scmp.eq.s32.totalorder %s43, 0
      %p285 = por %p283, %p284
      %s287 = sadd.s32 %s286, 1
      %p290 = scmp.eq.s32.totalorder %s37, 1
      %p291 = scmp.ne.s32.totalorder %s286, %s288
      %p292 = scmp.eq.s32.totalorder %s37, 0
      %p293 = por %p291, %p292
      %p294 = scmp.ne.s32.totalorder %s286, %s288
      %p295 = scmp.eq.s32.totalorder %s42, 1
      %p296 = por %p294, %p295
      %p297 = scmp.ne.s32.totalorder %s288, %s289
      %p298 = scmp.eq.s32.totalorder %s42, 0
      %p299 = por %p297, %p298
      %p300 = scmp.ne.s32.totalorder %s288, %s289
      %p301 = scmp.eq.s32.totalorder %s43, 1
      %p302 = por %p300, %p301
      %p304 = scmp.ne.s32.totalorder %s289, %s303
      %p305 = scmp.eq.s32.totalorder %s43, 0
      %p306 = por %p304, %p305
      %s308 = sadd.s32 %s307, 1
      %p311 = scmp.eq.s32.totalorder %s37, 1
      %p312 = scmp.ne.s32.totalorder %s307, %s309
      %p313 = scmp.eq.s32.totalorder %s37, 0
      %p314 = por %p312, %p313
      %p315 = scmp.ne.s32.totalorder %s307, %s309
      %p316 = scmp.eq.s32.totalorder %s42, 1
      %p317 = por %p315, %p316
      %p318 = scmp.ne.s32.totalorder %s309, %s310
      %p319 = scmp.eq.s32.totalorder %s42, 0
      %p320 = por %p318, %p319
      %p321 = scmp.ne.s32.totalorder %s309, %s310
      %p322 = scmp.eq.s32.totalorder %s43, 1
      %p323 = por %p321, %p322
      %p325 = scmp.ne.s32.totalorder %s310, %s324
      %p326 = scmp.eq.s32.totalorder %s43, 0
      %p327 = por %p325, %p326
      %s329 = sadd.s32 %s328, 1
      %p332 = scmp.eq.s32.totalorder %s37, 1
      %p333 = scmp.ne.s32.totalorder %s328, %s330
      %p334 = scmp.eq.s32.totalorder %s37, 0
      %p335 = por %p333, %p334
      %p336 = scmp.ne.s32.totalorder %s328, %s330
      %p337 = scmp.eq.s32.totalorder %s42, 1
      %p338 = por %p336, %p337
      %p339 = scmp.ne.s32.totalorder %s330, %s331
      %p340 = scmp.eq.s32.totalorder %s42, 0
      %p341 = por %p339, %p340
      %p342 = scmp.ne.s32.totalorder %s330, %s331
      %p343 = scmp.eq.s32.totalorder %s43, 1
      %p344 = por %p342, %p343
      %p346 = scmp.ne.s32.totalorder %s331, %s345
      %p347 = scmp.eq.s32.totalorder %s43, 0
      %p348 = por %p346, %p347
      %s350 = sadd.s32 %s349, 1
      %p353 = scmp.eq.s32.totalorder %s37, 1
      %p354 = scmp.ne.s32.totalorder %s349, %s351
      %p355 = scmp.eq.s32.totalorder %s37, 0
      %p356 = por %p354, %p355
      %p357 = scmp.ne.s32.totalorder %s349, %s351
      %p358 = scmp.eq.s32.totalorder %s42, 1
      %p359 = por %p357, %p358
      %p360 = scmp.ne.s32.totalorder %s351, %s352
      %p361 = scmp.eq.s32.totalorder %s42, 0
      %p362 = por %p360, %p361
      %p363 = scmp.ne.s32.totalorder %s351, %s352
      %p364 = scmp.eq.s32.totalorder %s43, 1
      %p365 = por %p363, %p364
      %p367 = scmp.ne.s32.totalorder %s352, %s366
      %p368 = scmp.eq.s32.totalorder %s43, 0
      %p369 = por %p367, %p368
      %s371 = sadd.s32 %s370, 1
      %p374 = scmp.eq.s32.totalorder %s37, 1
      %p375 = scmp.ne.s32.totalorder %s370, %s372
      %p376 = scmp.eq.s32.totalorder %s37, 0
      %p377 = por %p375, %p376
      %p378 = scmp.ne.s32.totalorder %s370, %s372
      %p379 = scmp.eq.s32.totalorder %s42, 1
      %p380 = por %p378, %p379
      %p381 = scmp.ne.s32.totalorder %s372, %s373
      %p382 = scmp.eq.s32.totalorder %s42, 0
      %p383 = por %p381, %p382
      %p384 = scmp.ne.s32.totalorder %s372, %s373
      %p385 = scmp.eq.s32.totalorder %s43, 1
      %p386 = por %p384, %p385
      %p388 = scmp.ne.s32.totalorder %s373, %s387
      %p389 = scmp.eq.s32.totalorder %s43, 0
      %p390 = por %p388, %p389
      %s392 = sadd.s32 %s391, 1
      %p395 = scmp.eq.s32.totalorder %s37, 1
      %p396 = scmp.ne.s32.totalorder %s391, %s393
      %p397 = scmp.eq.s32.totalorder %s37, 0
      %p398 = por %p396, %p397
      %p399 = scmp.ne.s32.totalorder %s391, %s393
      %p400 = scmp.eq.s32.totalorder %s42, 1
      %p401 = por %p399, %p400
      %p402 = scmp.ne.s32.totalorder %s393, %s394
      %p403 = scmp.eq.s32.totalorder %s42, 0
      %p404 = por %p402, %p403
      %p405 = scmp.ne.s32.totalorder %s393, %s394
      %p406 = scmp.eq.s32.totalorder %s43, 1
      %p407 = por %p405, %p406
      %p409 = scmp.ne.s32.totalorder %s394, %s408
      %p410 = scmp.eq.s32.totalorder %s43, 0
      %p411 = por %p409, %p410
      %s413 = sadd.s32 %s412, 1
      %p416 = scmp.eq.s32.totalorder %s37, 1
      %p417 = scmp.ne.s32.totalorder %s412, %s414
      %p418 = scmp.eq.s32.totalorder %s37, 0
      %p419 = por %p417, %p418
      %p420 = scmp.ne.s32.totalorder %s412, %s414
      %p421 = scmp.eq.s32.totalorder %s42, 1
      %p422 = por %p420, %p421
      %p423 = scmp.ne.s32.totalorder %s414, %s415
      %p424 = scmp.eq.s32.totalorder %s42, 0
      %p425 = por %p423, %p424
      %p426 = scmp.ne.s32.totalorder %s414, %s415
      %p427 = scmp.eq.s32.totalorder %s43, 1
      %p428 = por %p426, %p427
      %p430 = scmp.ne.s32.totalorder %s415, %s429
      %p431 = scmp.eq.s32.totalorder %s43, 0
      %p432 = por %p430, %p431
      %s433 = ssub.s32 %s37, %s44
      %p434 = scmp.eq.s32.totalorder %s433, 0
      %s436 = sadd.s32 %s435, 1
      %s437 = scalar_select %p434, %s435, %s436
      %p440 = pneg %p434
      %p441 = scmp.eq.s32.totalorder %s37, 1
      %p442 = por %p440, %p441
      %p443 = scmp.ne.s32.totalorder %s435, %s438
      %p444 = scmp.eq.s32.totalorder %s37, 0
      %p445 = por %p443, %p444
      %p446 = scmp.ne.s32.totalorder %s435, %s438
      %p447 = scmp.eq.s32.totalorder %s42, 1
      %p448 = por %p446, %p447
      %p449 = scmp.ne.s32.totalorder %s438, %s439
      %p450 = scmp.eq.s32.totalorder %s42, 0
      %p451 = por %p449, %p450
      %p452 = scmp.ne.s32.totalorder %s438, %s439
      %p453 = scmp.eq.s32.totalorder %s43, 1
      %p454 = por %p452, %p453
      %p456 = scmp.ne.s32.totalorder %s439, %s455
      %p457 = scmp.eq.s32.totalorder %s43, 0
      %p458 = por %p456, %p457
      %p459 = scmp.le.s32.totalorder 1, %s37
      %p460 = scmp.lt.s32.totalorder %s37, 3
      %p461 = pnand %p459, %p460
      %p462 = pneg %p461
      // Predicated region
      $region9: #{tpu_custom_call.1} parent=5 // pred_check
        _
      $region10: #{tpu_custom_call.1} parent=5 // pred_check_branch
        %464 = sbr.rel (%p461) target = $region12
      $region11: #{tpu_custom_call.1} parent=5 // pred_region
        %s465 = ssub.s32 %s37, 1
        // Predicated region
        $region13: #{tpu_custom_call.1} parent=11 // pred_check
          %p466 = pneg %p110
        $region14: #{tpu_custom_call.1} parent=11 // pred_check_branch
          %468 = sbr.rel (%p466) target = $region16
        $region15: #{tpu_custom_call.1} parent=11 // pred_region
          %470 = vsyncadd [#allocation6], 0
          %s471 = sshll.u32 %s2, 4
          %s472 = int_to_ptr.hbm [resolvable:$true] %s471
          %s473 = sshll.u32 [#allocation7], 4
          %s474 = int_to_ptr.vmem [resolvable:$true] %s473
          %479 = dma.hbm_to_vmem [thread:$0]  %s472, 4096, %s474, [#allocation6], 128, 128, 8
        $region16: #{tpu_custom_call.1} parent=11 // pred_fallthru
          _
        // Predicated region
        $region17: #{tpu_custom_call.1} parent=11 // pred_check
          %p480 = pneg %p131
        $region18: #{tpu_custom_call.1} parent=11 // pred_check_branch
          %482 = sbr.rel (%p480) target = $region20
        $region19: #{tpu_custom_call.1} parent=11 // pred_region
          _
        $region20: #{tpu_custom_call.1} parent=11 // pred_fallthru
          _
        // Predicated region
        $region21: #{tpu_custom_call.1} parent=11 // pred_check
          %p483 = pneg %p152
        $region22: #{tpu_custom_call.1} parent=11 // pred_check_branch
          %485 = sbr.rel (%p483) target = $region24
        $region23: #{tpu_custom_call.1} parent=11 // pred_region
          %487 = vsyncadd [#allocation9], 0
          %s488 = sshll.u32 %s4, 4
          %s489 = int_to_ptr.hbm [resolvable:$true] %s488
          %s490 = sshll.u32 [#allocation8], 4
          %s491 = int_to_ptr.vmem [resolvable:$true] %s490
          %496 = dma.hbm_to_vmem [thread:$0]  %s489, 4096, %s491, [#allocation9], 128, 128, 8
        $region24: #{tpu_custom_call.1} parent=11 // pred_fallthru
          _
        // Predicated region
        $region25: #{tpu_custom_call.1} parent=11 // pred_check
          %p497 = pneg %p173
        $region26: #{tpu_custom_call.1} parent=11 // pred_check_branch
          %499 = sbr.rel (%p497) target = $region28
        $region27: #{tpu_custom_call.1} parent=11 // pred_region
          %501 = vsyncadd [#allocation9], 0
          %s502 = sshll.u32 %s5, 4
          %s503 = int_to_ptr.hbm [resolvable:$true] %s502
          %s504 = sshll.u32 [#allocation10], 4
          %s505 = int_to_ptr.vmem [resolvable:$true] %s504
          %510 = dma.hbm_to_vmem [thread:$0]  %s503, 32, %s505, [#allocation9], 16, 16, 1
        $region28: #{tpu_custom_call.1} parent=11 // pred_fallthru
          _
        // Predicated region
        $region29: #{tpu_custom_call.1} parent=11 // pred_check
          %p511 = pneg %p194
        $region30: #{tpu_custom_call.1} parent=11 // pred_check_branch
          %513 = sbr.rel (%p511) target = $region32
        $region31: #{tpu_custom_call.1} parent=11 // pred_region
          %515 = vsyncadd [#allocation12], 0
          %s516 = sshll.u32 %s6, 4
          %s517 = int_to_ptr.hbm [resolvable:$true] %s516
          %s518 = sshll.u32 [#allocation11], 4
          %s519 = int_to_ptr.vmem [resolvable:$true] %s518
          %524 = dma.hbm_to_vmem [thread:$0]  %s517, 4096, %s519, [#allocation12], 128, 128, 8
        $region32: #{tpu_custom_call.1} parent=11 // pred_fallthru
          _
        // Predicated region
        $region33: #{tpu_custom_call.1} parent=11 // pred_check
          %p525 = pneg %p215
        $region34: #{tpu_custom_call.1} parent=11 // pred_check_branch
          %527 = sbr.rel (%p525) target = $region36
        $region35: #{tpu_custom_call.1} parent=11 // pred_region
          %529 = vsyncadd [#allocation12], 0
          %s530 = sshll.u32 %s7, 4
          %s531 = int_to_ptr.hbm [resolvable:$true] %s530
          %s532 = sshll.u32 [#allocation13], 4
          %s533 = int_to_ptr.vmem [resolvable:$true] %s532
          %538 = dma.hbm_to_vmem [thread:$0]  %s531, 32, %s533, [#allocation12], 16, 16, 1
        $region36: #{tpu_custom_call.1} parent=11 // pred_fallthru
          _
        // Predicated region
        $region37: #{tpu_custom_call.1} parent=11 // pred_check
          %p539 = pneg %p236
        $region38: #{tpu_custom_call.1} parent=11 // pred_check_branch
          %541 = sbr.rel (%p539) target = $region40
        $region39: #{tpu_custom_call.1} parent=11 // pred_region
          %543 = vsyncadd [#allocation15], 0
          %s544 = sshll.u32 %s8, 4
          %s545 = int_to_ptr.hbm [resolvable:$true] %s544
          %s546 = sshll.u32 [#allocation14], 4
          %s547 = int_to_ptr.vmem [resolvable:$true] %s546
          %552 = dma.hbm_to_vmem [thread:$0]  %s545, 4096, %s547, [#allocation15], 128, 128, 8
        $region40: #{tpu_custom_call.1} parent=11 // pred_fallthru
          _
        // Predicated region
        $region41: #{tpu_custom_call.1} parent=11 // pred_check
          %p553 = pneg %p257
        $region42: #{tpu_custom_call.1} parent=11 // pred_check_branch
          %555 = sbr.rel (%p553) target = $region44
        $region43: #{tpu_custom_call.1} parent=11 // pred_region
          _
        $region44: #{tpu_custom_call.1} parent=11 // pred_fallthru
          _
        // Predicated region
        $region45: #{tpu_custom_call.1} parent=11 // pred_check
          %p556 = pneg %p278
        $region46: #{tpu_custom_call.1} parent=11 // pred_check_branch
          %558 = sbr.rel (%p556) target = $region48
        $region47: #{tpu_custom_call.1} parent=11 // pred_region
          %560 = vsyncadd [#allocation15], 0
          %s561 = sshll.u32 %s10, 4
          %s562 = int_to_ptr.hbm [resolvable:$true] %s561
          %s563 = sshll.u32 [#allocation16], 4
          %s564 = int_to_ptr.vmem [resolvable:$true] %s563
          %569 = dma.hbm_to_vmem [thread:$0]  %s562, 32, %s564, [#allocation15], 16, 16, 1
        $region48: #{tpu_custom_call.1} parent=11 // pred_fallthru
          _
        // Predicated region
        $region49: #{tpu_custom_call.1} parent=11 // pred_check
          %p570 = pneg %p299
        $region50: #{tpu_custom_call.1} parent=11 // pred_check_branch
          %572 = sbr.rel (%p570) target = $region52
        $region51: #{tpu_custom_call.1} parent=11 // pred_region
          _
        $region52: #{tpu_custom_call.1} parent=11 // pred_fallthru
          _
        // Predicated region
        $region53: #{tpu_custom_call.1} parent=11 // pred_check
          %p573 = pneg %p320
        $region54: #{tpu_custom_call.1} parent=11 // pred_check_branch
          %575 = sbr.rel (%p573) target = $region56
        $region55: #{tpu_custom_call.1} parent=11 // pred_region
          %577 = vsyncadd [#allocation18], 0
          %s578 = sshll.u32 %s12, 4
          %s579 = int_to_ptr.hbm [resolvable:$true] %s578
          %s580 = sshll.u32 [#allocation17], 4
          %s581 = int_to_ptr.vmem [resolvable:$true] %s580
          %586 = dma.hbm_to_vmem [thread:$0]  %s579, 8192, %s581, [#allocation18], 256, 256, 16
        $region56: #{tpu_custom_call.1} parent=11 // pred_fallthru
          _
        // Predicated region
        $region57: #{tpu_custom_call.1} parent=11 // pred_check
          %p587 = pneg %p341
        $region58: #{tpu_custom_call.1} parent=11 // pred_check_branch
          %589 = sbr.rel (%p587) target = $region60
        $region59: #{tpu_custom_call.1} parent=11 // pred_region
          _
        $region60: #{tpu_custom_call.1} parent=11 // pred_fallthru
          _
        // Predicated region
        $region61: #{tpu_custom_call.1} parent=11 // pred_check
          %p590 = pneg %p362
        $region62: #{tpu_custom_call.1} parent=11 // pred_check_branch
          %592 = sbr.rel (%p590) target = $region64
        $region63: #{tpu_custom_call.1} parent=11 // pred_region
          %594 = vsyncadd [#allocation18], 0
          %s595 = sshll.u32 %s14, 4
          %s596 = int_to_ptr.hbm [resolvable:$true] %s595
          %s597 = sshll.u32 [#allocation19], 4
          %s598 = int_to_ptr.vmem [resolvable:$true] %s597
          %603 = dma.hbm_to_vmem [thread:$0]  %s596, 8192, %s598, [#allocation18], 128, 128, 8
        $region64: #{tpu_custom_call.1} parent=11 // pred_fallthru
          _
        // Predicated region
        $region65: #{tpu_custom_call.1} parent=11 // pred_check
          %p604 = pneg %p383
        $region66: #{tpu_custom_call.1} parent=11 // pred_check_branch
          %606 = sbr.rel (%p604) target = $region68
        $region67: #{tpu_custom_call.1} parent=11 // pred_region
          _
        $region68: #{tpu_custom_call.1} parent=11 // pred_fallthru
          _
        // Predicated region
        $region69: #{tpu_custom_call.1} parent=11 // pred_check
          %p607 = pneg %p404
        $region70: #{tpu_custom_call.1} parent=11 // pred_check_branch
          %609 = sbr.rel (%p607) target = $region72
        $region71: #{tpu_custom_call.1} parent=11 // pred_region
          _
        $region72: #{tpu_custom_call.1} parent=11 // pred_fallthru
          _
        // Predicated region
        $region73: #{tpu_custom_call.1} parent=11 // pred_check
          %p610 = pneg %p425
        $region74: #{tpu_custom_call.1} parent=11 // pred_check_branch
          %612 = sbr.rel (%p610) target = $region76
        $region75: #{tpu_custom_call.1} parent=11 // pred_region
          _
        $region76: #{tpu_custom_call.1} parent=11 // pred_fallthru
          _
      $region12: #{tpu_custom_call.1} parent=5 // pred_fallthru
        _
      %p613 = scmp.lt.s32.totalorder %s37, 2
      // Predicated region
      $region77: #{tpu_custom_call.1} parent=5 // pred_check
        %p614 = pneg %p613
      $region78: #{tpu_custom_call.1} parent=5 // pred_check_branch
        %616 = sbr.rel (%p614) target = $region80
      $region79: #{tpu_custom_call.1} parent=5 // pred_region
        // Predicated region
        $region81: #{tpu_custom_call.1} parent=79 // pred_check
          %p617 = pneg %p57
        $region82: #{tpu_custom_call.1} parent=79 // pred_check_branch
          %619 = sbr.rel (%p617) target = $region84
        $region83: #{tpu_custom_call.1} parent=79 // pred_region
          %s620 = sand.u32 %s47, 1
          %s621 = scalar_lea.sflag [#allocation3], %s620
          %s622 = sand.u32 %s47, 1
          %s623 = smul.addr %s622, 16
          %s624 = scalar_lea.vmem [#allocation2], %s623
          %626 = vsyncadd %s621, 0
          %s627 = smul.addr %s37, 2
          %s628 = smul.addr %s627, 8
          %s629 = scalar_lea.hbm %s0, %s628
          %s630 = sshll.u32 %s629, 4
          %s631 = int_to_ptr.hbm [resolvable:$true] %s630
          %s632 = sshll.u32 %s624, 4
          %s633 = int_to_ptr.vmem [resolvable:$true] %s632
          %638 = dma.hbm_to_vmem [thread:$0]  %s631, 256, %s633, %s621, 128, 128, 8
        $region84: #{tpu_custom_call.1} parent=79 // pred_fallthru
          _
        // Predicated region
        $region85: #{tpu_custom_call.1} parent=79 // pred_check
          %p639 = pneg %p83
        $region86: #{tpu_custom_call.1} parent=79 // pred_check_branch
          %641 = sbr.rel (%p639) target = $region88
        $region87: #{tpu_custom_call.1} parent=79 // pred_region
          %s642 = sand.u32 %s37, 1
          %s643 = scalar_lea.sflag [#allocation6], %s642
          %s644 = sand.u32 %s73, 1
          %s645 = smul.addr %s644, 16
          %s646 = scalar_lea.vmem [#allocation5], %s645
          %648 = vsyncadd %s643, 0
          %s649 = smul.addr %s37, 2
          %s650 = smul.addr %s649, 8
          %s651 = scalar_lea.hbm %s1, %s650
          %s652 = sshll.u32 %s651, 4
          %s653 = int_to_ptr.hbm [resolvable:$true] %s652
          %s654 = sshll.u32 %s646, 4
          %s655 = int_to_ptr.vmem [resolvable:$true] %s654
          %660 = dma.hbm_to_vmem [thread:$0]  %s653, 256, %s655, %s643, 128, 128, 8
        $region88: #{tpu_custom_call.1} parent=79 // pred_fallthru
          _
      $region80: #{tpu_custom_call.1} parent=5 // pred_fallthru
        _
      %p661 = scmp.le.s32.totalorder 1, %s37
      %p662 = scmp.lt.s32.totalorder %s37, 3
      %p663 = pnand %p661, %p662
      %p664 = pneg %p663
      // Predicated region
      $region89: #{tpu_custom_call.1} parent=5 // pred_check
        _
      $region90: #{tpu_custom_call.1} parent=5 // pred_check_branch
        %666 = sbr.rel (%p663) target = $region92
      $region91: #{tpu_custom_call.1} parent=5 // pred_region
        %s667 = ssub.s32 %s37, 1
        %s668 = sand.u32 %s50, 1
        %s669 = scalar_lea.sflag [#allocation3], %s668
        %s670 = sand.u32 %s50, 1
        %s671 = smul.addr %s670, 16
        %s672 = scalar_lea.vmem [#allocation2], %s671
        // Predicated region
        $region93: #{tpu_custom_call.1} parent=91 // pred_check
          %p673 = pneg %p63
        $region94: #{tpu_custom_call.1} parent=91 // pred_check_branch
          %675 = sbr.rel (%p673) target = $region96
        $region95: #{tpu_custom_call.1} parent=91 // pred_region
          %677 = dma.done %s669, 256
        $region96: #{tpu_custom_call.1} parent=91 // pred_fallthru
          _
        %s678 = sand.u32 %s42, 1
        %s679 = scalar_lea.sflag [#allocation6], %s678
        %s680 = sand.u32 %s76, 1
        %s681 = smul.addr %s680, 16
        %s682 = scalar_lea.vmem [#allocation5], %s681
        // Predicated region
        $region97: #{tpu_custom_call.1} parent=91 // pred_check
          %p683 = pneg %p89
        $region98: #{tpu_custom_call.1} parent=91 // pred_check_branch
          %685 = sbr.rel (%p683) target = $region100
        $region99: #{tpu_custom_call.1} parent=91 // pred_region
          %687 = dma.done %s679, 256
        $region100: #{tpu_custom_call.1} parent=91 // pred_fallthru
          _
        // Predicated region
        $region101: #{tpu_custom_call.1} parent=91 // pred_check
          %p688 = pneg %p110
        $region102: #{tpu_custom_call.1} parent=91 // pred_check_branch
          %690 = sbr.rel (%p688) target = $region104
        $region103: #{tpu_custom_call.1} parent=91 // pred_region
          %692 = dma.done [#allocation6], 4096
        $region104: #{tpu_custom_call.1} parent=91 // pred_fallthru
          _
        // Predicated region
        $region105: #{tpu_custom_call.1} parent=91 // pred_check
          %p693 = pneg %p152
        $region106: #{tpu_custom_call.1} parent=91 // pred_check_branch
          %695 = sbr.rel (%p693) target = $region108
        $region107: #{tpu_custom_call.1} parent=91 // pred_region
          %697 = dma.done [#allocation9], 4096
        $region108: #{tpu_custom_call.1} parent=91 // pred_fallthru
          _
        // Predicated region
        $region109: #{tpu_custom_call.1} parent=91 // pred_check
          %p698 = pneg %p173
        $region110: #{tpu_custom_call.1} parent=91 // pred_check_branch
          %700 = sbr.rel (%p698) target = $region112
        $region111: #{tpu_custom_call.1} parent=91 // pred_region
          %702 = dma.done [#allocation9], 32
        $region112: #{tpu_custom_call.1} parent=91 // pred_fallthru
          _
        // Predicated region
        $region113: #{tpu_custom_call.1} parent=91 // pred_check
          %p703 = pneg %p194
        $region114: #{tpu_custom_call.1} parent=91 // pred_check_branch
          %705 = sbr.rel (%p703) target = $region116
        $region115: #{tpu_custom_call.1} parent=91 // pred_region
          %707 = dma.done [#allocation12], 4096
        $region116: #{tpu_custom_call.1} parent=91 // pred_fallthru
          _
        // Predicated region
        $region117: #{tpu_custom_call.1} parent=91 // pred_check
          %p708 = pneg %p215
        $region118: #{tpu_custom_call.1} parent=91 // pred_check_branch
          %710 = sbr.rel (%p708) target = $region120
        $region119: #{tpu_custom_call.1} parent=91 // pred_region
          %712 = dma.done [#allocation12], 32
        $region120: #{tpu_custom_call.1} parent=91 // pred_fallthru
          _
        // Predicated region
        $region121: #{tpu_custom_call.1} parent=91 // pred_check
          %p713 = pneg %p236
        $region122: #{tpu_custom_call.1} parent=91 // pred_check_branch
          %715 = sbr.rel (%p713) target = $region124
        $region123: #{tpu_custom_call.1} parent=91 // pred_region
          %717 = dma.done [#allocation15], 4096
        $region124: #{tpu_custom_call.1} parent=91 // pred_fallthru
          _
        // Predicated region
        $region125: #{tpu_custom_call.1} parent=91 // pred_check
          %p718 = pneg %p278
        $region126: #{tpu_custom_call.1} parent=91 // pred_check_branch
          %720 = sbr.rel (%p718) target = $region128
        $region127: #{tpu_custom_call.1} parent=91 // pred_region
          %722 = dma.done [#allocation15], 32
        $region128: #{tpu_custom_call.1} parent=91 // pred_fallthru
          _
        // Predicated region
        $region129: #{tpu_custom_call.1} parent=91 // pred_check
          %p723 = pneg %p320
        $region130: #{tpu_custom_call.1} parent=91 // pred_check_branch
          %725 = sbr.rel (%p723) target = $region132
        $region131: #{tpu_custom_call.1} parent=91 // pred_region
          %727 = dma.done [#allocation18], 8192
        $region132: #{tpu_custom_call.1} parent=91 // pred_fallthru
          _
        // Predicated region
        $region133: #{tpu_custom_call.1} parent=91 // pred_check
          %p728 = pneg %p362
        $region134: #{tpu_custom_call.1} parent=91 // pred_check_branch
          %730 = sbr.rel (%p728) target = $region136
        $region135: #{tpu_custom_call.1} parent=91 // pred_region
          %732 = dma.done [#allocation18], 8192
        $region136: #{tpu_custom_call.1} parent=91 // pred_fallthru
          _
        %s733 = sand.u32 %s50, 1
        %s734 = scalar_lea.sflag [#allocation3], %s733
        %s735 = sand.u32 %s50, 1
        %s736 = smul.addr %s735, 16
        %s737 = scalar_lea.vmem [#allocation2], %s736
        %p738 = pneg %p63
        %p739 = pneg %p60
        %s740 = sand.u32 %s42, 1
        %s741 = scalar_lea.sflag [#allocation6], %s740
        %s742 = sand.u32 %s76, 1
        %s743 = smul.addr %s742, 16
        %s744 = scalar_lea.vmem [#allocation5], %s743
        %p745 = pneg %p89
        %p746 = pneg %p86
        %p747 = pneg %p110
        %p748 = pneg %p107
        %p749 = pneg %p131
        %p750 = pneg %p128
        %p751 = pneg %p152
        %p752 = pneg %p149
        %p753 = pneg %p173
        %p754 = pneg %p170
        %p755 = pneg %p194
        %p756 = pneg %p191
        %p757 = pneg %p215
        %p758 = pneg %p212
        %p759 = pneg %p236
        %p760 = pneg %p233
        %p761 = pneg %p257
        %p762 = pneg %p254
        %p763 = pneg %p278
        %p764 = pneg %p275
        %p765 = pneg %p299
        %p766 = pneg %p296
        %p767 = pneg %p320
        %p768 = pneg %p317
        %p769 = pneg %p341
        %p770 = pneg %p338
        %p771 = pneg %p362
        %p772 = pneg %p359
        %p773 = pneg %p383
        %p774 = pneg %p380
        %p775 = pneg %p404
        %p776 = pneg %p401
        %p777 = pneg %p425
        %p778 = pneg %p422
        %p779 = pneg %p451
        %p780 = pneg %p448
        %s781 = sand.u32 %s438, 1
        %s782 = scalar_lea.sflag [#allocation4], %s781
        %s783 = sand.u32 %s438, 1
        %s784 = smul.addr %s783, 16
        %s785 = scalar_lea.vmem [#allocation20], %s784
        %v786 = vld [vmem:[%s672] sm:$0xff]
        %v787 = vld [vmem:[%s672 + $0x8] sm:$0xff]
        %v788 = vld [vmem:[%s682] sm:$0xff]
        %v789 = vld [vmem:[%s682 + $0x8] sm:$0xff]
        %v790 = vadd.f32 %v786, %v788
        %v791 = vadd.f32 %v787, %v789
        %v792 = vld [vmem:[#allocation7] sm:$0xff]
        %v793 = vld [vmem:[#allocation7 + $0x8] sm:$0xff]
        %v794 = vld [vmem:[#allocation7 + $0x10] sm:$0xff]
        %v795 = vld [vmem:[#allocation7 + $0x18] sm:$0xff]
        %v796 = vld [vmem:[#allocation7 + $0x20] sm:$0xff]
        %v797 = vld [vmem:[#allocation7 + $0x28] sm:$0xff]
        %v798 = vld [vmem:[#allocation7 + $0x30] sm:$0xff]
        %v799 = vld [vmem:[#allocation7 + $0x38] sm:$0xff]
        %v800 = vld [vmem:[#allocation7 + $0x40] sm:$0xff]
        %v801 = vld [vmem:[#allocation7 + $0x48] sm:$0xff]
        %v802 = vld [vmem:[#allocation7 + $0x50] sm:$0xff]
        %v803 = vld [vmem:[#allocation7 + $0x58] sm:$0xff]
        %v804 = vld [vmem:[#allocation7 + $0x60] sm:$0xff]
        %v805 = vld [vmem:[#allocation7 + $0x68] sm:$0xff]
        %v806 = vld [vmem:[#allocation7 + $0x70] sm:$0xff]
        %v807 = vld [vmem:[#allocation7 + $0x78] sm:$0xff]
        %v808 = vld [vmem:[%s3] sm:$0x1]
        %v810 = vperm.slane %v808, 0
        %812 = vmatpush.msra.mxu0 %v807
        %813 = vmatpush.msra.mxu0 %v806
        %814 = vmatpush.msra.mxu0 %v805
        %815 = vmatpush.msra.mxu0 %v804
        %816 = vmatpush.msra.mxu0 %v803
        %817 = vmatpush.msra.mxu0 %v802
        %818 = vmatpush.msra.mxu0 %v801
        %819 = vmatpush.msra.mxu0 %v800
        %820 = vmatpush.msra.mxu0 %v799
        %821 = vmatpush.msra.mxu0 %v798
        %822 = vmatpush.msra.mxu0 %v797
        %823 = vmatpush.msra.mxu0 %v796
        %824 = vmatpush.msra.mxu0 %v795
        %825 = vmatpush.msra.mxu0 %v794
        %826 = vmatpush.msra.mxu0 %v793
        %827 = vmatpush.msra.mxu0 %v792
        %828 = vmatmul.f32.gmra.mxu0 %v790
        %v829 = vpop.f32.mrf.mxu0
        %v830 = vadd.f32 %v810, %v829
        %831 = vmatmul.f32.gmra.mxu0 %v791
        %v832 = vpop.f32.mrf.mxu0
        %v833 = vadd.f32 %v810, %v832
        %834 = vdwg.mxu0
        %v835 = vld [vmem:[#allocation8] sm:$0xff]
        %v836 = vld [vmem:[#allocation8 + $0x8] sm:$0xff]
        %v837 = vld [vmem:[#allocation8 + $0x10] sm:$0xff]
        %v838 = vld [vmem:[#allocation8 + $0x18] sm:$0xff]
        %v839 = vld [vmem:[#allocation8 + $0x20] sm:$0xff]
        %v840 = vld [vmem:[#allocation8 + $0x28] sm:$0xff]
        %v841 = vld [vmem:[#allocation8 + $0x30] sm:$0xff]
        %v842 = vld [vmem:[#allocation8 + $0x38] sm:$0xff]
        %v843 = vld [vmem:[#allocation8 + $0x40] sm:$0xff]
        %v844 = vld [vmem:[#allocation8 + $0x48] sm:$0xff]
        %v845 = vld [vmem:[#allocation8 + $0x50] sm:$0xff]
        %v846 = vld [vmem:[#allocation8 + $0x58] sm:$0xff]
        %v847 = vld [vmem:[#allocation8 + $0x60] sm:$0xff]
        %v848 = vld [vmem:[#allocation8 + $0x68] sm:$0xff]
        %v849 = vld [vmem:[#allocation8 + $0x70] sm:$0xff]
        %v850 = vld [vmem:[#allocation8 + $0x78] sm:$0xff]
        %v851 = vld [vmem:[#allocation10] sm:$0x1]
        %v853 = vperm.slane %v851, 0
        %855 = vmatpush.msra.mxu0 %v850
        %856 = vmatpush.msra.mxu0 %v849
        %857 = vmatpush.msra.mxu0 %v848
        %858 = vmatpush.msra.mxu0 %v847
        %859 = vmatpush.msra.mxu0 %v846
        %860 = vmatpush.msra.mxu0 %v845
        %861 = vmatpush.msra.mxu0 %v844
        %862 = vmatpush.msra.mxu0 %v843
        %863 = vmatpush.msra.mxu0 %v842
        %864 = vmatpush.msra.mxu0 %v841
        %865 = vmatpush.msra.mxu0 %v840
        %866 = vmatpush.msra.mxu0 %v839
        %867 = vmatpush.msra.mxu0 %v838
        %868 = vmatpush.msra.mxu0 %v837
        %869 = vmatpush.msra.mxu0 %v836
        %870 = vmatpush.msra.mxu0 %v835
        %871 = vmatmul.f32.gmra.mxu0 %v790
        %v872 = vpop.f32.mrf.mxu0
        %v873 = vadd.f32 %v853, %v872
        %874 = vmatmul.f32.gmra.mxu0 %v791
        %v875 = vpop.f32.mrf.mxu0
        %v876 = vadd.f32 %v853, %v875
        %877 = vdwg.mxu0
        %v878 = vld [vmem:[#allocation11] sm:$0xff]
        %v879 = vld [vmem:[#allocation11 + $0x8] sm:$0xff]
        %v880 = vld [vmem:[#allocation11 + $0x10] sm:$0xff]
        %v881 = vld [vmem:[#allocation11 + $0x18] sm:$0xff]
        %v882 = vld [vmem:[#allocation11 + $0x20] sm:$0xff]
        %v883 = vld [vmem:[#allocation11 + $0x28] sm:$0xff]
        %v884 = vld [vmem:[#allocation11 + $0x30] sm:$0xff]
        %v885 = vld [vmem:[#allocation11 + $0x38] sm:$0xff]
        %v886 = vld [vmem:[#allocation11 + $0x40] sm:$0xff]
        %v887 = vld [vmem:[#allocation11 + $0x48] sm:$0xff]
        %v888 = vld [vmem:[#allocation11 + $0x50] sm:$0xff]
        %v889 = vld [vmem:[#allocation11 + $0x58] sm:$0xff]
        %v890 = vld [vmem:[#allocation11 + $0x60] sm:$0xff]
        %v891 = vld [vmem:[#allocation11 + $0x68] sm:$0xff]
        %v892 = vld [vmem:[#allocation11 + $0x70] sm:$0xff]
        %v893 = vld [vmem:[#allocation11 + $0x78] sm:$0xff]
        %v894 = vld [vmem:[#allocation13] sm:$0x1]
        %v896 = vperm.slane %v894, 0
        %898 = vmatpush.msra.mxu0 %v893
        %899 = vmatpush.msra.mxu0 %v892
        %900 = vmatpush.msra.mxu0 %v891
        %901 = vmatpush.msra.mxu0 %v890
        %902 = vmatpush.msra.mxu0 %v889
        %903 = vmatpush.msra.mxu0 %v888
        %904 = vmatpush.msra.mxu0 %v887
        %905 = vmatpush.msra.mxu0 %v886
        %906 = vmatpush.msra.mxu0 %v885
        %907 = vmatpush.msra.mxu0 %v884
        %908 = vmatpush.msra.mxu0 %v883
        %909 = vmatpush.msra.mxu0 %v882
        %910 = vmatpush.msra.mxu0 %v881
        %911 = vmatpush.msra.mxu0 %v880
        %912 = vmatpush.msra.mxu0 %v879
        %913 = vmatpush.msra.mxu0 %v878
        %914 = vmatmul.f32.gmra.mxu0 %v786
        %v915 = vpop.f32.mrf.mxu0
        %v916 = vadd.f32 %v896, %v915
        %917 = vmatmul.f32.gmra.mxu0 %v787
        %v918 = vpop.f32.mrf.mxu0
        %v919 = vadd.f32 %v896, %v918
        %920 = vdwg.mxu0
        %v921 = vmul.f32 %v830, 0.17677669
        %v922 = vmul.f32 %v833, 0.17677669
        %vm923 = vcmask 261120
        %v925 = vsel %vm923, %v921, 0
        %v928 = vsel %vm923, %v922, 0
        %v931 = vsel %vm923, %v873, 0
        %v934 = vsel %vm923, %v876, 0
        %936 = vmatpush.xpose.msra.mxu0 0.0
        %937 = vmatpush.xpose.msra.mxu0 0.0
        %938 = vmatpush.xpose.msra.mxu0 0.0
        %939 = vmatpush.xpose.msra.mxu0 0.0
        %940 = vmatpush.xpose.msra.mxu0 0.0
        %941 = vmatpush.xpose.msra.mxu0 0.0
        %942 = vmatpush.xpose.msra.mxu0 0.0
        %943 = vmatpush.xpose.msra.mxu0 0.0
        %944 = vmatpush.xpose.msra.mxu0 0.0
        %945 = vmatpush.xpose.msra.mxu0 0.0
        %946 = vmatpush.xpose.msra.mxu0 0.0
        %947 = vmatpush.xpose.msra.mxu0 0.0
        %948 = vmatpush.xpose.msra.mxu0 0.0
        %949 = vmatpush.xpose.msra.mxu0 0.0
        %950 = vmatpush.xpose.msra.mxu0 %v934
        %951 = vmatpush.xpose.msra.mxu0 %v931
        %952 = vmatmul.f32.gmra.mxu0 %v925
        %v953 = vpop.f32.mrf.mxu0
        %v954 = vadd.f32 0.0, %v953
        %955 = vmatmul.f32.gmra.mxu0 %v928
        %v956 = vpop.f32.mrf.mxu0
        %v957 = vadd.f32 0.0, %v956
        %958 = vdwg.mxu0
        %vm959 = vcmask 130048
        %v960 = vsel %vm959, %v954, -inf
        %961 = vmax.xlane.f32.xlu0 %v960
        %v962 = vpop.xlane.xlu0 %961
        %v963 = vsel %vm959, %v957, -inf
        %964 = vmax.xlane.f32.xlu0 %v963
        %v965 = vpop.xlane.xlu0 %964
        %v966 = vsub.f32 %v954, %v962
        %v967 = vsub.f32 %v957, %v965
        %v968 = vmul.f32 %v966, 1.442695
        %v969 = vpow.pop %v968
        %v970 = vmul.f32 %v967, 1.442695
        %v971 = vpow.pop %v970
        %v972 = vsel %vm959, %v969, 0.0
        %973 = vadd.xlane.f32.xlu0 %v972
        %v974 = vpop.xlane.xlu0 %973
        %v975 = vsel %vm959, %v971, 0.0
        %976 = vadd.xlane.f32.xlu0 %v975
        %v977 = vpop.xlane.xlu0 %976
        %v978 = vrcp.pop %v974
        %v979 = vmul.f32 %v974, %v978
        %v980 = vsub.f32 1.0, %v979
        %v981 = vmul.f32 %v978, %v980
        %v982 = vadd.f32 %v978, %v981
        %vm983 = vweird.f32 %v974
        %vm984 = vweird.f32 %v978
        %vm985 = vmor %vm983, %vm984
        %v986 = vsel %vm985, %v978, %v982
        %v987 = vand.u32 2147483647, %v974
        %vm988 = vcmp.eq.f32.partialorder %v987, 8.507059e+37
        %v989 = vand.u32 %v974, 2147483648
        %v990 = vor.u32 1.1754944e-38, %v989
        %v991 = vsel %vm988, %v990, %v986
        %v992 = vmul.f32 %v969, %v991
        %v993 = vrcp.pop %v977
        %v994 = vmul.f32 %v977, %v993
        %v995 = vsub.f32 1.0, %v994
        %v996 = vmul.f32 %v993, %v995
        %v997 = vadd.f32 %v993, %v996
        %vm998 = vweird.f32 %v977
        %vm999 = vweird.f32 %v993
        %vm1000 = vmor %vm998, %vm999
        %v1001 = vsel %vm1000, %v993, %v997
        %v1002 = vand.u32 2147483647, %v977
        %vm1003 = vcmp.eq.f32.partialorder %v1002, 8.507059e+37
        %v1004 = vand.u32 %v977, 2147483648
        %v1005 = vor.u32 1.1754944e-38, %v1004
        %v1006 = vsel %vm1003, %v1005, %v1001
        %v1007 = vmul.f32 %v971, %v1006
        %v1009 = vsel %vm959, %v992, 0
        %v1012 = vsel %vm959, %v1007, 0
        %1014 = vmatpush.msra.mxu0 0.0
        %1015 = vmatpush.msra.mxu0 0.0
        %1016 = vmatpush.msra.mxu0 0.0
        %1017 = vmatpush.msra.mxu0 0.0
        %1018 = vmatpush.msra.mxu0 0.0
        %1019 = vmatpush.msra.mxu0 0.0
        %1020 = vmatpush.msra.mxu0 0.0
        %1021 = vmatpush.msra.mxu0 0.0
        %1022 = vmatpush.msra.mxu0 0.0
        %1023 = vmatpush.msra.mxu0 0.0
        %1024 = vmatpush.msra.mxu0 0.0
        %1025 = vmatpush.msra.mxu0 0.0
        %1026 = vmatpush.msra.mxu0 0.0
        %1027 = vmatpush.msra.mxu0 0.0
        %1028 = vmatpush.msra.mxu0 %v919
        %1029 = vmatpush.msra.mxu0 %v916
        %1030 = vmatmul.f32.gmra.mxu0 %v1009
        %v1031 = vpop.f32.mrf.mxu0
        %v1032 = vadd.f32 0.0, %v1031
        %1033 = vmatmul.f32.gmra.mxu0 %v1012
        %v1034 = vpop.f32.mrf.mxu0
        %v1035 = vadd.f32 0.0, %v1034
        %1036 = vdwg.mxu0
        %v1037 = vld [vmem:[#allocation14] sm:$0xff]
        %v1038 = vld [vmem:[#allocation14 + $0x8] sm:$0xff]
        %v1039 = vld [vmem:[#allocation14 + $0x10] sm:$0xff]
        %v1040 = vld [vmem:[#allocation14 + $0x18] sm:$0xff]
        %1041 = vrot.lane.b32.xlu0 %v921, 96
        %v1042 = vpop.permute.xlu0 %1041
        %1043 = vrot.lane.b32.xlu0 %v922, 96
        %v1044 = vpop.permute.xlu0 %1043
        %1045 = vrot.lane.b32.xlu0 %v873, 96
        %v1046 = vpop.permute.xlu0 %1045
        %1047 = vrot.lane.b32.xlu0 %v876, 96
        %v1048 = vpop.permute.xlu0 %1047
        %v1049 = vsel %vm923, %v1042, 0
        %v1051 = vsel %vm923, %v1044, 0
        %v1053 = vsel %vm923, %v1046, 0
        %v1055 = vsel %vm923, %v1048, 0
        %1057 = vmatpush.xpose.msra.mxu0 0.0
        %1058 = vmatpush.xpose.msra.mxu0 0.0
        %1059 = vmatpush.xpose.msra.mxu0 0.0
        %1060 = vmatpush.xpose.msra.mxu0 0.0
        %1061 = vmatpush.xpose.msra.mxu0 0.0
        %1062 = vmatpush.xpose.msra.mxu0 0.0
        %1063 = vmatpush.xpose.msra.mxu0 0.0
        %1064 = vmatpush.xpose.msra.mxu0 0.0
        %1065 = vmatpush.xpose.msra.mxu0 0.0
        %1066 = vmatpush.xpose.msra.mxu0 0.0
        %1067 = vmatpush.xpose.msra.mxu0 0.0
        %1068 = vmatpush.xpose.msra.mxu0 0.0
        %1069 = vmatpush.xpose.msra.mxu0 0.0
        %1070 = vmatpush.xpose.msra.mxu0 0.0
        %1071 = vmatpush.xpose.msra.mxu0 %v1055
        %1072 = vmatpush.xpose.msra.mxu0 %v1053
        %1073 = vmatmul.f32.gmra.mxu0 %v1049
        %v1074 = vpop.f32.mrf.mxu0
        %v1075 = vadd.f32 0.0, %v1074
        %1076 = vmatmul.f32.gmra.mxu0 %v1051
        %v1077 = vpop.f32.mrf.mxu0
        %v1078 = vadd.f32 0.0, %v1077
        %1079 = vdwg.mxu0
        %v1080 = vsel %vm959, %v1075, -inf
        %1081 = vmax.xlane.f32.xlu0 %v1080
        %v1082 = vpop.xlane.xlu0 %1081
        %v1083 = vsel %vm959, %v1078, -inf
        %1084 = vmax.xlane.f32.xlu0 %v1083
        %v1085 = vpop.xlane.xlu0 %1084
        %v1086 = vsub.f32 %v1075, %v1082
        %v1087 = vsub.f32 %v1078, %v1085
        %v1088 = vmul.f32 %v1086, 1.442695
        %v1089 = vpow.pop %v1088
        %v1090 = vmul.f32 %v1087, 1.442695
        %v1091 = vpow.pop %v1090
        %v1092 = vsel %vm959, %v1089, 0.0
        %1093 = vadd.xlane.f32.xlu0 %v1092
        %v1094 = vpop.xlane.xlu0 %1093
        %v1095 = vsel %vm959, %v1091, 0.0
        %1096 = vadd.xlane.f32.xlu0 %v1095
        %v1097 = vpop.xlane.xlu0 %1096
        %v1098 = vrcp.pop %v1094
        %v1099 = vmul.f32 %v1094, %v1098
        %v1100 = vsub.f32 1.0, %v1099
        %v1101 = vmul.f32 %v1098, %v1100
        %v1102 = vadd.f32 %v1098, %v1101
        %vm1103 = vweird.f32 %v1094
        %vm1104 = vweird.f32 %v1098
        %vm1105 = vmor %vm1103, %vm1104
        %v1106 = vsel %vm1105, %v1098, %v1102
        %v1107 = vand.u32 2147483647, %v1094
        %vm1108 = vcmp.eq.f32.partialorder %v1107, 8.507059e+37
        %v1109 = vand.u32 %v1094, 2147483648
        %v1110 = vor.u32 1.1754944e-38, %v1109
        %v1111 = vsel %vm1108, %v1110, %v1106
        %v1112 = vmul.f32 %v1089, %v1111
        %v1113 = vrcp.pop %v1097
        %v1114 = vmul.f32 %v1097, %v1113
        %v1115 = vsub.f32 1.0, %v1114
        %v1116 = vmul.f32 %v1113, %v1115
        %v1117 = vadd.f32 %v1113, %v1116
        %vm1118 = vweird.f32 %v1097
        %vm1119 = vweird.f32 %v1113
        %vm1120 = vmor %vm1118, %vm1119
        %v1121 = vsel %vm1120, %v1113, %v1117
        %v1122 = vand.u32 2147483647, %v1097
        %vm1123 = vcmp.eq.f32.partialorder %v1122, 8.507059e+37
        %v1124 = vand.u32 %v1097, 2147483648
        %v1125 = vor.u32 1.1754944e-38, %v1124
        %v1126 = vsel %vm1123, %v1125, %v1121
        %v1127 = vmul.f32 %v1091, %v1126
        %1130 = vrot.lane.b32.xlu0 %v916, 96
        %v1131 = vpop.permute.xlu0 %1130
        %1132 = vrot.lane.b32.xlu0 %v919, 96
        %v1133 = vpop.permute.xlu0 %1132
        %v1137 = vsel %vm959, %v1112, 0
        %v1140 = vsel %vm959, %v1127, 0
        %1142 = vmatpush.msra.mxu0 0.0
        %1143 = vmatpush.msra.mxu0 0.0
        %1144 = vmatpush.msra.mxu0 0.0
        %1145 = vmatpush.msra.mxu0 0.0
        %1146 = vmatpush.msra.mxu0 0.0
        %1147 = vmatpush.msra.mxu0 0.0
        %1148 = vmatpush.msra.mxu0 0.0
        %1149 = vmatpush.msra.mxu0 0.0
        %1150 = vmatpush.msra.mxu0 0.0
        %1151 = vmatpush.msra.mxu0 0.0
        %1152 = vmatpush.msra.mxu0 0.0
        %1153 = vmatpush.msra.mxu0 0.0
        %1154 = vmatpush.msra.mxu0 0.0
        %1155 = vmatpush.msra.mxu0 0.0
        %1156 = vmatpush.msra.mxu0 %v1133
        %1157 = vmatpush.msra.mxu0 %v1131
        %1158 = vmatmul.f32.gmra.mxu0 %v1137
        %v1159 = vpop.f32.mrf.mxu0
        %v1160 = vadd.f32 0.0, %v1159
        %1161 = vmatmul.f32.gmra.mxu0 %v1140
        %v1162 = vpop.f32.mrf.mxu0
        %v1163 = vadd.f32 0.0, %v1162
        %1164 = vdwg.mxu0
        %v1165 = vld [vmem:[#allocation14 + $0x20] sm:$0xff]
        %v1166 = vld [vmem:[#allocation14 + $0x28] sm:$0xff]
        %v1167 = vld [vmem:[#allocation14 + $0x30] sm:$0xff]
        %v1168 = vld [vmem:[#allocation14 + $0x38] sm:$0xff]
        %v1170 = vsel %vm923, %v1160, 0
        %v1173 = vsel %vm923, %v1163, 0
        %1175 = vmatpush.msra.mxu0 0.0
        %1176 = vmatpush.msra.mxu0 0.0
        %1177 = vmatpush.msra.mxu0 0.0
        %1178 = vmatpush.msra.mxu0 0.0
        %1179 = vmatpush.msra.mxu0 0.0
        %1180 = vmatpush.msra.mxu0 0.0
        %1181 = vmatpush.msra.mxu0 0.0
        %1182 = vmatpush.msra.mxu0 0.0
        %1183 = vmatpush.msra.mxu0 0.0
        %1184 = vmatpush.msra.mxu0 0.0
        %1185 = vmatpush.msra.mxu0 0.0
        %1186 = vmatpush.msra.mxu0 0.0
        %1187 = vmatpush.msra.mxu0 %v1168
        %1188 = vmatpush.msra.mxu0 %v1167
        %1189 = vmatpush.msra.mxu0 %v1166
        %1190 = vmatpush.msra.mxu0 %v1165
        %1191 = vmatmul.f32.gmra.mxu0 %v1170
        %v1192 = vpop.f32.mrf.mxu0
        %v1193 = vadd.f32 0.0, %v1192
        %1194 = vmatmul.f32.gmra.mxu0 %v1173
        %v1195 = vpop.f32.mrf.mxu0
        %v1196 = vadd.f32 0.0, %v1195
        %1197 = vdwg.mxu0
        %v1199 = vsel %vm923, %v1032, 0
        %v1202 = vsel %vm923, %v1035, 0
        %1204 = vmatpush.msra.mxu0 0.0
        %1205 = vmatpush.msra.mxu0 0.0
        %1206 = vmatpush.msra.mxu0 0.0
        %1207 = vmatpush.msra.mxu0 0.0
        %1208 = vmatpush.msra.mxu0 0.0
        %1209 = vmatpush.msra.mxu0 0.0
        %1210 = vmatpush.msra.mxu0 0.0
        %1211 = vmatpush.msra.mxu0 0.0
        %1212 = vmatpush.msra.mxu0 0.0
        %1213 = vmatpush.msra.mxu0 0.0
        %1214 = vmatpush.msra.mxu0 0.0
        %1215 = vmatpush.msra.mxu0 0.0
        %1216 = vmatpush.msra.mxu0 %v1040
        %1217 = vmatpush.msra.mxu0 %v1039
        %1218 = vmatpush.msra.mxu0 %v1038
        %1219 = vmatpush.msra.mxu0 %v1037
        %1220 = vmatmul.f32.gmra.mxu0 %v1199
        %v1221 = vpop.f32.mrf.mxu0
        %v1222 = vadd.f32 %v1193, %v1221
        %1223 = vmatmul.f32.gmra.mxu0 %v1202
        %v1224 = vpop.f32.mrf.mxu0
        %v1225 = vadd.f32 %v1196, %v1224
        %1226 = vdwg.mxu0
        %1227 = vrot.lane.b32.xlu0 %v921, 64
        %v1228 = vpop.permute.xlu0 %1227
        %1229 = vrot.lane.b32.xlu0 %v922, 64
        %v1230 = vpop.permute.xlu0 %1229
        %1231 = vrot.lane.b32.xlu0 %v873, 64
        %v1232 = vpop.permute.xlu0 %1231
        %1233 = vrot.lane.b32.xlu0 %v876, 64
        %v1234 = vpop.permute.xlu0 %1233
        %v1235 = vsel %vm923, %v1228, 0
        %v1237 = vsel %vm923, %v1230, 0
        %v1239 = vsel %vm923, %v1232, 0
        %v1241 = vsel %vm923, %v1234, 0
        %1243 = vmatpush.xpose.msra.mxu0 0.0
        %1244 = vmatpush.xpose.msra.mxu0 0.0
        %1245 = vmatpush.xpose.msra.mxu0 0.0
        %1246 = vmatpush.xpose.msra.mxu0 0.0
        %1247 = vmatpush.xpose.msra.mxu0 0.0
        %1248 = vmatpush.xpose.msra.mxu0 0.0
        %1249 = vmatpush.xpose.msra.mxu0 0.0
        %1250 = vmatpush.xpose.msra.mxu0 0.0
        %1251 = vmatpush.xpose.msra.mxu0 0.0
        %1252 = vmatpush.xpose.msra.mxu0 0.0
        %1253 = vmatpush.xpose.msra.mxu0 0.0
        %1254 = vmatpush.xpose.msra.mxu0 0.0
        %1255 = vmatpush.xpose.msra.mxu0 0.0
        %1256 = vmatpush.xpose.msra.mxu0 0.0
        %1257 = vmatpush.xpose.msra.mxu0 %v1241
        %1258 = vmatpush.xpose.msra.mxu0 %v1239
        %1259 = vmatmul.f32.gmra.mxu0 %v1235
        %v1260 = vpop.f32.mrf.mxu0
        %v1261 = vadd.f32 0.0, %v1260
        %1262 = vmatmul.f32.gmra.mxu0 %v1237
        %v1263 = vpop.f32.mrf.mxu0
        %v1264 = vadd.f32 0.0, %v1263
        %1265 = vdwg.mxu0
        %v1266 = vsel %vm959, %v1261, -inf
        %1267 = vmax.xlane.f32.xlu0 %v1266
        %v1268 = vpop.xlane.xlu0 %1267
        %v1269 = vsel %vm959, %v1264, -inf
        %1270 = vmax.xlane.f32.xlu0 %v1269
        %v1271 = vpop.xlane.xlu0 %1270
        %v1272 = vsub.f32 %v1261, %v1268
        %v1273 = vsub.f32 %v1264, %v1271
        %v1274 = vmul.f32 %v1272, 1.442695
        %v1275 = vpow.pop %v1274
        %v1276 = vmul.f32 %v1273, 1.442695
        %v1277 = vpow.pop %v1276
        %v1278 = vsel %vm959, %v1275, 0.0
        %1279 = vadd.xlane.f32.xlu0 %v1278
        %v1280 = vpop.xlane.xlu0 %1279
        %v1281 = vsel %vm959, %v1277, 0.0
        %1282 = vadd.xlane.f32.xlu0 %v1281
        %v1283 = vpop.xlane.xlu0 %1282
        %v1284 = vrcp.pop %v1280
        %v1285 = vmul.f32 %v1280, %v1284
        %v1286 = vsub.f32 1.0, %v1285
        %v1287 = vmul.f32 %v1284, %v1286
        %v1288 = vadd.f32 %v1284, %v1287
        %vm1289 = vweird.f32 %v1280
        %vm1290 = vweird.f32 %v1284
        %vm1291 = vmor %vm1289, %vm1290
        %v1292 = vsel %vm1291, %v1284, %v1288
        %v1293 = vand.u32 2147483647, %v1280
        %vm1294 = vcmp.eq.f32.partialorder %v1293, 8.507059e+37
        %v1295 = vand.u32 %v1280, 2147483648
        %v1296 = vor.u32 1.1754944e-38, %v1295
        %v1297 = vsel %vm1294, %v1296, %v1292
        %v1298 = vmul.f32 %v1275, %v1297
        %v1299 = vrcp.pop %v1283
        %v1300 = vmul.f32 %v1283, %v1299
        %v1301 = vsub.f32 1.0, %v1300
        %v1302 = vmul.f32 %v1299, %v1301
        %v1303 = vadd.f32 %v1299, %v1302
        %vm1304 = vweird.f32 %v1283
        %vm1305 = vweird.f32 %v1299
        %vm1306 = vmor %vm1304, %vm1305
        %v1307 = vsel %vm1306, %v1299, %v1303
        %v1308 = vand.u32 2147483647, %v1283
        %vm1309 = vcmp.eq.f32.partialorder %v1308, 8.507059e+37
        %v1310 = vand.u32 %v1283, 2147483648
        %v1311 = vor.u32 1.1754944e-38, %v1310
        %v1312 = vsel %vm1309, %v1311, %v1307
        %v1313 = vmul.f32 %v1277, %v1312
        %1314 = vrot.lane.b32.xlu0 %v916, 64
        %v1315 = vpop.permute.xlu0 %1314
        %1316 = vrot.lane.b32.xlu0 %v919, 64
        %v1317 = vpop.permute.xlu0 %1316
        %v1321 = vsel %vm959, %v1298, 0
        %v1324 = vsel %vm959, %v1313, 0
        %1326 = vmatpush.msra.mxu0 0.0
        %1327 = vmatpush.msra.mxu0 0.0
        %1328 = vmatpush.msra.mxu0 0.0
        %1329 = vmatpush.msra.mxu0 0.0
        %1330 = vmatpush.msra.mxu0 0.0
        %1331 = vmatpush.msra.mxu0 0.0
        %1332 = vmatpush.msra.mxu0 0.0
        %1333 = vmatpush.msra.mxu0 0.0
        %1334 = vmatpush.msra.mxu0 0.0
        %1335 = vmatpush.msra.mxu0 0.0
        %1336 = vmatpush.msra.mxu0 0.0
        %1337 = vmatpush.msra.mxu0 0.0
        %1338 = vmatpush.msra.mxu0 0.0
        %1339 = vmatpush.msra.mxu0 0.0
        %1340 = vmatpush.msra.mxu0 %v1317
        %1341 = vmatpush.msra.mxu0 %v1315
        %1342 = vmatmul.f32.gmra.mxu0 %v1321
        %v1343 = vpop.f32.mrf.mxu0
        %v1344 = vadd.f32 0.0, %v1343
        %1345 = vmatmul.f32.gmra.mxu0 %v1324
        %v1346 = vpop.f32.mrf.mxu0
        %v1347 = vadd.f32 0.0, %v1346
        %1348 = vdwg.mxu0
        %v1349 = vld [vmem:[#allocation14 + $0x40] sm:$0xff]
        %v1350 = vld [vmem:[#allocation14 + $0x48] sm:$0xff]
        %v1351 = vld [vmem:[#allocation14 + $0x50] sm:$0xff]
        %v1352 = vld [vmem:[#allocation14 + $0x58] sm:$0xff]
        %v1354 = vsel %vm923, %v1344, 0
        %v1357 = vsel %vm923, %v1347, 0
        %1359 = vmatpush.msra.mxu0 0.0
        %1360 = vmatpush.msra.mxu0 0.0
        %1361 = vmatpush.msra.mxu0 0.0
        %1362 = vmatpush.msra.mxu0 0.0
        %1363 = vmatpush.msra.mxu0 0.0
        %1364 = vmatpush.msra.mxu0 0.0
        %1365 = vmatpush.msra.mxu0 0.0
        %1366 = vmatpush.msra.mxu0 0.0
        %1367 = vmatpush.msra.mxu0 0.0
        %1368 = vmatpush.msra.mxu0 0.0
        %1369 = vmatpush.msra.mxu0 0.0
        %1370 = vmatpush.msra.mxu0 0.0
        %1371 = vmatpush.msra.mxu0 %v1352
        %1372 = vmatpush.msra.mxu0 %v1351
        %1373 = vmatpush.msra.mxu0 %v1350
        %1374 = vmatpush.msra.mxu0 %v1349
        %1375 = vmatmul.f32.gmra.mxu0 %v1354
        %v1376 = vpop.f32.mrf.mxu0
        %v1377 = vadd.f32 0.0, %v1376
        %1378 = vmatmul.f32.gmra.mxu0 %v1357
        %v1379 = vpop.f32.mrf.mxu0
        %v1380 = vadd.f32 0.0, %v1379
        %1381 = vdwg.mxu0
        %v1382 = vadd.f32 %v1222, %v1377
        %v1383 = vadd.f32 %v1225, %v1380
        %1384 = vrot.lane.b32.xlu0 %v921, 32
        %v1385 = vpop.permute.xlu0 %1384
        %1386 = vrot.lane.b32.xlu0 %v922, 32
        %v1387 = vpop.permute.xlu0 %1386
        %1388 = vrot.lane.b32.xlu0 %v873, 32
        %v1389 = vpop.permute.xlu0 %1388
        %1390 = vrot.lane.b32.xlu0 %v876, 32
        %v1391 = vpop.permute.xlu0 %1390
        %v1392 = vsel %vm923, %v1385, 0
        %v1394 = vsel %vm923, %v1387, 0
        %v1396 = vsel %vm923, %v1389, 0
        %v1398 = vsel %vm923, %v1391, 0
        %1400 = vmatpush.xpose.msra.mxu0 0.0
        %1401 = vmatpush.xpose.msra.mxu0 0.0
        %1402 = vmatpush.xpose.msra.mxu0 0.0
        %1403 = vmatpush.xpose.msra.mxu0 0.0
        %1404 = vmatpush.xpose.msra.mxu0 0.0
        %1405 = vmatpush.xpose.msra.mxu0 0.0
        %1406 = vmatpush.xpose.msra.mxu0 0.0
        %1407 = vmatpush.xpose.msra.mxu0 0.0
        %1408 = vmatpush.xpose.msra.mxu0 0.0
        %1409 = vmatpush.xpose.msra.mxu0 0.0
        %1410 = vmatpush.xpose.msra.mxu0 0.0
        %1411 = vmatpush.xpose.msra.mxu0 0.0
        %1412 = vmatpush.xpose.msra.mxu0 0.0
        %1413 = vmatpush.xpose.msra.mxu0 0.0
        %1414 = vmatpush.xpose.msra.mxu0 %v1398
        %1415 = vmatpush.xpose.msra.mxu0 %v1396
        %1416 = vmatmul.f32.gmra.mxu0 %v1392
        %v1417 = vpop.f32.mrf.mxu0
        %v1418 = vadd.f32 0.0, %v1417
        %1419 = vmatmul.f32.gmra.mxu0 %v1394
        %v1420 = vpop.f32.mrf.mxu0
        %v1421 = vadd.f32 0.0, %v1420
        %1422 = vdwg.mxu0
        %v1423 = vsel %vm959, %v1418, -inf
        %1424 = vmax.xlane.f32.xlu0 %v1423
        %v1425 = vpop.xlane.xlu0 %1424
        %v1426 = vsel %vm959, %v1421, -inf
        %1427 = vmax.xlane.f32.xlu0 %v1426
        %v1428 = vpop.xlane.xlu0 %1427
        %v1429 = vsub.f32 %v1418, %v1425
        %v1430 = vsub.f32 %v1421, %v1428
        %v1431 = vmul.f32 %v1429, 1.442695
        %v1432 = vpow.pop %v1431
        %v1433 = vmul.f32 %v1430, 1.442695
        %v1434 = vpow.pop %v1433
        %v1435 = vsel %vm959, %v1432, 0.0
        %1436 = vadd.xlane.f32.xlu0 %v1435
        %v1437 = vpop.xlane.xlu0 %1436
        %v1438 = vsel %vm959, %v1434, 0.0
        %1439 = vadd.xlane.f32.xlu0 %v1438
        %v1440 = vpop.xlane.xlu0 %1439
        %v1441 = vrcp.pop %v1437
        %v1442 = vmul.f32 %v1437, %v1441
        %v1443 = vsub.f32 1.0, %v1442
        %v1444 = vmul.f32 %v1441, %v1443
        %v1445 = vadd.f32 %v1441, %v1444
        %vm1446 = vweird.f32 %v1437
        %vm1447 = vweird.f32 %v1441
        %vm1448 = vmor %vm1446, %vm1447
        %v1449 = vsel %vm1448, %v1441, %v1445
        %v1450 = vand.u32 2147483647, %v1437
        %vm1451 = vcmp.eq.f32.partialorder %v1450, 8.507059e+37
        %v1452 = vand.u32 %v1437, 2147483648
        %v1453 = vor.u32 1.1754944e-38, %v1452
        %v1454 = vsel %vm1451, %v1453, %v1449
        %v1455 = vmul.f32 %v1432, %v1454
        %v1456 = vrcp.pop %v1440
        %v1457 = vmul.f32 %v1440, %v1456
        %v1458 = vsub.f32 1.0, %v1457
        %v1459 = vmul.f32 %v1456, %v1458
        %v1460 = vadd.f32 %v1456, %v1459
        %vm1461 = vweird.f32 %v1440
        %vm1462 = vweird.f32 %v1456
        %vm1463 = vmor %vm1461, %vm1462
        %v1464 = vsel %vm1463, %v1456, %v1460
        %v1465 = vand.u32 2147483647, %v1440
        %vm1466 = vcmp.eq.f32.partialorder %v1465, 8.507059e+37
        %v1467 = vand.u32 %v1440, 2147483648
        %v1468 = vor.u32 1.1754944e-38, %v1467
        %v1469 = vsel %vm1466, %v1468, %v1464
        %v1470 = vmul.f32 %v1434, %v1469
        %1471 = vrot.lane.b32.xlu0 %v916, 32
        %v1472 = vpop.permute.xlu0 %1471
        %1473 = vrot.lane.b32.xlu0 %v919, 32
        %v1474 = vpop.permute.xlu0 %1473
        %v1478 = vsel %vm959, %v1455, 0
        %v1481 = vsel %vm959, %v1470, 0
        %1483 = vmatpush.msra.mxu0 0.0
        %1484 = vmatpush.msra.mxu0 0.0
        %1485 = vmatpush.msra.mxu0 0.0
        %1486 = vmatpush.msra.mxu0 0.0
        %1487 = vmatpush.msra.mxu0 0.0
        %1488 = vmatpush.msra.mxu0 0.0
        %1489 = vmatpush.msra.mxu0 0.0
        %1490 = vmatpush.msra.mxu0 0.0
        %1491 = vmatpush.msra.mxu0 0.0
        %1492 = vmatpush.msra.mxu0 0.0
        %1493 = vmatpush.msra.mxu0 0.0
        %1494 = vmatpush.msra.mxu0 0.0
        %1495 = vmatpush.msra.mxu0 0.0
        %1496 = vmatpush.msra.mxu0 0.0
        %1497 = vmatpush.msra.mxu0 %v1474
        %1498 = vmatpush.msra.mxu0 %v1472
        %1499 = vmatmul.f32.gmra.mxu0 %v1478
        %v1500 = vpop.f32.mrf.mxu0
        %v1501 = vadd.f32 0.0, %v1500
        %1502 = vmatmul.f32.gmra.mxu0 %v1481
        %v1503 = vpop.f32.mrf.mxu0
        %v1504 = vadd.f32 0.0, %v1503
        %1505 = vdwg.mxu0
        %v1506 = vld [vmem:[#allocation14 + $0x60] sm:$0xff]
        %v1507 = vld [vmem:[#allocation14 + $0x68] sm:$0xff]
        %v1508 = vld [vmem:[#allocation14 + $0x70] sm:$0xff]
        %v1509 = vld [vmem:[#allocation14 + $0x78] sm:$0xff]
        %v1511 = vsel %vm923, %v1501, 0
        %v1514 = vsel %vm923, %v1504, 0
        %1516 = vmatpush.msra.mxu0 0.0
        %1517 = vmatpush.msra.mxu0 0.0
        %1518 = vmatpush.msra.mxu0 0.0
        %1519 = vmatpush.msra.mxu0 0.0
        %1520 = vmatpush.msra.mxu0 0.0
        %1521 = vmatpush.msra.mxu0 0.0
        %1522 = vmatpush.msra.mxu0 0.0
        %1523 = vmatpush.msra.mxu0 0.0
        %1524 = vmatpush.msra.mxu0 0.0
        %1525 = vmatpush.msra.mxu0 0.0
        %1526 = vmatpush.msra.mxu0 0.0
        %1527 = vmatpush.msra.mxu0 0.0
        %1528 = vmatpush.msra.mxu0 %v1509
        %1529 = vmatpush.msra.mxu0 %v1508
        %1530 = vmatpush.msra.mxu0 %v1507
        %1531 = vmatpush.msra.mxu0 %v1506
        %1532 = vmatmul.f32.gmra.mxu0 %v1511
        %v1533 = vpop.f32.mrf.mxu0
        %v1534 = vadd.f32 0.0, %v1533
        %1535 = vmatmul.f32.gmra.mxu0 %v1514
        %v1536 = vpop.f32.mrf.mxu0
        %v1537 = vadd.f32 0.0, %v1536
        %1538 = vdwg.mxu0
        %v1539 = vadd.f32 %v1382, %v1534
        %v1540 = vadd.f32 %v1383, %v1537
        %v1541 = vld [vmem:[%s9] sm:$0x1]
        %v1543 = vperm.slane %v1541, 0
        %v1545 = vadd.f32 %v1539, %v1543
        %v1546 = vadd.f32 %v1540, %v1543
        %v1547 = vadd.f32 %v786, %v1545
        %v1548 = vadd.f32 %v787, %v1546
        %v1549 = vld [vmem:[#allocation16] sm:$0x1]
        %v1550 = vld [vmem:[%s11] sm:$0x1]
        %1551 = vadd.xlane.f32.xlu0 %v1547
        %v1552 = vpop.xlane.xlu0 %1551
        %1553 = vadd.xlane.f32.xlu0 %v1548
        %v1554 = vpop.xlane.xlu0 %1553
        %v1555 = vrcp.pop 128.0
        %v1556 = vmul.f32 128.0, %v1555
        %v1557 = vsub.f32 1.0, %v1556
        %v1558 = vmul.f32 %v1555, %v1557
        %v1559 = vadd.f32 %v1555, %v1558
        %vm1560 = vweird.f32 %v1555
        %v1561 = vsel %vm1560, %v1555, %v1559
        %v1562 = vmul.f32 %v1552, %v1561
        %v1563 = vmul.f32 %v1554, %v1561
        %v1564 = vsub.f32 %v1547, %v1562
        %v1565 = vsub.f32 %v1548, %v1563
        %v1566 = vmul.f32 %v1564, %v1564
        %v1567 = vmul.f32 %v1565, %v1565
        %1568 = vadd.xlane.f32.xlu0 %v1566
        %v1569 = vpop.xlane.xlu0 %1568
        %1570 = vadd.xlane.f32.xlu0 %v1567
        %v1571 = vpop.xlane.xlu0 %1570
        %v1572 = vmul.f32 %v1569, %v1561
        %v1573 = vmul.f32 %v1571, %v1561
        %v1574 = vadd.f32 %v1572, 1e-05
        %v1575 = vadd.f32 %v1573, 1e-05
        %v1576 = vrsqrt.pop %v1574
        %v1577 = vmul.f32 %v1576, %v1574
        %v1578 = vmul.f32 %v1577, %v1576
        %v1579 = vmul.f32 0.5, %v1578
        %v1580 = vsub.f32 1.5, %v1579
        %v1581 = vmul.f32 %v1576, %v1580
        %vm1582 = vweird.f32 %v1574
        %vm1583 = vweird.f32 %v1576
        %vm1584 = vmor %vm1582, %vm1583
        %v1585 = vsel %vm1584, %v1576, %v1581
        %v1586 = vrsqrt.pop %v1575
        %v1587 = vmul.f32 %v1586, %v1575
        %v1588 = vmul.f32 %v1587, %v1586
        %v1589 = vmul.f32 0.5, %v1588
        %v1590 = vsub.f32 1.5, %v1589
        %v1591 = vmul.f32 %v1586, %v1590
        %vm1592 = vweird.f32 %v1575
        %vm1593 = vweird.f32 %v1586
        %vm1594 = vmor %vm1592, %vm1593
        %v1595 = vsel %vm1594, %v1586, %v1591
        %v1596 = vmul.f32 %v1564, %v1585
        %v1597 = vmul.f32 %v1565, %v1595
        %v1599 = vperm.slane %v1549, 0
        %v1601 = vmul.f32 %v1596, %v1599
        %v1602 = vmul.f32 %v1597, %v1599
        %v1604 = vperm.slane %v1550, 0
        %v1606 = vadd.f32 %v1601, %v1604
        %v1607 = vadd.f32 %v1602, %v1604
        %v1608 = vld [vmem:[#allocation17] sm:$0xff]
        %v1609 = vld [vmem:[#allocation17 + $0x8] sm:$0xff]
        %v1610 = vld [vmem:[#allocation17 + $0x10] sm:$0xff]
        %v1611 = vld [vmem:[#allocation17 + $0x18] sm:$0xff]
        %v1612 = vld [vmem:[#allocation17 + $0x20] sm:$0xff]
        %v1613 = vld [vmem:[#allocation17 + $0x28] sm:$0xff]
        %v1614 = vld [vmem:[#allocation17 + $0x30] sm:$0xff]
        %v1615 = vld [vmem:[#allocation17 + $0x38] sm:$0xff]
        %v1616 = vld [vmem:[#allocation17 + $0x40] sm:$0xff]
        %v1617 = vld [vmem:[#allocation17 + $0x48] sm:$0xff]
        %v1618 = vld [vmem:[#allocation17 + $0x50] sm:$0xff]
        %v1619 = vld [vmem:[#allocation17 + $0x58] sm:$0xff]
        %v1620 = vld [vmem:[#allocation17 + $0x60] sm:$0xff]
        %v1621 = vld [vmem:[#allocation17 + $0x68] sm:$0xff]
        %v1622 = vld [vmem:[#allocation17 + $0x70] sm:$0xff]
        %v1623 = vld [vmem:[#allocation17 + $0x78] sm:$0xff]
        %v1624 = vld [vmem:[#allocation17 + $0x80] sm:$0xff]
        %v1625 = vld [vmem:[#allocation17 + $0x88] sm:$0xff]
        %v1626 = vld [vmem:[#allocation17 + $0x90] sm:$0xff]
        %v1627 = vld [vmem:[#allocation17 + $0x98] sm:$0xff]
        %v1628 = vld [vmem:[#allocation17 + $0xa0] sm:$0xff]
        %v1629 = vld [vmem:[#allocation17 + $0xa8] sm:$0xff]
        %v1630 = vld [vmem:[#allocation17 + $0xb0] sm:$0xff]
        %v1631 = vld [vmem:[#allocation17 + $0xb8] sm:$0xff]
        %v1632 = vld [vmem:[#allocation17 + $0xc0] sm:$0xff]
        %v1633 = vld [vmem:[#allocation17 + $0xc8] sm:$0xff]
        %v1634 = vld [vmem:[#allocation17 + $0xd0] sm:$0xff]
        %v1635 = vld [vmem:[#allocation17 + $0xd8] sm:$0xff]
        %v1636 = vld [vmem:[#allocation17 + $0xe0] sm:$0xff]
        %v1637 = vld [vmem:[#allocation17 + $0xe8] sm:$0xff]
        %v1638 = vld [vmem:[#allocation17 + $0xf0] sm:$0xff]
        %v1639 = vld [vmem:[#allocation17 + $0xf8] sm:$0xff]
        %v1640 = vld [vmem:[%s13] sm:$0x3]
        %v1642 = vperm.slane %v1640, 0
        %v1643 = vperm.slane %v1640, 1
        %1646 = vmatpush.msra.mxu0 %v1638
        %1647 = vmatpush.msra.mxu0 %v1636
        %1648 = vmatpush.msra.mxu0 %v1634
        %1649 = vmatpush.msra.mxu0 %v1632
        %1650 = vmatpush.msra.mxu0 %v1630
        %1651 = vmatpush.msra.mxu0 %v1628
        %1652 = vmatpush.msra.mxu0 %v1626
        %1653 = vmatpush.msra.mxu0 %v1624
        %1654 = vmatpush.msra.mxu0 %v1622
        %1655 = vmatpush.msra.mxu0 %v1620
        %1656 = vmatpush.msra.mxu0 %v1618
        %1657 = vmatpush.msra.mxu0 %v1616
        %1658 = vmatpush.msra.mxu0 %v1614
        %1659 = vmatpush.msra.mxu0 %v1612
        %1660 = vmatpush.msra.mxu0 %v1610
        %1661 = vmatpush.msra.mxu0 %v1608
        %1662 = vmatmul.f32.gmra.mxu0 %v1606
        %v1663 = vpop.f32.mrf.mxu0
        %v1664 = vadd.f32 %v1642, %v1663
        %1665 = vmatmul.f32.gmra.mxu0 %v1607
        %v1666 = vpop.f32.mrf.mxu0
        %v1667 = vadd.f32 %v1642, %v1666
        %1668 = vdwg.mxu0
        %1669 = vmatpush.msra.mxu0 %v1639
        %1670 = vmatpush.msra.mxu0 %v1637
        %1671 = vmatpush.msra.mxu0 %v1635
        %1672 = vmatpush.msra.mxu0 %v1633
        %1673 = vmatpush.msra.mxu0 %v1631
        %1674 = vmatpush.msra.mxu0 %v1629
        %1675 = vmatpush.msra.mxu0 %v1627
        %1676 = vmatpush.msra.mxu0 %v1625
        %1677 = vmatpush.msra.mxu0 %v1623
        %1678 = vmatpush.msra.mxu0 %v1621
        %1679 = vmatpush.msra.mxu0 %v1619
        %1680 = vmatpush.msra.mxu0 %v1617
        %1681 = vmatpush.msra.mxu0 %v1615
        %1682 = vmatpush.msra.mxu0 %v1613
        %1683 = vmatpush.msra.mxu0 %v1611
        %1684 = vmatpush.msra.mxu0 %v1609
        %1685 = vmatmul.f32.gmra.mxu0 %v1606
        %v1686 = vpop.f32.mrf.mxu0
        %v1687 = vadd.f32 %v1643, %v1686
        %1688 = vmatmul.f32.gmra.mxu0 %v1607
        %v1689 = vpop.f32.mrf.mxu0
        %v1690 = vadd.f32 %v1643, %v1689
        %1691 = vdwg.mxu0
        %v1692 = vmax.f32 %v1664, 0.0
        %v1693 = vmax.f32 %v1687, 0.0
        %v1694 = vmax.f32 %v1667, 0.0
        %v1695 = vmax.f32 %v1690, 0.0
        %v1696 = vld [vmem:[#allocation19] sm:$0xff]
        %v1697 = vld [vmem:[#allocation19 + $0x8] sm:$0xff]
        %v1698 = vld [vmem:[#allocation19 + $0x10] sm:$0xff]
        %v1699 = vld [vmem:[#allocation19 + $0x18] sm:$0xff]
        %v1700 = vld [vmem:[#allocation19 + $0x20] sm:$0xff]
        %v1701 = vld [vmem:[#allocation19 + $0x28] sm:$0xff]
        %v1702 = vld [vmem:[#allocation19 + $0x30] sm:$0xff]
        %v1703 = vld [vmem:[#allocation19 + $0x38] sm:$0xff]
        %v1704 = vld [vmem:[#allocation19 + $0x40] sm:$0xff]
        %v1705 = vld [vmem:[#allocation19 + $0x48] sm:$0xff]
        %v1706 = vld [vmem:[#allocation19 + $0x50] sm:$0xff]
        %v1707 = vld [vmem:[#allocation19 + $0x58] sm:$0xff]
        %v1708 = vld [vmem:[#allocation19 + $0x60] sm:$0xff]
        %v1709 = vld [vmem:[#allocation19 + $0x68] sm:$0xff]
        %v1710 = vld [vmem:[#allocation19 + $0x70] sm:$0xff]
        %v1711 = vld [vmem:[#allocation19 + $0x78] sm:$0xff]
        %v1712 = vld [vmem:[#allocation19 + $0x80] sm:$0xff]
        %v1713 = vld [vmem:[#allocation19 + $0x88] sm:$0xff]
        %v1714 = vld [vmem:[#allocation19 + $0x90] sm:$0xff]
        %v1715 = vld [vmem:[#allocation19 + $0x98] sm:$0xff]
        %v1716 = vld [vmem:[#allocation19 + $0xa0] sm:$0xff]
        %v1717 = vld [vmem:[#allocation19 + $0xa8] sm:$0xff]
        %v1718 = vld [vmem:[#allocation19 + $0xb0] sm:$0xff]
        %v1719 = vld [vmem:[#allocation19 + $0xb8] sm:$0xff]
        %v1720 = vld [vmem:[#allocation19 + $0xc0] sm:$0xff]
        %v1721 = vld [vmem:[#allocation19 + $0xc8] sm:$0xff]
        %v1722 = vld [vmem:[#allocation19 + $0xd0] sm:$0xff]
        %v1723 = vld [vmem:[#allocation19 + $0xd8] sm:$0xff]
        %v1724 = vld [vmem:[#allocation19 + $0xe0] sm:$0xff]
        %v1725 = vld [vmem:[#allocation19 + $0xe8] sm:$0xff]
        %v1726 = vld [vmem:[#allocation19 + $0xf0] sm:$0xff]
        %v1727 = vld [vmem:[#allocation19 + $0xf8] sm:$0xff]
        %v1728 = vld [vmem:[%s15] sm:$0x1]
        %v1730 = vperm.slane %v1728, 0
        %1732 = vmatpush.msra.mxu0 %v1711
        %1733 = vmatpush.msra.mxu0 %v1710
        %1734 = vmatpush.msra.mxu0 %v1709
        %1735 = vmatpush.msra.mxu0 %v1708
        %1736 = vmatpush.msra.mxu0 %v1707
        %1737 = vmatpush.msra.mxu0 %v1706
        %1738 = vmatpush.msra.mxu0 %v1705
        %1739 = vmatpush.msra.mxu0 %v1704
        %1740 = vmatpush.msra.mxu0 %v1703
        %1741 = vmatpush.msra.mxu0 %v1702
        %1742 = vmatpush.msra.mxu0 %v1701
        %1743 = vmatpush.msra.mxu0 %v1700
        %1744 = vmatpush.msra.mxu0 %v1699
        %1745 = vmatpush.msra.mxu0 %v1698
        %1746 = vmatpush.msra.mxu0 %v1697
        %1747 = vmatpush.msra.mxu0 %v1696
        %1748 = vmatmul.f32.gmra.mxu0 %v1692
        %v1749 = vpop.f32.mrf.mxu0
        %v1750 = vadd.f32 %v1730, %v1749
        %1751 = vmatmul.f32.gmra.mxu0 %v1694
        %v1752 = vpop.f32.mrf.mxu0
        %v1753 = vadd.f32 %v1730, %v1752
        %1754 = vdwg.mxu0
        %1755 = vmatpush.msra.mxu0 %v1727
        %1756 = vmatpush.msra.mxu0 %v1726
        %1757 = vmatpush.msra.mxu0 %v1725
        %1758 = vmatpush.msra.mxu0 %v1724
        %1759 = vmatpush.msra.mxu0 %v1723
        %1760 = vmatpush.msra.mxu0 %v1722
        %1761 = vmatpush.msra.mxu0 %v1721
        %1762 = vmatpush.msra.mxu0 %v1720
        %1763 = vmatpush.msra.mxu0 %v1719
        %1764 = vmatpush.msra.mxu0 %v1718
        %1765 = vmatpush.msra.mxu0 %v1717
        %1766 = vmatpush.msra.mxu0 %v1716
        %1767 = vmatpush.msra.mxu0 %v1715
        %1768 = vmatpush.msra.mxu0 %v1714
        %1769 = vmatpush.msra.mxu0 %v1713
        %1770 = vmatpush.msra.mxu0 %v1712
        %1771 = vmatmul.f32.gmra.mxu0 %v1693
        %v1772 = vpop.f32.mrf.mxu0
        %v1773 = vadd.f32 %v1750, %v1772
        %1774 = vmatmul.f32.gmra.mxu0 %v1695
        %v1775 = vpop.f32.mrf.mxu0
        %v1776 = vadd.f32 %v1753, %v1775
        %1777 = vdwg.mxu0
        %v1778 = vadd.f32 %v1606, %v1773
        %v1779 = vadd.f32 %v1607, %v1776
        %v1780 = vld [vmem:[%s16] sm:$0x1]
        %v1781 = vld [vmem:[%s17] sm:$0x1]
        %1782 = vadd.xlane.f32.xlu0 %v1778
        %v1783 = vpop.xlane.xlu0 %1782
        %1784 = vadd.xlane.f32.xlu0 %v1779
        %v1785 = vpop.xlane.xlu0 %1784
        %v1786 = vmul.f32 %v1783, %v1561
        %v1787 = vmul.f32 %v1785, %v1561
        %v1788 = vsub.f32 %v1778, %v1786
        %v1789 = vsub.f32 %v1779, %v1787
        %v1790 = vmul.f32 %v1788, %v1788
        %v1791 = vmul.f32 %v1789, %v1789
        %1792 = vadd.xlane.f32.xlu0 %v1790
        %v1793 = vpop.xlane.xlu0 %1792
        %1794 = vadd.xlane.f32.xlu0 %v1791
        %v1795 = vpop.xlane.xlu0 %1794
        %v1796 = vmul.f32 %v1793, %v1561
        %v1797 = vmul.f32 %v1795, %v1561
        %v1798 = vadd.f32 %v1796, 1e-05
        %v1799 = vadd.f32 %v1797, 1e-05
        %v1800 = vrsqrt.pop %v1798
        %v1801 = vmul.f32 %v1800, %v1798
        %v1802 = vmul.f32 %v1801, %v1800
        %v1803 = vmul.f32 0.5, %v1802
        %v1804 = vsub.f32 1.5, %v1803
        %v1805 = vmul.f32 %v1800, %v1804
        %vm1806 = vweird.f32 %v1798
        %vm1807 = vweird.f32 %v1800
        %vm1808 = vmor %vm1806, %vm1807
        %v1809 = vsel %vm1808, %v1800, %v1805
        %v1810 = vrsqrt.pop %v1799
        %v1811 = vmul.f32 %v1810, %v1799
        %v1812 = vmul.f32 %v1811, %v1810
        %v1813 = vmul.f32 0.5, %v1812
        %v1814 = vsub.f32 1.5, %v1813
        %v1815 = vmul.f32 %v1810, %v1814
        %vm1816 = vweird.f32 %v1799
        %vm1817 = vweird.f32 %v1810
        %vm1818 = vmor %vm1816, %vm1817
        %v1819 = vsel %vm1818, %v1810, %v1815
        %v1820 = vmul.f32 %v1788, %v1809
        %v1821 = vmul.f32 %v1789, %v1819
        %v1823 = vperm.slane %v1780, 0
        %v1825 = vmul.f32 %v1820, %v1823
        %v1826 = vmul.f32 %v1821, %v1823
        %v1828 = vperm.slane %v1781, 0
        %v1830 = vadd.f32 %v1825, %v1828
        %v1831 = vadd.f32 %v1826, %v1828
        %v1832 = vadd.f32 %v1830, %v788
        %v1833 = vadd.f32 %v1831, %v789
        %s1834 = scalar_lea.vmem [#allocation7], 128
        %v1835 = vld [vmem:[%s1834] sm:$0xff]
        %v1836 = vld [vmem:[%s1834 + $0x8] sm:$0xff]
        %v1837 = vld [vmem:[%s1834 + $0x10] sm:$0xff]
        %v1838 = vld [vmem:[%s1834 + $0x18] sm:$0xff]
        %v1839 = vld [vmem:[%s1834 + $0x20] sm:$0xff]
        %v1840 = vld [vmem:[%s1834 + $0x28] sm:$0xff]
        %v1841 = vld [vmem:[%s1834 + $0x30] sm:$0xff]
        %v1842 = vld [vmem:[%s1834 + $0x38] sm:$0xff]
        %v1843 = vld [vmem:[%s1834 + $0x40] sm:$0xff]
        %v1844 = vld [vmem:[%s1834 + $0x48] sm:$0xff]
        %v1845 = vld [vmem:[%s1834 + $0x50] sm:$0xff]
        %v1846 = vld [vmem:[%s1834 + $0x58] sm:$0xff]
        %v1847 = vld [vmem:[%s1834 + $0x60] sm:$0xff]
        %v1848 = vld [vmem:[%s1834 + $0x68] sm:$0xff]
        %v1849 = vld [vmem:[%s1834 + $0x70] sm:$0xff]
        %v1850 = vld [vmem:[%s1834 + $0x78] sm:$0xff]
        %s1851 = scalar_lea.vmem %s3, 1
        %v1852 = vld [vmem:[%s1851] sm:$0x1]
        %v1854 = vperm.slane %v1852, 0
        %1856 = vmatpush.msra.mxu0 %v1850
        %1857 = vmatpush.msra.mxu0 %v1849
        %1858 = vmatpush.msra.mxu0 %v1848
        %1859 = vmatpush.msra.mxu0 %v1847
        %1860 = vmatpush.msra.mxu0 %v1846
        %1861 = vmatpush.msra.mxu0 %v1845
        %1862 = vmatpush.msra.mxu0 %v1844
        %1863 = vmatpush.msra.mxu0 %v1843
        %1864 = vmatpush.msra.mxu0 %v1842
        %1865 = vmatpush.msra.mxu0 %v1841
        %1866 = vmatpush.msra.mxu0 %v1840
        %1867 = vmatpush.msra.mxu0 %v1839
        %1868 = vmatpush.msra.mxu0 %v1838
        %1869 = vmatpush.msra.mxu0 %v1837
        %1870 = vmatpush.msra.mxu0 %v1836
        %1871 = vmatpush.msra.mxu0 %v1835
        %1872 = vmatmul.f32.gmra.mxu0 %v1832
        %v1873 = vpop.f32.mrf.mxu0
        %v1874 = vadd.f32 %v1854, %v1873
        %1875 = vmatmul.f32.gmra.mxu0 %v1833
        %v1876 = vpop.f32.mrf.mxu0
        %v1877 = vadd.f32 %v1854, %v1876
        %1878 = vdwg.mxu0
        %s1879 = scalar_lea.vmem [#allocation8], 128
        %v1880 = vld [vmem:[%s1879] sm:$0xff]
        %v1881 = vld [vmem:[%s1879 + $0x8] sm:$0xff]
        %v1882 = vld [vmem:[%s1879 + $0x10] sm:$0xff]
        %v1883 = vld [vmem:[%s1879 + $0x18] sm:$0xff]
        %v1884 = vld [vmem:[%s1879 + $0x20] sm:$0xff]
        %v1885 = vld [vmem:[%s1879 + $0x28] sm:$0xff]
        %v1886 = vld [vmem:[%s1879 + $0x30] sm:$0xff]
        %v1887 = vld [vmem:[%s1879 + $0x38] sm:$0xff]
        %v1888 = vld [vmem:[%s1879 + $0x40] sm:$0xff]
        %v1889 = vld [vmem:[%s1879 + $0x48] sm:$0xff]
        %v1890 = vld [vmem:[%s1879 + $0x50] sm:$0xff]
        %v1891 = vld [vmem:[%s1879 + $0x58] sm:$0xff]
        %v1892 = vld [vmem:[%s1879 + $0x60] sm:$0xff]
        %v1893 = vld [vmem:[%s1879 + $0x68] sm:$0xff]
        %v1894 = vld [vmem:[%s1879 + $0x70] sm:$0xff]
        %v1895 = vld [vmem:[%s1879 + $0x78] sm:$0xff]
        %s1896 = scalar_lea.vmem [#allocation10], 1
        %v1897 = vld [vmem:[%s1896] sm:$0x1]
        %v1899 = vperm.slane %v1897, 0
        %1901 = vmatpush.msra.mxu0 %v1895
        %1902 = vmatpush.msra.mxu0 %v1894
        %1903 = vmatpush.msra.mxu0 %v1893
        %1904 = vmatpush.msra.mxu0 %v1892
        %1905 = vmatpush.msra.mxu0 %v1891
        %1906 = vmatpush.msra.mxu0 %v1890
        %1907 = vmatpush.msra.mxu0 %v1889
        %1908 = vmatpush.msra.mxu0 %v1888
        %1909 = vmatpush.msra.mxu0 %v1887
        %1910 = vmatpush.msra.mxu0 %v1886
        %1911 = vmatpush.msra.mxu0 %v1885
        %1912 = vmatpush.msra.mxu0 %v1884
        %1913 = vmatpush.msra.mxu0 %v1883
        %1914 = vmatpush.msra.mxu0 %v1882
        %1915 = vmatpush.msra.mxu0 %v1881
        %1916 = vmatpush.msra.mxu0 %v1880
        %1917 = vmatmul.f32.gmra.mxu0 %v1832
        %v1918 = vpop.f32.mrf.mxu0
        %v1919 = vadd.f32 %v1899, %v1918
        %1920 = vmatmul.f32.gmra.mxu0 %v1833
        %v1921 = vpop.f32.mrf.mxu0
        %v1922 = vadd.f32 %v1899, %v1921
        %1923 = vdwg.mxu0
        %s1924 = scalar_lea.vmem [#allocation11], 128
        %v1925 = vld [vmem:[%s1924] sm:$0xff]
        %v1926 = vld [vmem:[%s1924 + $0x8] sm:$0xff]
        %v1927 = vld [vmem:[%s1924 + $0x10] sm:$0xff]
        %v1928 = vld [vmem:[%s1924 + $0x18] sm:$0xff]
        %v1929 = vld [vmem:[%s1924 + $0x20] sm:$0xff]
        %v1930 = vld [vmem:[%s1924 + $0x28] sm:$0xff]
        %v1931 = vld [vmem:[%s1924 + $0x30] sm:$0xff]
        %v1932 = vld [vmem:[%s1924 + $0x38] sm:$0xff]
        %v1933 = vld [vmem:[%s1924 + $0x40] sm:$0xff]
        %v1934 = vld [vmem:[%s1924 + $0x48] sm:$0xff]
        %v1935 = vld [vmem:[%s1924 + $0x50] sm:$0xff]
        %v1936 = vld [vmem:[%s1924 + $0x58] sm:$0xff]
        %v1937 = vld [vmem:[%s1924 + $0x60] sm:$0xff]
        %v1938 = vld [vmem:[%s1924 + $0x68] sm:$0xff]
        %v1939 = vld [vmem:[%s1924 + $0x70] sm:$0xff]
        %v1940 = vld [vmem:[%s1924 + $0x78] sm:$0xff]
        %s1941 = scalar_lea.vmem [#allocation13], 1
        %v1942 = vld [vmem:[%s1941] sm:$0x1]
        %v1944 = vperm.slane %v1942, 0
        %1946 = vmatpush.msra.mxu0 %v1940
        %1947 = vmatpush.msra.mxu0 %v1939
        %1948 = vmatpush.msra.mxu0 %v1938
        %1949 = vmatpush.msra.mxu0 %v1937
        %1950 = vmatpush.msra.mxu0 %v1936
        %1951 = vmatpush.msra.mxu0 %v1935
        %1952 = vmatpush.msra.mxu0 %v1934
        %1953 = vmatpush.msra.mxu0 %v1933
        %1954 = vmatpush.msra.mxu0 %v1932
        %1955 = vmatpush.msra.mxu0 %v1931
        %1956 = vmatpush.msra.mxu0 %v1930
        %1957 = vmatpush.msra.mxu0 %v1929
        %1958 = vmatpush.msra.mxu0 %v1928
        %1959 = vmatpush.msra.mxu0 %v1927
        %1960 = vmatpush.msra.mxu0 %v1926
        %1961 = vmatpush.msra.mxu0 %v1925
        %1962 = vmatmul.f32.gmra.mxu0 %v1830
        %v1963 = vpop.f32.mrf.mxu0
        %v1964 = vadd.f32 %v1944, %v1963
        %1965 = vmatmul.f32.gmra.mxu0 %v1831
        %v1966 = vpop.f32.mrf.mxu0
        %v1967 = vadd.f32 %v1944, %v1966
        %1968 = vdwg.mxu0
        %v1969 = vmul.f32 %v1874, 0.17677669
        %v1970 = vmul.f32 %v1877, 0.17677669
        %v1972 = vsel %vm923, %v1969, 0
        %v1975 = vsel %vm923, %v1970, 0
        %v1978 = vsel %vm923, %v1919, 0
        %v1981 = vsel %vm923, %v1922, 0
        %1983 = vmatpush.xpose.msra.mxu0 0.0
        %1984 = vmatpush.xpose.msra.mxu0 0.0
        %1985 = vmatpush.xpose.msra.mxu0 0.0
        %1986 = vmatpush.xpose.msra.mxu0 0.0
        %1987 = vmatpush.xpose.msra.mxu0 0.0
        %1988 = vmatpush.xpose.msra.mxu0 0.0
        %1989 = vmatpush.xpose.msra.mxu0 0.0
        %1990 = vmatpush.xpose.msra.mxu0 0.0
        %1991 = vmatpush.xpose.msra.mxu0 0.0
        %1992 = vmatpush.xpose.msra.mxu0 0.0
        %1993 = vmatpush.xpose.msra.mxu0 0.0
        %1994 = vmatpush.xpose.msra.mxu0 0.0
        %1995 = vmatpush.xpose.msra.mxu0 0.0
        %1996 = vmatpush.xpose.msra.mxu0 0.0
        %1997 = vmatpush.xpose.msra.mxu0 %v1981
        %1998 = vmatpush.xpose.msra.mxu0 %v1978
        %1999 = vmatmul.f32.gmra.mxu0 %v1972
        %v2000 = vpop.f32.mrf.mxu0
        %v2001 = vadd.f32 0.0, %v2000
        %2002 = vmatmul.f32.gmra.mxu0 %v1975
        %v2003 = vpop.f32.mrf.mxu0
        %v2004 = vadd.f32 0.0, %v2003
        %2005 = vdwg.mxu0
        %v2006 = vsel %vm959, %v2001, -inf
        %2007 = vmax.xlane.f32.xlu0 %v2006
        %v2008 = vpop.xlane.xlu0 %2007
        %v2009 = vsel %vm959, %v2004, -inf
        %2010 = vmax.xlane.f32.xlu0 %v2009
        %v2011 = vpop.xlane.xlu0 %2010
        %v2012 = vsub.f32 %v2001, %v2008
        %v2013 = vsub.f32 %v2004, %v2011
        %v2014 = vmul.f32 %v2012, 1.442695
        %v2015 = vpow.pop %v2014
        %v2016 = vmul.f32 %v2013, 1.442695
        %v2017 = vpow.pop %v2016
        %v2018 = vsel %vm959, %v2015, 0.0
        %2019 = vadd.xlane.f32.xlu0 %v2018
        %v2020 = vpop.xlane.xlu0 %2019
        %v2021 = vsel %vm959, %v2017, 0.0
        %2022 = vadd.xlane.f32.xlu0 %v2021
        %v2023 = vpop.xlane.xlu0 %2022
        %v2024 = vrcp.pop %v2020
        %v2025 = vmul.f32 %v2020, %v2024
        %v2026 = vsub.f32 1.0, %v2025
        %v2027 = vmul.f32 %v2024, %v2026
        %v2028 = vadd.f32 %v2024, %v2027
        %vm2029 = vweird.f32 %v2020
        %vm2030 = vweird.f32 %v2024
        %vm2031 = vmor %vm2029, %vm2030
        %v2032 = vsel %vm2031, %v2024, %v2028
        %v2033 = vand.u32 2147483647, %v2020
        %vm2034 = vcmp.eq.f32.partialorder %v2033, 8.507059e+37
        %v2035 = vand.u32 %v2020, 2147483648
        %v2036 = vor.u32 1.1754944e-38, %v2035
        %v2037 = vsel %vm2034, %v2036, %v2032
        %v2038 = vmul.f32 %v2015, %v2037
        %v2039 = vrcp.pop %v2023
        %v2040 = vmul.f32 %v2023, %v2039
        %v2041 = vsub.f32 1.0, %v2040
        %v2042 = vmul.f32 %v2039, %v2041
        %v2043 = vadd.f32 %v2039, %v2042
        %vm2044 = vweird.f32 %v2023
        %vm2045 = vweird.f32 %v2039
        %vm2046 = vmor %vm2044, %vm2045
        %v2047 = vsel %vm2046, %v2039, %v2043
        %v2048 = vand.u32 2147483647, %v2023
        %vm2049 = vcmp.eq.f32.partialorder %v2048, 8.507059e+37
        %v2050 = vand.u32 %v2023, 2147483648
        %v2051 = vor.u32 1.1754944e-38, %v2050
        %v2052 = vsel %vm2049, %v2051, %v2047
        %v2053 = vmul.f32 %v2017, %v2052
        %v2055 = vsel %vm959, %v2038, 0
        %v2058 = vsel %vm959, %v2053, 0
        %2060 = vmatpush.msra.mxu0 0.0
        %2061 = vmatpush.msra.mxu0 0.0
        %2062 = vmatpush.msra.mxu0 0.0
        %2063 = vmatpush.msra.mxu0 0.0
        %2064 = vmatpush.msra.mxu0 0.0
        %2065 = vmatpush.msra.mxu0 0.0
        %2066 = vmatpush.msra.mxu0 0.0
        %2067 = vmatpush.msra.mxu0 0.0
        %2068 = vmatpush.msra.mxu0 0.0
        %2069 = vmatpush.msra.mxu0 0.0
        %2070 = vmatpush.msra.mxu0 0.0
        %2071 = vmatpush.msra.mxu0 0.0
        %2072 = vmatpush.msra.mxu0 0.0
        %2073 = vmatpush.msra.mxu0 0.0
        %2074 = vmatpush.msra.mxu0 %v1967
        %2075 = vmatpush.msra.mxu0 %v1964
        %2076 = vmatmul.f32.gmra.mxu0 %v2055
        %v2077 = vpop.f32.mrf.mxu0
        %v2078 = vadd.f32 0.0, %v2077
        %2079 = vmatmul.f32.gmra.mxu0 %v2058
        %v2080 = vpop.f32.mrf.mxu0
        %v2081 = vadd.f32 0.0, %v2080
        %2082 = vdwg.mxu0
        %s2083 = scalar_lea.vmem [#allocation14], 128
        %v2084 = vld [vmem:[%s2083] sm:$0xff]
        %v2085 = vld [vmem:[%s2083 + $0x8] sm:$0xff]
        %v2086 = vld [vmem:[%s2083 + $0x10] sm:$0xff]
        %v2087 = vld [vmem:[%s2083 + $0x18] sm:$0xff]
        %2088 = vrot.lane.b32.xlu0 %v1969, 96
        %v2089 = vpop.permute.xlu0 %2088
        %2090 = vrot.lane.b32.xlu0 %v1970, 96
        %v2091 = vpop.permute.xlu0 %2090
        %2092 = vrot.lane.b32.xlu0 %v1919, 96
        %v2093 = vpop.permute.xlu0 %2092
        %2094 = vrot.lane.b32.xlu0 %v1922, 96
        %v2095 = vpop.permute.xlu0 %2094
        %v2096 = vsel %vm923, %v2089, 0
        %v2098 = vsel %vm923, %v2091, 0
        %v2100 = vsel %vm923, %v2093, 0
        %v2102 = vsel %vm923, %v2095, 0
        %2104 = vmatpush.xpose.msra.mxu0 0.0
        %2105 = vmatpush.xpose.msra.mxu0 0.0
        %2106 = vmatpush.xpose.msra.mxu0 0.0
        %2107 = vmatpush.xpose.msra.mxu0 0.0
        %2108 = vmatpush.xpose.msra.mxu0 0.0
        %2109 = vmatpush.xpose.msra.mxu0 0.0
        %2110 = vmatpush.xpose.msra.mxu0 0.0
        %2111 = vmatpush.xpose.msra.mxu0 0.0
        %2112 = vmatpush.xpose.msra.mxu0 0.0
        %2113 = vmatpush.xpose.msra.mxu0 0.0
        %2114 = vmatpush.xpose.msra.mxu0 0.0
        %2115 = vmatpush.xpose.msra.mxu0 0.0
        %2116 = vmatpush.xpose.msra.mxu0 0.0
        %2117 = vmatpush.xpose.msra.mxu0 0.0
        %2118 = vmatpush.xpose.msra.mxu0 %v2102
        %2119 = vmatpush.xpose.msra.mxu0 %v2100
        %2120 = vmatmul.f32.gmra.mxu0 %v2096
        %v2121 = vpop.f32.mrf.mxu0
        %v2122 = vadd.f32 0.0, %v2121
        %2123 = vmatmul.f32.gmra.mxu0 %v2098
        %v2124 = vpop.f32.mrf.mxu0
        %v2125 = vadd.f32 0.0, %v2124
        %2126 = vdwg.mxu0
        %v2127 = vsel %vm959, %v2122, -inf
        %2128 = vmax.xlane.f32.xlu0 %v2127
        %v2129 = vpop.xlane.xlu0 %2128
        %v2130 = vsel %vm959, %v2125, -inf
        %2131 = vmax.xlane.f32.xlu0 %v2130
        %v2132 = vpop.xlane.xlu0 %2131
        %v2133 = vsub.f32 %v2122, %v2129
        %v2134 = vsub.f32 %v2125, %v2132
        %v2135 = vmul.f32 %v2133, 1.442695
        %v2136 = vpow.pop %v2135
        %v2137 = vmul.f32 %v2134, 1.442695
        %v2138 = vpow.pop %v2137
        %v2139 = vsel %vm959, %v2136, 0.0
        %2140 = vadd.xlane.f32.xlu0 %v2139
        %v2141 = vpop.xlane.xlu0 %2140
        %v2142 = vsel %vm959, %v2138, 0.0
        %2143 = vadd.xlane.f32.xlu0 %v2142
        %v2144 = vpop.xlane.xlu0 %2143
        %v2145 = vrcp.pop %v2141
        %v2146 = vmul.f32 %v2141, %v2145
        %v2147 = vsub.f32 1.0, %v2146
        %v2148 = vmul.f32 %v2145, %v2147
        %v2149 = vadd.f32 %v2145, %v2148
        %vm2150 = vweird.f32 %v2141
        %vm2151 = vweird.f32 %v2145
        %vm2152 = vmor %vm2150, %vm2151
        %v2153 = vsel %vm2152, %v2145, %v2149
        %v2154 = vand.u32 2147483647, %v2141
        %vm2155 = vcmp.eq.f32.partialorder %v2154, 8.507059e+37
        %v2156 = vand.u32 %v2141, 2147483648
        %v2157 = vor.u32 1.1754944e-38, %v2156
        %v2158 = vsel %vm2155, %v2157, %v2153
        %v2159 = vmul.f32 %v2136, %v2158
        %v2160 = vrcp.pop %v2144
        %v2161 = vmul.f32 %v2144, %v2160
        %v2162 = vsub.f32 1.0, %v2161
        %v2163 = vmul.f32 %v2160, %v2162
        %v2164 = vadd.f32 %v2160, %v2163
        %vm2165 = vweird.f32 %v2144
        %vm2166 = vweird.f32 %v2160
        %vm2167 = vmor %vm2165, %vm2166
        %v2168 = vsel %vm2167, %v2160, %v2164
        %v2169 = vand.u32 2147483647, %v2144
        %vm2170 = vcmp.eq.f32.partialorder %v2169, 8.507059e+37
        %v2171 = vand.u32 %v2144, 2147483648
        %v2172 = vor.u32 1.1754944e-38, %v2171
        %v2173 = vsel %vm2170, %v2172, %v2168
        %v2174 = vmul.f32 %v2138, %v2173
        %2177 = vrot.lane.b32.xlu0 %v1964, 96
        %v2178 = vpop.permute.xlu0 %2177
        %2179 = vrot.lane.b32.xlu0 %v1967, 96
        %v2180 = vpop.permute.xlu0 %2179
        %v2184 = vsel %vm959, %v2159, 0
        %v2187 = vsel %vm959, %v2174, 0
        %2189 = vmatpush.msra.mxu0 0.0
        %2190 = vmatpush.msra.mxu0 0.0
        %2191 = vmatpush.msra.mxu0 0.0
        %2192 = vmatpush.msra.mxu0 0.0
        %2193 = vmatpush.msra.mxu0 0.0
        %2194 = vmatpush.msra.mxu0 0.0
        %2195 = vmatpush.msra.mxu0 0.0
        %2196 = vmatpush.msra.mxu0 0.0
        %2197 = vmatpush.msra.mxu0 0.0
        %2198 = vmatpush.msra.mxu0 0.0
        %2199 = vmatpush.msra.mxu0 0.0
        %2200 = vmatpush.msra.mxu0 0.0
        %2201 = vmatpush.msra.mxu0 0.0
        %2202 = vmatpush.msra.mxu0 0.0
        %2203 = vmatpush.msra.mxu0 %v2180
        %2204 = vmatpush.msra.mxu0 %v2178
        %2205 = vmatmul.f32.gmra.mxu0 %v2184
        %v2206 = vpop.f32.mrf.mxu0
        %v2207 = vadd.f32 0.0, %v2206
        %2208 = vmatmul.f32.gmra.mxu0 %v2187
        %v2209 = vpop.f32.mrf.mxu0
        %v2210 = vadd.f32 0.0, %v2209
        %2211 = vdwg.mxu0
        %v2212 = vld [vmem:[%s2083 + $0x20] sm:$0xff]
        %v2213 = vld [vmem:[%s2083 + $0x28] sm:$0xff]
        %v2214 = vld [vmem:[%s2083 + $0x30] sm:$0xff]
        %v2215 = vld [vmem:[%s2083 + $0x38] sm:$0xff]
        %v2217 = vsel %vm923, %v2207, 0
        %v2220 = vsel %vm923, %v2210, 0
        %2222 = vmatpush.msra.mxu0 0.0
        %2223 = vmatpush.msra.mxu0 0.0
        %2224 = vmatpush.msra.mxu0 0.0
        %2225 = vmatpush.msra.mxu0 0.0
        %2226 = vmatpush.msra.mxu0 0.0
        %2227 = vmatpush.msra.mxu0 0.0
        %2228 = vmatpush.msra.mxu0 0.0
        %2229 = vmatpush.msra.mxu0 0.0
        %2230 = vmatpush.msra.mxu0 0.0
        %2231 = vmatpush.msra.mxu0 0.0
        %2232 = vmatpush.msra.mxu0 0.0
        %2233 = vmatpush.msra.mxu0 0.0
        %2234 = vmatpush.msra.mxu0 %v2215
        %2235 = vmatpush.msra.mxu0 %v2214
        %2236 = vmatpush.msra.mxu0 %v2213
        %2237 = vmatpush.msra.mxu0 %v2212
        %2238 = vmatmul.f32.gmra.mxu0 %v2217
        %v2239 = vpop.f32.mrf.mxu0
        %v2240 = vadd.f32 0.0, %v2239
        %2241 = vmatmul.f32.gmra.mxu0 %v2220
        %v2242 = vpop.f32.mrf.mxu0
        %v2243 = vadd.f32 0.0, %v2242
        %2244 = vdwg.mxu0
        %v2246 = vsel %vm923, %v2078, 0
        %v2249 = vsel %vm923, %v2081, 0
        %2251 = vmatpush.msra.mxu0 0.0
        %2252 = vmatpush.msra.mxu0 0.0
        %2253 = vmatpush.msra.mxu0 0.0
        %2254 = vmatpush.msra.mxu0 0.0
        %2255 = vmatpush.msra.mxu0 0.0
        %2256 = vmatpush.msra.mxu0 0.0
        %2257 = vmatpush.msra.mxu0 0.0
        %2258 = vmatpush.msra.mxu0 0.0
        %2259 = vmatpush.msra.mxu0 0.0
        %2260 = vmatpush.msra.mxu0 0.0
        %2261 = vmatpush.msra.mxu0 0.0
        %2262 = vmatpush.msra.mxu0 0.0
        %2263 = vmatpush.msra.mxu0 %v2087
        %2264 = vmatpush.msra.mxu0 %v2086
        %2265 = vmatpush.msra.mxu0 %v2085
        %2266 = vmatpush.msra.mxu0 %v2084
        %2267 = vmatmul.f32.gmra.mxu0 %v2246
        %v2268 = vpop.f32.mrf.mxu0
        %v2269 = vadd.f32 %v2240, %v2268
        %2270 = vmatmul.f32.gmra.mxu0 %v2249
        %v2271 = vpop.f32.mrf.mxu0
        %v2272 = vadd.f32 %v2243, %v2271
        %2273 = vdwg.mxu0
        %2274 = vrot.lane.b32.xlu0 %v1969, 64
        %v2275 = vpop.permute.xlu0 %2274
        %2276 = vrot.lane.b32.xlu0 %v1970, 64
        %v2277 = vpop.permute.xlu0 %2276
        %2278 = vrot.lane.b32.xlu0 %v1919, 64
        %v2279 = vpop.permute.xlu0 %2278
        %2280 = vrot.lane.b32.xlu0 %v1922, 64
        %v2281 = vpop.permute.xlu0 %2280
        %v2282 = vsel %vm923, %v2275, 0
        %v2284 = vsel %vm923, %v2277, 0
        %v2286 = vsel %vm923, %v2279, 0
        %v2288 = vsel %vm923, %v2281, 0
        %2290 = vmatpush.xpose.msra.mxu0 0.0
        %2291 = vmatpush.xpose.msra.mxu0 0.0
        %2292 = vmatpush.xpose.msra.mxu0 0.0
        %2293 = vmatpush.xpose.msra.mxu0 0.0
        %2294 = vmatpush.xpose.msra.mxu0 0.0
        %2295 = vmatpush.xpose.msra.mxu0 0.0
        %2296 = vmatpush.xpose.msra.mxu0 0.0
        %2297 = vmatpush.xpose.msra.mxu0 0.0
        %2298 = vmatpush.xpose.msra.mxu0 0.0
        %2299 = vmatpush.xpose.msra.mxu0 0.0
        %2300 = vmatpush.xpose.msra.mxu0 0.0
        %2301 = vmatpush.xpose.msra.mxu0 0.0
        %2302 = vmatpush.xpose.msra.mxu0 0.0
        %2303 = vmatpush.xpose.msra.mxu0 0.0
        %2304 = vmatpush.xpose.msra.mxu0 %v2288
        %2305 = vmatpush.xpose.msra.mxu0 %v2286
        %2306 = vmatmul.f32.gmra.mxu0 %v2282
        %v2307 = vpop.f32.mrf.mxu0
        %v2308 = vadd.f32 0.0, %v2307
        %2309 = vmatmul.f32.gmra.mxu0 %v2284
        %v2310 = vpop.f32.mrf.mxu0
        %v2311 = vadd.f32 0.0, %v2310
        %2312 = vdwg.mxu0
        %v2313 = vsel %vm959, %v2308, -inf
        %2314 = vmax.xlane.f32.xlu0 %v2313
        %v2315 = vpop.xlane.xlu0 %2314
        %v2316 = vsel %vm959, %v2311, -inf
        %2317 = vmax.xlane.f32.xlu0 %v2316
        %v2318 = vpop.xlane.xlu0 %2317
        %v2319 = vsub.f32 %v2308, %v2315
        %v2320 = vsub.f32 %v2311, %v2318
        %v2321 = vmul.f32 %v2319, 1.442695
        %v2322 = vpow.pop %v2321
        %v2323 = vmul.f32 %v2320, 1.442695
        %v2324 = vpow.pop %v2323
        %v2325 = vsel %vm959, %v2322, 0.0
        %2326 = vadd.xlane.f32.xlu0 %v2325
        %v2327 = vpop.xlane.xlu0 %2326
        %v2328 = vsel %vm959, %v2324, 0.0
        %2329 = vadd.xlane.f32.xlu0 %v2328
        %v2330 = vpop.xlane.xlu0 %2329
        %v2331 = vrcp.pop %v2327
        %v2332 = vmul.f32 %v2327, %v2331
        %v2333 = vsub.f32 1.0, %v2332
        %v2334 = vmul.f32 %v2331, %v2333
        %v2335 = vadd.f32 %v2331, %v2334
        %vm2336 = vweird.f32 %v2327
        %vm2337 = vweird.f32 %v2331
        %vm2338 = vmor %vm2336, %vm2337
        %v2339 = vsel %vm2338, %v2331, %v2335
        %v2340 = vand.u32 2147483647, %v2327
        %vm2341 = vcmp.eq.f32.partialorder %v2340, 8.507059e+37
        %v2342 = vand.u32 %v2327, 2147483648
        %v2343 = vor.u32 1.1754944e-38, %v2342
        %v2344 = vsel %vm2341, %v2343, %v2339
        %v2345 = vmul.f32 %v2322, %v2344
        %v2346 = vrcp.pop %v2330
        %v2347 = vmul.f32 %v2330, %v2346
        %v2348 = vsub.f32 1.0, %v2347
        %v2349 = vmul.f32 %v2346, %v2348
        %v2350 = vadd.f32 %v2346, %v2349
        %vm2351 = vweird.f32 %v2330
        %vm2352 = vweird.f32 %v2346
        %vm2353 = vmor %vm2351, %vm2352
        %v2354 = vsel %vm2353, %v2346, %v2350
        %v2355 = vand.u32 2147483647, %v2330
        %vm2356 = vcmp.eq.f32.partialorder %v2355, 8.507059e+37
        %v2357 = vand.u32 %v2330, 2147483648
        %v2358 = vor.u32 1.1754944e-38, %v2357
        %v2359 = vsel %vm2356, %v2358, %v2354
        %v2360 = vmul.f32 %v2324, %v2359
        %2361 = vrot.lane.b32.xlu0 %v1964, 64
        %v2362 = vpop.permute.xlu0 %2361
        %2363 = vrot.lane.b32.xlu0 %v1967, 64
        %v2364 = vpop.permute.xlu0 %2363
        %v2368 = vsel %vm959, %v2345, 0
        %v2371 = vsel %vm959, %v2360, 0
        %2373 = vmatpush.msra.mxu0 0.0
        %2374 = vmatpush.msra.mxu0 0.0
        %2375 = vmatpush.msra.mxu0 0.0
        %2376 = vmatpush.msra.mxu0 0.0
        %2377 = vmatpush.msra.mxu0 0.0
        %2378 = vmatpush.msra.mxu0 0.0
        %2379 = vmatpush.msra.mxu0 0.0
        %2380 = vmatpush.msra.mxu0 0.0
        %2381 = vmatpush.msra.mxu0 0.0
        %2382 = vmatpush.msra.mxu0 0.0
        %2383 = vmatpush.msra.mxu0 0.0
        %2384 = vmatpush.msra.mxu0 0.0
        %2385 = vmatpush.msra.mxu0 0.0
        %2386 = vmatpush.msra.mxu0 0.0
        %2387 = vmatpush.msra.mxu0 %v2364
        %2388 = vmatpush.msra.mxu0 %v2362
        %2389 = vmatmul.f32.gmra.mxu0 %v2368
        %v2390 = vpop.f32.mrf.mxu0
        %v2391 = vadd.f32 0.0, %v2390
        %2392 = vmatmul.f32.gmra.mxu0 %v2371
        %v2393 = vpop.f32.mrf.mxu0
        %v2394 = vadd.f32 0.0, %v2393
        %2395 = vdwg.mxu0
        %v2396 = vld [vmem:[%s2083 + $0x40] sm:$0xff]
        %v2397 = vld [vmem:[%s2083 + $0x48] sm:$0xff]
        %v2398 = vld [vmem:[%s2083 + $0x50] sm:$0xff]
        %v2399 = vld [vmem:[%s2083 + $0x58] sm:$0xff]
        %v2401 = vsel %vm923, %v2391, 0
        %v2404 = vsel %vm923, %v2394, 0
        %2406 = vmatpush.msra.mxu0 0.0
        %2407 = vmatpush.msra.mxu0 0.0
        %2408 = vmatpush.msra.mxu0 0.0
        %2409 = vmatpush.msra.mxu0 0.0
        %2410 = vmatpush.msra.mxu0 0.0
        %2411 = vmatpush.msra.mxu0 0.0
        %2412 = vmatpush.msra.mxu0 0.0
        %2413 = vmatpush.msra.mxu0 0.0
        %2414 = vmatpush.msra.mxu0 0.0
        %2415 = vmatpush.msra.mxu0 0.0
        %2416 = vmatpush.msra.mxu0 0.0
        %2417 = vmatpush.msra.mxu0 0.0
        %2418 = vmatpush.msra.mxu0 %v2399
        %2419 = vmatpush.msra.mxu0 %v2398
        %2420 = vmatpush.msra.mxu0 %v2397
        %2421 = vmatpush.msra.mxu0 %v2396
        %2422 = vmatmul.f32.gmra.mxu0 %v2401
        %v2423 = vpop.f32.mrf.mxu0
        %v2424 = vadd.f32 0.0, %v2423
        %2425 = vmatmul.f32.gmra.mxu0 %v2404
        %v2426 = vpop.f32.mrf.mxu0
        %v2427 = vadd.f32 0.0, %v2426
        %2428 = vdwg.mxu0
        %v2429 = vadd.f32 %v2269, %v2424
        %v2430 = vadd.f32 %v2272, %v2427
        %2431 = vrot.lane.b32.xlu0 %v1969, 32
        %v2432 = vpop.permute.xlu0 %2431
        %2433 = vrot.lane.b32.xlu0 %v1970, 32
        %v2434 = vpop.permute.xlu0 %2433
        %2435 = vrot.lane.b32.xlu0 %v1919, 32
        %v2436 = vpop.permute.xlu0 %2435
        %2437 = vrot.lane.b32.xlu0 %v1922, 32
        %v2438 = vpop.permute.xlu0 %2437
        %v2439 = vsel %vm923, %v2432, 0
        %v2441 = vsel %vm923, %v2434, 0
        %v2443 = vsel %vm923, %v2436, 0
        %v2445 = vsel %vm923, %v2438, 0
        %2447 = vmatpush.xpose.msra.mxu0 0.0
        %2448 = vmatpush.xpose.msra.mxu0 0.0
        %2449 = vmatpush.xpose.msra.mxu0 0.0
        %2450 = vmatpush.xpose.msra.mxu0 0.0
        %2451 = vmatpush.xpose.msra.mxu0 0.0
        %2452 = vmatpush.xpose.msra.mxu0 0.0
        %2453 = vmatpush.xpose.msra.mxu0 0.0
        %2454 = vmatpush.xpose.msra.mxu0 0.0
        %2455 = vmatpush.xpose.msra.mxu0 0.0
        %2456 = vmatpush.xpose.msra.mxu0 0.0
        %2457 = vmatpush.xpose.msra.mxu0 0.0
        %2458 = vmatpush.xpose.msra.mxu0 0.0
        %2459 = vmatpush.xpose.msra.mxu0 0.0
        %2460 = vmatpush.xpose.msra.mxu0 0.0
        %2461 = vmatpush.xpose.msra.mxu0 %v2445
        %2462 = vmatpush.xpose.msra.mxu0 %v2443
        %2463 = vmatmul.f32.gmra.mxu0 %v2439
        %v2464 = vpop.f32.mrf.mxu0
        %v2465 = vadd.f32 0.0, %v2464
        %2466 = vmatmul.f32.gmra.mxu0 %v2441
        %v2467 = vpop.f32.mrf.mxu0
        %v2468 = vadd.f32 0.0, %v2467
        %2469 = vdwg.mxu0
        %v2470 = vsel %vm959, %v2465, -inf
        %2471 = vmax.xlane.f32.xlu0 %v2470
        %v2472 = vpop.xlane.xlu0 %2471
        %v2473 = vsel %vm959, %v2468, -inf
        %2474 = vmax.xlane.f32.xlu0 %v2473
        %v2475 = vpop.xlane.xlu0 %2474
        %v2476 = vsub.f32 %v2465, %v2472
        %v2477 = vsub.f32 %v2468, %v2475
        %v2478 = vmul.f32 %v2476, 1.442695
        %v2479 = vpow.pop %v2478
        %v2480 = vmul.f32 %v2477, 1.442695
        %v2481 = vpow.pop %v2480
        %v2482 = vsel %vm959, %v2479, 0.0
        %2483 = vadd.xlane.f32.xlu0 %v2482
        %v2484 = vpop.xlane.xlu0 %2483
        %v2485 = vsel %vm959, %v2481, 0.0
        %2486 = vadd.xlane.f32.xlu0 %v2485
        %v2487 = vpop.xlane.xlu0 %2486
        %v2488 = vrcp.pop %v2484
        %v2489 = vmul.f32 %v2484, %v2488
        %v2490 = vsub.f32 1.0, %v2489
        %v2491 = vmul.f32 %v2488, %v2490
        %v2492 = vadd.f32 %v2488, %v2491
        %vm2493 = vweird.f32 %v2484
        %vm2494 = vweird.f32 %v2488
        %vm2495 = vmor %vm2493, %vm2494
        %v2496 = vsel %vm2495, %v2488, %v2492
        %v2497 = vand.u32 2147483647, %v2484
        %vm2498 = vcmp.eq.f32.partialorder %v2497, 8.507059e+37
        %v2499 = vand.u32 %v2484, 2147483648
        %v2500 = vor.u32 1.1754944e-38, %v2499
        %v2501 = vsel %vm2498, %v2500, %v2496
        %v2502 = vmul.f32 %v2479, %v2501
        %v2503 = vrcp.pop %v2487
        %v2504 = vmul.f32 %v2487, %v2503
        %v2505 = vsub.f32 1.0, %v2504
        %v2506 = vmul.f32 %v2503, %v2505
        %v2507 = vadd.f32 %v2503, %v2506
        %vm2508 = vweird.f32 %v2487
        %vm2509 = vweird.f32 %v2503
        %vm2510 = vmor %vm2508, %vm2509
        %v2511 = vsel %vm2510, %v2503, %v2507
        %v2512 = vand.u32 2147483647, %v2487
        %vm2513 = vcmp.eq.f32.partialorder %v2512, 8.507059e+37
        %v2514 = vand.u32 %v2487, 2147483648
        %v2515 = vor.u32 1.1754944e-38, %v2514
        %v2516 = vsel %vm2513, %v2515, %v2511
        %v2517 = vmul.f32 %v2481, %v2516
        %2518 = vrot.lane.b32.xlu0 %v1964, 32
        %v2519 = vpop.permute.xlu0 %2518
        %2520 = vrot.lane.b32.xlu0 %v1967, 32
        %v2521 = vpop.permute.xlu0 %2520
        %v2525 = vsel %vm959, %v2502, 0
        %v2528 = vsel %vm959, %v2517, 0
        %2530 = vmatpush.msra.mxu0 0.0
        %2531 = vmatpush.msra.mxu0 0.0
        %2532 = vmatpush.msra.mxu0 0.0
        %2533 = vmatpush.msra.mxu0 0.0
        %2534 = vmatpush.msra.mxu0 0.0
        %2535 = vmatpush.msra.mxu0 0.0
        %2536 = vmatpush.msra.mxu0 0.0
        %2537 = vmatpush.msra.mxu0 0.0
        %2538 = vmatpush.msra.mxu0 0.0
        %2539 = vmatpush.msra.mxu0 0.0
        %2540 = vmatpush.msra.mxu0 0.0
        %2541 = vmatpush.msra.mxu0 0.0
        %2542 = vmatpush.msra.mxu0 0.0
        %2543 = vmatpush.msra.mxu0 0.0
        %2544 = vmatpush.msra.mxu0 %v2521
        %2545 = vmatpush.msra.mxu0 %v2519
        %2546 = vmatmul.f32.gmra.mxu0 %v2525
        %v2547 = vpop.f32.mrf.mxu0
        %v2548 = vadd.f32 0.0, %v2547
        %2549 = vmatmul.f32.gmra.mxu0 %v2528
        %v2550 = vpop.f32.mrf.mxu0
        %v2551 = vadd.f32 0.0, %v2550
        %2552 = vdwg.mxu0
        %v2553 = vld [vmem:[%s2083 + $0x60] sm:$0xff]
        %v2554 = vld [vmem:[%s2083 + $0x68] sm:$0xff]
        %v2555 = vld [vmem:[%s2083 + $0x70] sm:$0xff]
        %v2556 = vld [vmem:[%s2083 + $0x78] sm:$0xff]
        %v2558 = vsel %vm923, %v2548, 0
        %v2561 = vsel %vm923, %v2551, 0
        %2563 = vmatpush.msra.mxu0 0.0
        %2564 = vmatpush.msra.mxu0 0.0
        %2565 = vmatpush.msra.mxu0 0.0
        %2566 = vmatpush.msra.mxu0 0.0
        %2567 = vmatpush.msra.mxu0 0.0
        %2568 = vmatpush.msra.mxu0 0.0
        %2569 = vmatpush.msra.mxu0 0.0
        %2570 = vmatpush.msra.mxu0 0.0
        %2571 = vmatpush.msra.mxu0 0.0
        %2572 = vmatpush.msra.mxu0 0.0
        %2573 = vmatpush.msra.mxu0 0.0
        %2574 = vmatpush.msra.mxu0 0.0
        %2575 = vmatpush.msra.mxu0 %v2556
        %2576 = vmatpush.msra.mxu0 %v2555
        %2577 = vmatpush.msra.mxu0 %v2554
        %2578 = vmatpush.msra.mxu0 %v2553
        %2579 = vmatmul.f32.gmra.mxu0 %v2558
        %v2580 = vpop.f32.mrf.mxu0
        %v2581 = vadd.f32 0.0, %v2580
        %2582 = vmatmul.f32.gmra.mxu0 %v2561
        %v2583 = vpop.f32.mrf.mxu0
        %v2584 = vadd.f32 0.0, %v2583
        %2585 = vdwg.mxu0
        %v2586 = vadd.f32 %v2429, %v2581
        %v2587 = vadd.f32 %v2430, %v2584
        %s2588 = scalar_lea.vmem %s9, 1
        %v2589 = vld [vmem:[%s2588] sm:$0x1]
        %v2591 = vperm.slane %v2589, 0
        %v2593 = vadd.f32 %v2586, %v2591
        %v2594 = vadd.f32 %v2587, %v2591
        %v2595 = vadd.f32 %v1830, %v2593
        %v2596 = vadd.f32 %v1831, %v2594
        %s2597 = scalar_lea.vmem [#allocation16], 1
        %v2598 = vld [vmem:[%s2597] sm:$0x1]
        %s2599 = scalar_lea.vmem %s11, 1
        %v2600 = vld [vmem:[%s2599] sm:$0x1]
        %2601 = vadd.xlane.f32.xlu0 %v2595
        %v2602 = vpop.xlane.xlu0 %2601
        %2603 = vadd.xlane.f32.xlu0 %v2596
        %v2604 = vpop.xlane.xlu0 %2603
        %v2605 = vmul.f32 %v2602, %v1561
        %v2606 = vmul.f32 %v2604, %v1561
        %v2607 = vsub.f32 %v2595, %v2605
        %v2608 = vsub.f32 %v2596, %v2606
        %v2609 = vmul.f32 %v2607, %v2607
        %v2610 = vmul.f32 %v2608, %v2608
        %2611 = vadd.xlane.f32.xlu0 %v2609
        %v2612 = vpop.xlane.xlu0 %2611
        %2613 = vadd.xlane.f32.xlu0 %v2610
        %v2614 = vpop.xlane.xlu0 %2613
        %v2615 = vmul.f32 %v2612, %v1561
        %v2616 = vmul.f32 %v2614, %v1561
        %v2617 = vadd.f32 %v2615, 1e-05
        %v2618 = vadd.f32 %v2616, 1e-05
        %v2619 = vrsqrt.pop %v2617
        %v2620 = vmul.f32 %v2619, %v2617
        %v2621 = vmul.f32 %v2620, %v2619
        %v2622 = vmul.f32 0.5, %v2621
        %v2623 = vsub.f32 1.5, %v2622
        %v2624 = vmul.f32 %v2619, %v2623
        %vm2625 = vweird.f32 %v2617
        %vm2626 = vweird.f32 %v2619
        %vm2627 = vmor %vm2625, %vm2626
        %v2628 = vsel %vm2627, %v2619, %v2624
        %v2629 = vrsqrt.pop %v2618
        %v2630 = vmul.f32 %v2629, %v2618
        %v2631 = vmul.f32 %v2630, %v2629
        %v2632 = vmul.f32 0.5, %v2631
        %v2633 = vsub.f32 1.5, %v2632
        %v2634 = vmul.f32 %v2629, %v2633
        %vm2635 = vweird.f32 %v2618
        %vm2636 = vweird.f32 %v2629
        %vm2637 = vmor %vm2635, %vm2636
        %v2638 = vsel %vm2637, %v2629, %v2634
        %v2639 = vmul.f32 %v2607, %v2628
        %v2640 = vmul.f32 %v2608, %v2638
        %v2642 = vperm.slane %v2598, 0
        %v2644 = vmul.f32 %v2639, %v2642
        %v2645 = vmul.f32 %v2640, %v2642
        %v2647 = vperm.slane %v2600, 0
        %v2649 = vadd.f32 %v2644, %v2647
        %v2650 = vadd.f32 %v2645, %v2647
        %s2651 = scalar_lea.vmem [#allocation17], 256
        %v2652 = vld [vmem:[%s2651] sm:$0xff]
        %v2653 = vld [vmem:[%s2651 + $0x8] sm:$0xff]
        %v2654 = vld [vmem:[%s2651 + $0x10] sm:$0xff]
        %v2655 = vld [vmem:[%s2651 + $0x18] sm:$0xff]
        %v2656 = vld [vmem:[%s2651 + $0x20] sm:$0xff]
        %v2657 = vld [vmem:[%s2651 + $0x28] sm:$0xff]
        %v2658 = vld [vmem:[%s2651 + $0x30] sm:$0xff]
        %v2659 = vld [vmem:[%s2651 + $0x38] sm:$0xff]
        %v2660 = vld [vmem:[%s2651 + $0x40] sm:$0xff]
        %v2661 = vld [vmem:[%s2651 + $0x48] sm:$0xff]
        %v2662 = vld [vmem:[%s2651 + $0x50] sm:$0xff]
        %v2663 = vld [vmem:[%s2651 + $0x58] sm:$0xff]
        %v2664 = vld [vmem:[%s2651 + $0x60] sm:$0xff]
        %v2665 = vld [vmem:[%s2651 + $0x68] sm:$0xff]
        %v2666 = vld [vmem:[%s2651 + $0x70] sm:$0xff]
        %v2667 = vld [vmem:[%s2651 + $0x78] sm:$0xff]
        %v2668 = vld [vmem:[%s2651 + $0x80] sm:$0xff]
        %v2669 = vld [vmem:[%s2651 + $0x88] sm:$0xff]
        %v2670 = vld [vmem:[%s2651 + $0x90] sm:$0xff]
        %v2671 = vld [vmem:[%s2651 + $0x98] sm:$0xff]
        %v2672 = vld [vmem:[%s2651 + $0xa0] sm:$0xff]
        %v2673 = vld [vmem:[%s2651 + $0xa8] sm:$0xff]
        %v2674 = vld [vmem:[%s2651 + $0xb0] sm:$0xff]
        %v2675 = vld [vmem:[%s2651 + $0xb8] sm:$0xff]
        %v2676 = vld [vmem:[%s2651 + $0xc0] sm:$0xff]
        %v2677 = vld [vmem:[%s2651 + $0xc8] sm:$0xff]
        %v2678 = vld [vmem:[%s2651 + $0xd0] sm:$0xff]
        %v2679 = vld [vmem:[%s2651 + $0xd8] sm:$0xff]
        %v2680 = vld [vmem:[%s2651 + $0xe0] sm:$0xff]
        %v2681 = vld [vmem:[%s2651 + $0xe8] sm:$0xff]
        %v2682 = vld [vmem:[%s2651 + $0xf0] sm:$0xff]
        %v2683 = vld [vmem:[%s2651 + $0xf8] sm:$0xff]
        %s2684 = scalar_lea.vmem %s13, 2
        %v2685 = vld [vmem:[%s2684] sm:$0x3]
        %v2687 = vperm.slane %v2685, 0
        %v2688 = vperm.slane %v2685, 1
        %2691 = vmatpush.msra.mxu0 %v2682
        %2692 = vmatpush.msra.mxu0 %v2680
        %2693 = vmatpush.msra.mxu0 %v2678
        %2694 = vmatpush.msra.mxu0 %v2676
        %2695 = vmatpush.msra.mxu0 %v2674
        %2696 = vmatpush.msra.mxu0 %v2672
        %2697 = vmatpush.msra.mxu0 %v2670
        %2698 = vmatpush.msra.mxu0 %v2668
        %2699 = vmatpush.msra.mxu0 %v2666
        %2700 = vmatpush.msra.mxu0 %v2664
        %2701 = vmatpush.msra.mxu0 %v2662
        %2702 = vmatpush.msra.mxu0 %v2660
        %2703 = vmatpush.msra.mxu0 %v2658
        %2704 = vmatpush.msra.mxu0 %v2656
        %2705 = vmatpush.msra.mxu0 %v2654
        %2706 = vmatpush.msra.mxu0 %v2652
        %2707 = vmatmul.f32.gmra.mxu0 %v2649
        %v2708 = vpop.f32.mrf.mxu0
        %v2709 = vadd.f32 %v2687, %v2708
        %2710 = vmatmul.f32.gmra.mxu0 %v2650
        %v2711 = vpop.f32.mrf.mxu0
        %v2712 = vadd.f32 %v2687, %v2711
        %2713 = vdwg.mxu0
        %2714 = vmatpush.msra.mxu0 %v2683
        %2715 = vmatpush.msra.mxu0 %v2681
        %2716 = vmatpush.msra.mxu0 %v2679
        %2717 = vmatpush.msra.mxu0 %v2677
        %2718 = vmatpush.msra.mxu0 %v2675
        %2719 = vmatpush.msra.mxu0 %v2673
        %2720 = vmatpush.msra.mxu0 %v2671
        %2721 = vmatpush.msra.mxu0 %v2669
        %2722 = vmatpush.msra.mxu0 %v2667
        %2723 = vmatpush.msra.mxu0 %v2665
        %2724 = vmatpush.msra.mxu0 %v2663
        %2725 = vmatpush.msra.mxu0 %v2661
        %2726 = vmatpush.msra.mxu0 %v2659
        %2727 = vmatpush.msra.mxu0 %v2657
        %2728 = vmatpush.msra.mxu0 %v2655
        %2729 = vmatpush.msra.mxu0 %v2653
        %2730 = vmatmul.f32.gmra.mxu0 %v2649
        %v2731 = vpop.f32.mrf.mxu0
        %v2732 = vadd.f32 %v2688, %v2731
        %2733 = vmatmul.f32.gmra.mxu0 %v2650
        %v2734 = vpop.f32.mrf.mxu0
        %v2735 = vadd.f32 %v2688, %v2734
        %2736 = vdwg.mxu0
        %v2737 = vmax.f32 %v2709, 0.0
        %v2738 = vmax.f32 %v2732, 0.0
        %v2739 = vmax.f32 %v2712, 0.0
        %v2740 = vmax.f32 %v2735, 0.0
        %s2741 = scalar_lea.vmem [#allocation19], 256
        %v2742 = vld [vmem:[%s2741] sm:$0xff]
        %v2743 = vld [vmem:[%s2741 + $0x8] sm:$0xff]
        %v2744 = vld [vmem:[%s2741 + $0x10] sm:$0xff]
        %v2745 = vld [vmem:[%s2741 + $0x18] sm:$0xff]
        %v2746 = vld [vmem:[%s2741 + $0x20] sm:$0xff]
        %v2747 = vld [vmem:[%s2741 + $0x28] sm:$0xff]
        %v2748 = vld [vmem:[%s2741 + $0x30] sm:$0xff]
        %v2749 = vld [vmem:[%s2741 + $0x38] sm:$0xff]
        %v2750 = vld [vmem:[%s2741 + $0x40] sm:$0xff]
        %v2751 = vld [vmem:[%s2741 + $0x48] sm:$0xff]
        %v2752 = vld [vmem:[%s2741 + $0x50] sm:$0xff]
        %v2753 = vld [vmem:[%s2741 + $0x58] sm:$0xff]
        %v2754 = vld [vmem:[%s2741 + $0x60] sm:$0xff]
        %v2755 = vld [vmem:[%s2741 + $0x68] sm:$0xff]
        %v2756 = vld [vmem:[%s2741 + $0x70] sm:$0xff]
        %v2757 = vld [vmem:[%s2741 + $0x78] sm:$0xff]
        %v2758 = vld [vmem:[%s2741 + $0x80] sm:$0xff]
        %v2759 = vld [vmem:[%s2741 + $0x88] sm:$0xff]
        %v2760 = vld [vmem:[%s2741 + $0x90] sm:$0xff]
        %v2761 = vld [vmem:[%s2741 + $0x98] sm:$0xff]
        %v2762 = vld [vmem:[%s2741 + $0xa0] sm:$0xff]
        %v2763 = vld [vmem:[%s2741 + $0xa8] sm:$0xff]
        %v2764 = vld [vmem:[%s2741 + $0xb0] sm:$0xff]
        %v2765 = vld [vmem:[%s2741 + $0xb8] sm:$0xff]
        %v2766 = vld [vmem:[%s2741 + $0xc0] sm:$0xff]
        %v2767 = vld [vmem:[%s2741 + $0xc8] sm:$0xff]
        %v2768 = vld [vmem:[%s2741 + $0xd0] sm:$0xff]
        %v2769 = vld [vmem:[%s2741 + $0xd8] sm:$0xff]
        %v2770 = vld [vmem:[%s2741 + $0xe0] sm:$0xff]
        %v2771 = vld [vmem:[%s2741 + $0xe8] sm:$0xff]
        %v2772 = vld [vmem:[%s2741 + $0xf0] sm:$0xff]
        %v2773 = vld [vmem:[%s2741 + $0xf8] sm:$0xff]
        %s2774 = scalar_lea.vmem %s15, 1
        %v2775 = vld [vmem:[%s2774] sm:$0x1]
        %v2777 = vperm.slane %v2775, 0
        %2779 = vmatpush.msra.mxu0 %v2757
        %2780 = vmatpush.msra.mxu0 %v2756
        %2781 = vmatpush.msra.mxu0 %v2755
        %2782 = vmatpush.msra.mxu0 %v2754
        %2783 = vmatpush.msra.mxu0 %v2753
        %2784 = vmatpush.msra.mxu0 %v2752
        %2785 = vmatpush.msra.mxu0 %v2751
        %2786 = vmatpush.msra.mxu0 %v2750
        %2787 = vmatpush.msra.mxu0 %v2749
        %2788 = vmatpush.msra.mxu0 %v2748
        %2789 = vmatpush.msra.mxu0 %v2747
        %2790 = vmatpush.msra.mxu0 %v2746
        %2791 = vmatpush.msra.mxu0 %v2745
        %2792 = vmatpush.msra.mxu0 %v2744
        %2793 = vmatpush.msra.mxu0 %v2743
        %2794 = vmatpush.msra.mxu0 %v2742
        %2795 = vmatmul.f32.gmra.mxu0 %v2737
        %v2796 = vpop.f32.mrf.mxu0
        %v2797 = vadd.f32 %v2777, %v2796
        %2798 = vmatmul.f32.gmra.mxu0 %v2739
        %v2799 = vpop.f32.mrf.mxu0
        %v2800 = vadd.f32 %v2777, %v2799
        %2801 = vdwg.mxu0
        %2802 = vmatpush.msra.mxu0 %v2773
        %2803 = vmatpush.msra.mxu0 %v2772
        %2804 = vmatpush.msra.mxu0 %v2771
        %2805 = vmatpush.msra.mxu0 %v2770
        %2806 = vmatpush.msra.mxu0 %v2769
        %2807 = vmatpush.msra.mxu0 %v2768
        %2808 = vmatpush.msra.mxu0 %v2767
        %2809 = vmatpush.msra.mxu0 %v2766
        %2810 = vmatpush.msra.mxu0 %v2765
        %2811 = vmatpush.msra.mxu0 %v2764
        %2812 = vmatpush.msra.mxu0 %v2763
        %2813 = vmatpush.msra.mxu0 %v2762
        %2814 = vmatpush.msra.mxu0 %v2761
        %2815 = vmatpush.msra.mxu0 %v2760
        %2816 = vmatpush.msra.mxu0 %v2759
        %2817 = vmatpush.msra.mxu0 %v2758
        %2818 = vmatmul.f32.gmra.mxu0 %v2738
        %v2819 = vpop.f32.mrf.mxu0
        %v2820 = vadd.f32 %v2797, %v2819
        %2821 = vmatmul.f32.gmra.mxu0 %v2740
        %v2822 = vpop.f32.mrf.mxu0
        %v2823 = vadd.f32 %v2800, %v2822
        %2824 = vdwg.mxu0
        %v2825 = vadd.f32 %v2649, %v2820
        %v2826 = vadd.f32 %v2650, %v2823
        %s2827 = scalar_lea.vmem %s16, 1
        %v2828 = vld [vmem:[%s2827] sm:$0x1]
        %s2829 = scalar_lea.vmem %s17, 1
        %v2830 = vld [vmem:[%s2829] sm:$0x1]
        %2831 = vadd.xlane.f32.xlu0 %v2825
        %v2832 = vpop.xlane.xlu0 %2831
        %2833 = vadd.xlane.f32.xlu0 %v2826
        %v2834 = vpop.xlane.xlu0 %2833
        %v2835 = vmul.f32 %v2832, %v1561
        %v2836 = vmul.f32 %v2834, %v1561
        %v2837 = vsub.f32 %v2825, %v2835
        %v2838 = vsub.f32 %v2826, %v2836
        %v2839 = vmul.f32 %v2837, %v2837
        %v2840 = vmul.f32 %v2838, %v2838
        %2841 = vadd.xlane.f32.xlu0 %v2839
        %v2842 = vpop.xlane.xlu0 %2841
        %2843 = vadd.xlane.f32.xlu0 %v2840
        %v2844 = vpop.xlane.xlu0 %2843
        %v2845 = vmul.f32 %v2842, %v1561
        %v2846 = vmul.f32 %v2844, %v1561
        %v2847 = vadd.f32 %v2845, 1e-05
        %v2848 = vadd.f32 %v2846, 1e-05
        %v2849 = vrsqrt.pop %v2847
        %v2850 = vmul.f32 %v2849, %v2847
        %v2851 = vmul.f32 %v2850, %v2849
        %v2852 = vmul.f32 0.5, %v2851
        %v2853 = vsub.f32 1.5, %v2852
        %v2854 = vmul.f32 %v2849, %v2853
        %vm2855 = vweird.f32 %v2847
        %vm2856 = vweird.f32 %v2849
        %vm2857 = vmor %vm2855, %vm2856
        %v2858 = vsel %vm2857, %v2849, %v2854
        %v2859 = vrsqrt.pop %v2848
        %v2860 = vmul.f32 %v2859, %v2848
        %v2861 = vmul.f32 %v2860, %v2859
        %v2862 = vmul.f32 0.5, %v2861
        %v2863 = vsub.f32 1.5, %v2862
        %v2864 = vmul.f32 %v2859, %v2863
        %vm2865 = vweird.f32 %v2848
        %vm2866 = vweird.f32 %v2859
        %vm2867 = vmor %vm2865, %vm2866
        %v2868 = vsel %vm2867, %v2859, %v2864
        %v2869 = vmul.f32 %v2837, %v2858
        %v2870 = vmul.f32 %v2838, %v2868
        %v2872 = vperm.slane %v2828, 0
        %v2874 = vmul.f32 %v2869, %v2872
        %v2875 = vmul.f32 %v2870, %v2872
        %v2877 = vperm.slane %v2830, 0
        %v2879 = vadd.f32 %v2874, %v2877
        %v2880 = vadd.f32 %v2875, %v2877
        %2881 = vst [vmem:[%s785] sm:$0xff] %v2879
        %2882 = vst [vmem:[%s785 + $0x8] sm:$0xff] %v2880
        %s2883 = sand.u32 %s438, 1
        %s2884 = scalar_lea.sflag [#allocation4], %s2883
        %s2885 = sand.u32 %s438, 1
        %s2886 = smul.addr %s2885, 16
        %s2887 = scalar_lea.vmem [#allocation20], %s2886
        // Predicated region
        $region137: #{tpu_custom_call.1} parent=91 // pred_check
          %p2888 = pneg %p448
        $region138: #{tpu_custom_call.1} parent=91 // pred_check_branch
          %2890 = sbr.rel (%p2888) target = $region140
        $region139: #{tpu_custom_call.1} parent=91 // pred_region
          %2892 = vsyncadd %s2884, 0
          %s2893 = smul.addr %s42, 2
          %s2894 = smul.addr %s2893, 8
          %s2895 = scalar_lea.hbm %s18, %s2894
          %s2896 = sshll.u32 %s2887, 4
          %s2897 = int_to_ptr.vmem [resolvable:$true] %s2896
          %s2898 = sshll.u32 %s2895, 4
          %s2899 = int_to_ptr.hbm [resolvable:$true] %s2898
          %2904 = dma.vmem_to_hbm [thread:$0]  %s2897, 256, %s2899, %s2884, 128, 128, 8
        $region140: #{tpu_custom_call.1} parent=91 // pred_fallthru
          _
      $region92: #{tpu_custom_call.1} parent=5 // pred_fallthru
        _
      %p2905 = scmp.le.s32.totalorder 2, %s37
      // Predicated region
      $region141: #{tpu_custom_call.1} parent=5 // pred_check
        %p2906 = pneg %p2905
      $region142: #{tpu_custom_call.1} parent=5 // pred_check_branch
        %2908 = sbr.rel (%p2906) target = $region144
      $region143: #{tpu_custom_call.1} parent=5 // pred_region
        %s2909 = ssub.s32 %s37, 2
        // Predicated region
        $region145: #{tpu_custom_call.1} parent=143 // pred_check
          %p2910 = pneg %p454
        $region146: #{tpu_custom_call.1} parent=143 // pred_check_branch
          %2912 = sbr.rel (%p2910) target = $region148
        $region147: #{tpu_custom_call.1} parent=143 // pred_region
          %s2913 = sand.u32 %s439, 1
          %s2914 = scalar_lea.sflag [#allocation4], %s2913
          %s2915 = sand.u32 %s439, 1
          %s2916 = smul.addr %s2915, 16
          %s2917 = scalar_lea.vmem [#allocation20], %s2916
          %2919 = dma.done %s2914, 256
        $region148: #{tpu_custom_call.1} parent=143 // pred_fallthru
          _
      $region144: #{tpu_custom_call.1} parent=5 // pred_fallthru
        _
    $region6: #{tpu_custom_call.1} parent=1 // loop_footer
      %s41 = sadd.s32 1, %s37
    $region7: #{tpu_custom_call.1} parent=1 // loop_footer_branch
      %36 = sbr.rel target = $region3
    $region8: #{tpu_custom_call.1} parent=1 // loop_exit
      _
    %2920 = vsyncpa [#allocation3], 1
    %s2921 = scalar_lea.sflag [#allocation3], 1
    %2922 = vsyncpa %s2921, 1
    %2923 = vsyncpa [#allocation6], 1
    %s2924 = scalar_lea.sflag [#allocation6], 1
    %2925 = vsyncpa %s2924, 1
    %2926 = vsyncpa [#allocation9], 1
    %2927 = vsyncpa [#allocation12], 1
    %2928 = vsyncpa [#allocation15], 1
    %2929 = vsyncpa [#allocation18], 1
    %2930 = vsyncpa [#allocation4], 1
    %s2931 = scalar_lea.sflag [#allocation4], 1
    %2932 = vsyncpa %s2931, 1

</llo_original>
